<compile_context>
chip_gen: v7x
topology: tpu7x:2x2x1
jax: 0.10.0
libtpu: 0.0.40
codegen_flags: <defaults>
</compile_context>

<pallas_src>
import functools

import numpy as np
import jax
import jax.numpy as jnp
from jax.experimental import pallas as pl
from jax.experimental.pallas import tpu as pltpu

LN_EPS = 1e-5                       # torch.nn.LayerNorm default eps
_INV_SQRT2 = 0.7071067811865475
_VMEM_LIMIT = 48 * 1024 * 1024      # explicit scoped-VMEM budget (safe on v5e/v6e/v7x)


# ---------------------------------------------------------------------------
# tiling helpers
# ---------------------------------------------------------------------------
def _cdiv(a, b):
    return -(-a // b)


def _row_tile(m, cap=512):
    """Row tile: multiple of 8, capped, and >=2 grid steps when m allows."""
    tm = max(8, min(cap, m))
    tm = max(8, (tm // 8) * 8)
    if m >= 16 and _cdiv(m, tm) < 2:
        tm = max(8, ((m // 2 + 7) // 8) * 8)
    return tm


def _pad_rows(x, tm):
    pad = (-x.shape[0]) % tm
    if pad:
        x = jnp.pad(x, ((0, pad), (0, 0)))
    return x


# ---------------------------------------------------------------------------
# Kernel 1: fused LayerNorm1 + qkv projection (gamma/beta pre-folded into W)
#   out = LN_nogain(x) @ W' + b'      (bf16 MXU operands, f32 accumulation)
# ---------------------------------------------------------------------------
def _ln_matmul_kernel(x_ref, w_ref, b_ref, o_ref):
    x = x_ref[...]
    mu = jnp.mean(x, axis=-1, keepdims=True)
    var = jnp.mean(jnp.square(x - mu), axis=-1, keepdims=True)
    z = (x - mu) * jax.lax.rsqrt(var + LN_EPS)
    y = jnp.dot(z.astype(jnp.bfloat16), w_ref[...],
                preferred_element_type=jnp.float32) + b_ref[...]
    o_ref[...] = y.astype(o_ref.dtype)


def ln_matmul(x_rows, w_bf16, bias_f32, out_dtype=jnp.bfloat16):
    m, c = x_rows.shape
    n = w_bf16.shape[1]
    tm = _row_tile(m)
    xp = _pad_rows(x_rows, tm)
    mp = xp.shape[0]
    out = pl.pallas_call(
        _ln_matmul_kernel,
        out_shape=jax.ShapeDtypeStruct((mp, n), out_dtype),
        grid=(mp // tm,),
        in_specs=[
            pl.BlockSpec((tm, c), lambda i: (i, 0)),
            pl.BlockSpec((c, n), lambda i: (0, 0)),
            pl.BlockSpec((1, n), lambda i: (0, 0)),
        ],
        out_specs=pl.BlockSpec((tm, n), lambda i: (i, 0)),
        compiler_params=pltpu.CompilerParams(
            dimension_semantics=("parallel",),
            vmem_limit_bytes=_VMEM_LIMIT),
    )(xp, w_bf16, bias_f32)
    return out[:m]


# ---------------------------------------------------------------------------
# Kernel 2: windowed multi-head self-attention (one batch element per grid step;
# all nW windows of that batch processed together).  `comb` = relative-position
# bias + shift attention mask, precomputed as (num_heads, nW, N, N).
# ---------------------------------------------------------------------------
def _window_attn_kernel(qkv_ref, comb_ref, o_ref, *, num_heads, head_dim, scale):
    c = num_heads * head_dim
    qkv = qkv_ref[0]                                   # (nW, N, 3C) bf16
    outs = []
    for h in range(num_heads):
        q = qkv[:, :, h * head_dim:(h + 1) * head_dim]
        k = qkv[:, :, c + h * head_dim: c + (h + 1) * head_dim]
        v = qkv[:, :, 2 * c + h * head_dim: 2 * c + (h + 1) * head_dim]
        logits = jnp.einsum('wnd,wmd->wnm', q, k,
                            preferred_element_type=jnp.float32)
        logits = logits * scale + comb_ref[h]          # bias + mask, f32
        mx = jnp.max(logits, axis=-1, keepdims=True)
        e = jnp.exp(logits - mx)
        p = e / jnp.sum(e, axis=-1, keepdims=True)
        outs.append(jnp.einsum('wnm,wmd->wnd', p.astype(jnp.bfloat16), v,
                               preferred_element_type=jnp.float32))
    # single lane-dense store of the full C channels
    o_ref[0] = jnp.concatenate(outs, axis=-1).astype(o_ref.dtype)


def window_attention(qkv_win, comb, num_heads, head_dim, scale):
    b, nw, n, c3 = qkv_win.shape
    c = c3 // 3
    kern = functools.partial(_window_attn_kernel, num_heads=num_heads,
                             head_dim=head_dim, scale=scale)
    return pl.pallas_call(
        kern,
        out_shape=jax.ShapeDtypeStruct((b, nw, n, c), jnp.bfloat16),
        grid=(b,),
        in_specs=[
            pl.BlockSpec((1, nw, n, c3), lambda i: (i, 0, 0, 0)),
            pl.BlockSpec((num_heads, nw, n, n), lambda i: (0, 0, 0, 0)),
        ],
        out_specs=pl.BlockSpec((1, nw, n, c), lambda i: (i, 0, 0, 0)),
        compiler_params=pltpu.CompilerParams(
            dimension_semantics=("parallel",),
            vmem_limit_bytes=_VMEM_LIMIT),
    )(qkv_win, comb)


# ---------------------------------------------------------------------------
# Kernel 3: fused  proj + residual + LayerNorm2 + MLP(GELU) + residual
# (LN2 gamma/beta pre-folded into fc1).
# ---------------------------------------------------------------------------
def _proj_mlp_kernel(a_ref, sc_ref, wp_ref, bp_ref, w1_ref, c1_ref,
                     w2_ref, c2_ref, o_ref):
    a = jnp.dot(a_ref[...], wp_ref[...],
                preferred_element_type=jnp.float32) + bp_ref[...]
    y = sc_ref[...] + a                                  # residual 1 (f32)
    mu = jnp.mean(y, axis=-1, keepdims=True)
    var = jnp.mean(jnp.square(y - mu), axis=-1, keepdims=True)
    z = (y - mu) * jax.lax.rsqrt(var + LN_EPS)
    h = jnp.dot(z.astype(jnp.bfloat16), w1_ref[...],
                preferred_element_type=jnp.float32) + c1_ref[...]
    h = 0.5 * h * (1.0 + jax.lax.erf(h * _INV_SQRT2))    # exact GELU (PyTorch default)
    h = jnp.dot(h.astype(jnp.bfloat16), w2_ref[...],
                preferred_element_type=jnp.float32) + c2_ref[...]
    o_ref[...] = (y + h).astype(o_ref.dtype)             # residual 2


def proj_mlp(attn_rows_bf16, shortcut_rows, p):
    m, c = shortcut_rows.shape
    hid = p["w1"].shape[1]
    tm = _row_tile(m)
    a = _pad_rows(attn_rows_bf16, tm)
    sc = _pad_rows(shortcut_rows, tm)
    mp = a.shape[0]
    full = lambda shape: pl.BlockSpec(shape, lambda i: (0, 0))
    out = pl.pallas_call(
        _proj_mlp_kernel,
        out_shape=jax.ShapeDtypeStruct((mp, c), jnp.float32),
        grid=(mp // tm,),
        in_specs=[
            pl.BlockSpec((tm, c), lambda i: (i, 0)),
            pl.BlockSpec((tm, c), lambda i: (i, 0)),
            full((c, c)), full((1, c)),
            full((c, hid)), full((1, hid)),
            full((hid, c)), full((1, c)),
        ],
        out_specs=pl.BlockSpec((tm, c), lambda i: (i, 0)),
        compiler_params=pltpu.CompilerParams(
            dimension_semantics=("parallel",),
            vmem_limit_bytes=_VMEM_LIMIT),
    )(a, sc, p["wp"], p["bp"], p["w1"], p["c1"], p["w2"], p["c2"])
    return out[:m]


# ---------------------------------------------------------------------------
# Block / layer glue (shift, window partition/reverse are pure permutations).
# ---------------------------------------------------------------------------
def swin_block_forward(rows, img_shape, p):
    B, H, W, C = img_shape
    ws, ss = p["window_size"], p["shift_size"]
    nh, hd = p["num_heads"], p["head_dim"]
    nW = (H // ws) * (W // ws)
    N = ws * ws

    # LN1 + qkv (fused Pallas kernel) -> (B*H*W, 3C) bf16
    qkv = ln_matmul(rows, p["wqkv"], p["bqkv"])

    # cyclic shift + window partition  (XLA layout glue; qkv is per-token so
    # applying it before the permutation is equivalent to the reference order)
    qkv = qkv.reshape(B, H, W, 3 * C)
    if ss > 0:
        qkv = jnp.roll(qkv, shift=(-ss, -ss), axis=(1, 2))
    qkv = (qkv.reshape(B, H // ws, ws, W // ws, ws, 3 * C)
              .transpose(0, 1, 3, 2, 4, 5)
              .reshape(B, nW, N, 3 * C))

    attn = window_attention(qkv, p["comb"], nh, hd, p["scale"])  # (B,nW,N,C)

    # window reverse + reverse shift
    attn = (attn.reshape(B, H // ws, W // ws, ws, ws, C)
                .transpose(0, 1, 3, 2, 4, 5)
                .reshape(B, H, W, C))
    if ss > 0:
        attn = jnp.roll(attn, shift=(ss, ss), axis=(1, 2))
    attn_rows = attn.reshape(B * H * W, C)

    # proj + residual + LN2 + MLP + residual (fused Pallas kernel)
    return proj_mlp(attn_rows, rows, p)


def basic_layer_forward(x_nchw, params):
    B, C, H, W = x_nchw.shape
    # SwinTransformerBlock does x.view(B, H, W, C) on the NCHW tensor: a raw
    # reshape reinterpretation, reproduced exactly here.
    rows = x_nchw.reshape(B * H * W, C)
    for bp in params["blocks"]:
        rows = swin_block_forward(rows, (B, H, W, C), bp)
    # trailing x.view(B, C, H, W) of the last block
    # TODO(synk): optional PatchMerging downsample (downsample=None here).
    return rows.reshape(B, C, H, W)


# ---------------------------------------------------------------------------
# Static attention-mask / relative-position-bias construction (matches torch).
# ---------------------------------------------------------------------------
def _calc_attn_mask(H, W, ws, ss):
    nW, N = (H // ws) * (W // ws), ws * ws
    if ss == 0:
        return np.zeros((nW, N, N), np.float32)
    img = np.zeros((1, H, W, 1), np.float32)
    cnt = 0
    sl = (slice(0, -ws), slice(-ws, -ss), slice(-ss, None))
    for hs in sl:
        for wsl in sl:
            img[:, hs, wsl, :] = cnt
            cnt += 1
    mw = (img.reshape(1, H // ws, ws, W // ws, ws, 1)
             .transpose(0, 1, 3, 2, 4, 5)
             .reshape(-1, N))
    am = mw[:, None, :] - mw[:, :, None]
    return np.where(am != 0, -100.0, 0.0).astype(np.float32)


def _relative_position_index(ws):
    coords = np.stack(np.meshgrid(np.arange(ws), np.arange(ws), indexing="ij"))
    cf = coords.reshape(2, -1)
    rel = (cf[:, :, None] - cf[:, None, :]).transpose(1, 2, 0).astype(np.int64)
    rel[:, :, 0] += ws - 1
    rel[:, :, 1] += ws - 1
    rel[:, :, 0] *= 2 * ws - 1
    return rel.sum(-1)                                   # (N, N)


# ---------------------------------------------------------------------------
# Deterministic synthetic parameters (torch layouts, then Pallas-prepped).
# ---------------------------------------------------------------------------
def _init_block(key, c, H, W, nh, ws, ss, mlp_ratio):
    N = ws * ws
    hd = c // nh
    hid = int(c * mlp_ratio)
    ks = iter(jax.random.split(key, 16))
    nrm = lambda shape, std=0.05: std * jax.random.normal(next(ks), shape, jnp.float32)
    uni = lambda shape, lo, hi: jax.random.uniform(next(ks), shape, jnp.float32,
                                                   minval=lo, maxval=hi)

    g1, b1 = uni((c,), 0.8, 1.2), nrm((c,))              # norm1
    wqkv, bqkv = nrm((3 * c, c)), nrm((3 * c,))          # nn.Linear(dim, 3*dim)
    table = 0.02 * jax.random.normal(next(ks), ((2 * ws - 1) ** 2, nh), jnp.float32)
    wp, bp = nrm((c, c)), nrm((c,))                      # attn.proj
    g2, b2 = uni((c,), 0.8, 1.2), nrm((c,))              # norm2
    w1, c1 = nrm((hid, c)), nrm((hid,))                  # mlp.fc1
    w2, c2 = nrm((c, hid)), nrm((c,))                    # mlp.fc2

    idx = _relative_position_index(ws)
    bias = table[idx.reshape(-1)].reshape(N, N, nh).transpose(2, 0, 1)   # (nh,N,N)
    mask = jnp.asarray(_calc_attn_mask(H, W, ws, ss))                    # (nW,N,N)
    comb = (bias[:, None, :, :] + mask[None, :, :, :]).astype(jnp.float32)

    return dict(
        window_size=ws, shift_size=ss, num_heads=nh, head_dim=hd,
        scale=float(hd) ** -0.5,
        comb=comb,
        # LN1 gamma/beta folded into qkv weight/bias; weights cast to bf16.
        wqkv=(g1[:, None] * wqkv.T).astype(jnp.bfloat16),
        bqkv=(b1 @ wqkv.T + bqkv).reshape(1, 3 * c),
        wp=wp.T.astype(jnp.bfloat16), bp=bp.reshape(1, c),
        # LN2 gamma/beta folded into fc1.
        w1=(g2[:, None] * w1.T).astype(jnp.bfloat16),
        c1=(b2 @ w1.T + c1).reshape(1, hid),
        w2=w2.T.astype(jnp.bfloat16), c2=c2.reshape(1, c),
    )


def init_basic_layer_params(key, dim, input_resolution, depth, num_heads,
                            window_size, mlp_ratio=4.0):
    H, W = input_resolution
    keys = jax.random.split(key, depth)
    blocks = []
    for i in range(depth):
        ws = window_size
        ss = 0 if i % 2 == 0 else window_size // 2
        if min(input_resolution) <= ws:      # SwinTransformerBlock.__init__ rule
            ss, ws = 0, min(input_resolution)
        blocks.append(_init_block(keys[i], dim, H, W, num_heads, ws, ss, mlp_ratio))
    return {"blocks": blocks}


if __name__ == "__main__":
    B, C, H, W = 2, 128, 8, 8            # lane-dense channel dim (C = 128)
    depth, num_heads, window_size = 2, 4, 4   # block 0: shift 0, block 1: shift 2
    key = jax.random.PRNGKey(0)
    kx, kp = jax.random.split(key)
    x = jax.random.normal(kx, (B, C, H, W), jnp.float32)
    params = init_basic_layer_params(kp, C, (H, W), depth, num_heads, window_size)

    fwd = jax.jit(lambda inp: basic_layer_forward(inp, params))
    out = jax.block_until_ready(fwd(x))
    assert out.shape == (B, C, H, W)
    assert bool(jnp.all(jnp.isfinite(out)))
    print("KERNEL_OK")
</pallas_src>

<mosaic_0001>
module attributes {stable_mosaic.version = 11 : i64} {
  func.func @_ln_matmul_kernel(%arg0: i32, %arg1: memref<64x128xf32, #tpu.memory_space<vmem>>, %arg2: memref<128x384xbf16, #tpu.memory_space<vmem>>, %arg3: memref<1x384xf32, #tpu.memory_space<vmem>>, %arg4: memref<64x384xbf16, #tpu.memory_space<vmem>>) attributes {dimension_semantics = [#tpu.dimension_semantics<parallel>], iteration_bounds = array<i64: 2>, scalar_prefetch = 0 : i64, scratch_operands = 0 : i64, tpu.core_type = #tpu.core_type<tc>, window_params = [{transform_indices = @transform_0, window_bounds = array<i64: 64, 128>}, {pipeline_mode = #tpu.pipeline_mode<synchronous>, transform_indices = @transform_1, window_bounds = array<i64: 128, 384>}, {pipeline_mode = #tpu.pipeline_mode<synchronous>, transform_indices = @transform_2, window_bounds = array<i64: 1, 384>}, {transform_indices = @transform_3, window_bounds = array<i64: 64, 384>}]} {
    %c0 = arith.constant 0 : index
    %c0_0 = arith.constant 0 : index
    %0 = vector.load %arg1[%c0, %c0_0] : memref<64x128xf32, #tpu.memory_space<vmem>>, vector<64x128xf32>
    %cst = arith.constant dense<0.000000e+00> : vector<64xf32>
    %1 = vector.multi_reduction <add>, %0, %cst [1] : vector<64x128xf32> to vector<64xf32>
    %2 = vector.shape_cast %1 : vector<64xf32> to vector<64x1xf32>
    %cst_1 = arith.constant 1.280000e+02 : f32
    %3 = vector.broadcast %cst_1 : f32 to vector<64x1xf32>
    %4 = arith.divf %2, %3 : vector<64x1xf32>
    %5 = vector.broadcast %4 : vector<64x1xf32> to vector<64x128xf32>
    %6 = arith.subf %0, %5 : vector<64x128xf32>
    %7 = arith.mulf %6, %6 : vector<64x128xf32>
    %cst_2 = arith.constant dense<0.000000e+00> : vector<64xf32>
    %8 = vector.multi_reduction <add>, %7, %cst_2 [1] : vector<64x128xf32> to vector<64xf32>
    %9 = vector.shape_cast %8 : vector<64xf32> to vector<64x1xf32>
    %cst_3 = arith.constant 1.280000e+02 : f32
    %10 = vector.broadcast %cst_3 : f32 to vector<64x1xf32>
    %11 = arith.divf %9, %10 : vector<64x1xf32>
    %12 = vector.broadcast %4 : vector<64x1xf32> to vector<64x128xf32>
    %13 = arith.subf %0, %12 : vector<64x128xf32>
    %cst_4 = arith.constant 9.99999974E-6 : f32
    %14 = vector.broadcast %cst_4 : f32 to vector<64x1xf32>
    %15 = arith.addf %11, %14 : vector<64x1xf32>
    %16 = math.rsqrt %15 : vector<64x1xf32>
    %17 = vector.broadcast %16 : vector<64x1xf32> to vector<64x128xf32>
    %18 = arith.mulf %13, %17 : vector<64x128xf32>
    %19 = arith.truncf %18 : vector<64x128xf32> to vector<64x128xbf16>
    %c0_5 = arith.constant 0 : index
    %c0_6 = arith.constant 0 : index
    %20 = vector.load %arg2[%c0_5, %c0_6] : memref<128x384xbf16, #tpu.memory_space<vmem>>, vector<128x384xbf16>
    %cst_7 = arith.constant dense<0.000000e+00> : vector<64x384xf32>
    %21 = tpu.matmul %19, %20, %cst_7 {dimension_numbers = #tpu.dot_dimension_numbers<[1], [0], [0], [1], [0, 0, 1, 1], [], []>} : vector<64x128xbf16>, vector<128x384xbf16>, vector<64x384xf32> -> vector<64x384xf32>
    %c0_8 = arith.constant 0 : index
    %c0_9 = arith.constant 0 : index
    %22 = vector.load %arg3[%c0_8, %c0_9] : memref<1x384xf32, #tpu.memory_space<vmem>>, vector<1x384xf32>
    %23 = vector.broadcast %22 : vector<1x384xf32> to vector<64x384xf32>
    %24 = arith.addf %21, %23 : vector<64x384xf32>
    %25 = arith.truncf %24 : vector<64x384xf32> to vector<64x384xbf16>
    %c0_10 = arith.constant 0 : index
    %c0_11 = arith.constant 0 : index
    %26 = vector.load %arg4[%c0_10, %c0_11] : memref<64x384xbf16, #tpu.memory_space<vmem>>, vector<64x384xbf16>
    tpu.vector_store %arg4[%c0_10, %c0_11], %25 {strides = array<i32>} : memref<64x384xbf16, #tpu.memory_space<vmem>>, vector<64x384xbf16>,
    return
  }
  func.func @transform_0(%arg0: i32) -> (i32, i32) {
    %c0_i32 = arith.constant 0 : i32
    %c0_i32_0 = arith.constant 0 : i32
    return %arg0, %c0_i32 : i32, i32
  }
  func.func @transform_1(%arg0: i32) -> (i32, i32) {
    %c0_i32 = arith.constant 0 : i32
    %c0_i32_0 = arith.constant 0 : i32
    %c0_i32_1 = arith.constant 0 : i32
    return %c0_i32, %c0_i32_0 : i32, i32
  }
  func.func @transform_2(%arg0: i32) -> (i32, i32) {
    %c0_i32 = arith.constant 0 : i32
    %c0_i32_0 = arith.constant 0 : i32
    %c0_i32_1 = arith.constant 0 : i32
    return %c0_i32, %c0_i32_0 : i32, i32
  }
  func.func @transform_3(%arg0: i32) -> (i32, i32) {
    %c0_i32 = arith.constant 0 : i32
    %c0_i32_0 = arith.constant 0 : i32
    return %arg0, %c0_i32 : i32, i32
  }
}

module attributes {stable_mosaic.version = 11 : i64} {
  func.func @_window_attn_kernel(%arg0: i32, %arg1: memref<1x4x16x384xbf16, #tpu.memory_space<vmem>>, %arg2: memref<4x4x16x16xf32, #tpu.memory_space<vmem>>, %arg3: memref<1x4x16x128xbf16, #tpu.memory_space<vmem>>) attributes {dimension_semantics = [#tpu.dimension_semantics<parallel>], iteration_bounds = array<i64: 2>, scalar_prefetch = 0 : i64, scratch_operands = 0 : i64, tpu.core_type = #tpu.core_type<tc>, window_params = [{transform_indices = @transform_0, window_bounds = array<i64: 1, 4, 16, 384>}, {pipeline_mode = #tpu.pipeline_mode<synchronous>, transform_indices = @transform_1, window_bounds = array<i64: 4, 4, 16, 16>}, {transform_indices = @transform_2, window_bounds = array<i64: 1, 4, 16, 128>}]} {
    %c0 = arith.constant 0 : index
    %c0_0 = arith.constant 0 : index
    %c0_1 = arith.constant 0 : index
    %c0_2 = arith.constant 0 : index
    %0 = vector.load %arg1[%c0, %c0_0, %c0_1, %c0_2] : memref<1x4x16x384xbf16, #tpu.memory_space<vmem>>, vector<1x4x16x384xbf16>
    %1 = vector.shape_cast %0 : vector<1x4x16x384xbf16> to vector<4x16x384xbf16>
    %2 = vector.extract_strided_slice %1 {offsets = [0, 0, 0], sizes = [4, 16, 32], strides = [1, 1, 1]} : vector<4x16x384xbf16> to vector<4x16x32xbf16>
    %3 = vector.extract_strided_slice %1 {offsets = [0, 0, 128], sizes = [4, 16, 32], strides = [1, 1, 1]} : vector<4x16x384xbf16> to vector<4x16x32xbf16>
    %4 = vector.extract_strided_slice %1 {offsets = [0, 0, 256], sizes = [4, 16, 32], strides = [1, 1, 1]} : vector<4x16x384xbf16> to vector<4x16x32xbf16>
    "tpu.trace_start"() <{level = 10 : i32, message = "wnd,wmd->wnm"}> : () -> ()
    %cst = arith.constant dense<0.000000e+00> : vector<4x16x16xf32>
    %5 = tpu.matmul %2, %3, %cst {dimension_numbers = #tpu.dot_dimension_numbers<[2], [2], [1], [1], [0, 0, 0, 1, 1, 1], [0], [0]>} : vector<4x16x32xbf16>, vector<4x16x32xbf16>, vector<4x16x16xf32> -> vector<4x16x16xf32>
    "tpu.trace_stop"() : () -> ()
    %cst_3 = arith.constant 0.176776692 : f32
    %6 = vector.broadcast %cst_3 : f32 to vector<4x16x16xf32>
    %7 = arith.mulf %5, %6 : vector<4x16x16xf32>
    %c0_4 = arith.constant 0 : index
    %c0_5 = arith.constant 0 : index
    %c0_6 = arith.constant 0 : index
    %c0_7 = arith.constant 0 : index
    %8 = vector.load %arg2[%c0_4, %c0_5, %c0_6, %c0_7] : memref<4x4x16x16xf32, #tpu.memory_space<vmem>>, vector<1x4x16x16xf32>
    %9 = vector.shape_cast %8 : vector<1x4x16x16xf32> to vector<4x16x16xf32>
    %10 = arith.addf %7, %9 : vector<4x16x16xf32>
    %cst_8 = arith.constant dense<0xFF800000> : vector<4x16xf32>
    %11 = vector.multi_reduction <maximumf>, %10, %cst_8 [2] : vector<4x16x16xf32> to vector<4x16xf32>
    %12 = vector.shape_cast %11 : vector<4x16xf32> to vector<4x16x1xf32>
    %13 = vector.broadcast %12 : vector<4x16x1xf32> to vector<4x16x16xf32>
    %14 = arith.subf %10, %13 : vector<4x16x16xf32>
    %15 = math.exp %14 : vector<4x16x16xf32>
    %cst_9 = arith.constant dense<0.000000e+00> : vector<4x16xf32>
    %16 = vector.multi_reduction <add>, %15, %cst_9 [2] : vector<4x16x16xf32> to vector<4x16xf32>
    %17 = vector.shape_cast %16 : vector<4x16xf32> to vector<4x16x1xf32>
    %18 = vector.broadcast %17 : vector<4x16x1xf32> to vector<4x16x16xf32>
    %19 = arith.divf %15, %18 : vector<4x16x16xf32>
    %20 = arith.truncf %19 : vector<4x16x16xf32> to vector<4x16x16xbf16>
    "tpu.trace_start"() <{level = 10 : i32, message = "wnm,wmd->wnd"}> : () -> ()
    %cst_10 = arith.constant dense<0.000000e+00> : vector<4x16x32xf32>
    %21 = tpu.matmul %20, %4, %cst_10 {dimension_numbers = #tpu.dot_dimension_numbers<[2], [1], [1], [2], [0, 0, 0, 1, 1, 2], [0], [0]>} : vector<4x16x16xbf16>, vector<4x16x32xbf16>, vector<4x16x32xf32> -> vector<4x16x32xf32>
    "tpu.trace_stop"() : () -> ()
    %22 = vector.extract_strided_slice %1 {offsets = [0, 0, 32], sizes = [4, 16, 32], strides = [1, 1, 1]} : vector<4x16x384xbf16> to vector<4x16x32xbf16>
    %23 = vector.extract_strided_slice %1 {offsets = [0, 0, 160], sizes = [4, 16, 32], strides = [1, 1, 1]} : vector<4x16x384xbf16> to vector<4x16x32xbf16>
    %24 = vector.extract_strided_slice %1 {offsets = [0, 0, 288], sizes = [4, 16, 32], strides = [1, 1, 1]} : vector<4x16x384xbf16> to vector<4x16x32xbf16>
    "tpu.trace_start"() <{level = 10 : i32, message = "wnd,wmd->wnm"}> : () -> ()
    %cst_11 = arith.constant dense<0.000000e+00> : vector<4x16x16xf32>
    %25 = tpu.matmul %22, %23, %cst_11 {dimension_numbers = #tpu.dot_dimension_numbers<[2], [2], [1], [1], [0, 0, 0, 1, 1, 1], [0], [0]>} : vector<4x16x32xbf16>, vector<4x16x32xbf16>, vector<4x16x16xf32> -> vector<4x16x16xf32>
    "tpu.trace_stop"() : () -> ()
    %cst_12 = arith.constant 0.176776692 : f32
    %26 = vector.broadcast %cst_12 : f32 to vector<4x16x16xf32>
    %27 = arith.mulf %25, %26 : vector<4x16x16xf32>
    %c1 = arith.constant 1 : index
    %c0_13 = arith.constant 0 : index
    %c0_14 = arith.constant 0 : index
    %c0_15 = arith.constant 0 : index
    %28 = vector.load %arg2[%c1, %c0_13, %c0_14, %c0_15] : memref<4x4x16x16xf32, #tpu.memory_space<vmem>>, vector<1x4x16x16xf32>
    %29 = vector.shape_cast %28 : vector<1x4x16x16xf32> to vector<4x16x16xf32>
    %30 = arith.addf %27, %29 : vector<4x16x16xf32>
    %cst_16 = arith.constant dense<0xFF800000> : vector<4x16xf32>
    %31 = vector.multi_reduction <maximumf>, %30, %cst_16 [2] : vector<4x16x16xf32> to vector<4x16xf32>
    %32 = vector.shape_cast %31 : vector<4x16xf32> to vector<4x16x1xf32>
    %33 = vector.broadcast %32 : vector<4x16x1xf32> to vector<4x16x16xf32>
    %34 = arith.subf %30, %33 : vector<4x16x16xf32>
    %35 = math.exp %34 : vector<4x16x16xf32>
    %cst_17 = arith.constant dense<0.000000e+00> : vector<4x16xf32>
    %36 = vector.multi_reduction <add>, %35, %cst_17 [2] : vector<4x16x16xf32> to vector<4x16xf32>
    %37 = vector.shape_cast %36 : vector<4x16xf32> to vector<4x16x1xf32>
    %38 = vector.broadcast %37 : vector<4x16x1xf32> to vector<4x16x16xf32>
    %39 = arith.divf %35, %38 : vector<4x16x16xf32>
    %40 = arith.truncf %39 : vector<4x16x16xf32> to vector<4x16x16xbf16>
    "tpu.trace_start"() <{level = 10 : i32, message = "wnm,wmd->wnd"}> : () -> ()
    %cst_18 = arith.constant dense<0.000000e+00> : vector<4x16x32xf32>
    %41 = tpu.matmul %40, %24, %cst_18 {dimension_numbers = #tpu.dot_dimension_numbers<[2], [1], [1], [2], [0, 0, 0, 1, 1, 2], [0], [0]>} : vector<4x16x16xbf16>, vector<4x16x32xbf16>, vector<4x16x32xf32> -> vector<4x16x32xf32>
    "tpu.trace_stop"() : () -> ()
    %42 = vector.extract_strided_slice %1 {offsets = [0, 0, 64], sizes = [4, 16, 32], strides = [1, 1, 1]} : vector<4x16x384xbf16> to vector<4x16x32xbf16>
    %43 = vector.extract_strided_slice %1 {offsets = [0, 0, 192], sizes = [4, 16, 32], strides = [1, 1, 1]} : vector<4x16x384xbf16> to vector<4x16x32xbf16>
    %44 = vector.extract_strided_slice %1 {offsets = [0, 0, 320], sizes = [4, 16, 32], strides = [1, 1, 1]} : vector<4x16x384xbf16> to vector<4x16x32xbf16>
    "tpu.trace_start"() <{level = 10 : i32, message = "wnd,wmd->wnm"}> : () -> ()
    %cst_19 = arith.constant dense<0.000000e+00> : vector<4x16x16xf32>
    %45 = tpu.matmul %42, %43, %cst_19 {dimension_numbers = #tpu.dot_dimension_numbers<[2], [2], [1], [1], [0, 0, 0, 1, 1, 1], [0], [0]>} : vector<4x16x32xbf16>, vector<4x16x32xbf16>, vector<4x16x16xf32> -> vector<4x16x16xf32>
    "tpu.trace_stop"() : () -> ()
    %cst_20 = arith.constant 0.176776692 : f32
    %46 = vector.broadcast %cst_20 : f32 to vector<4x16x16xf32>
    %47 = arith.mulf %45, %46 : vector<4x16x16xf32>
    %c2 = arith.constant 2 : index
    %c0_21 = arith.constant 0 : index
    %c0_22 = arith.constant 0 : index
    %c0_23 = arith.constant 0 : index
    %48 = vector.load %arg2[%c2, %c0_21, %c0_22, %c0_23] : memref<4x4x16x16xf32, #tpu.memory_space<vmem>>, vector<1x4x16x16xf32>
    %49 = vector.shape_cast %48 : vector<1x4x16x16xf32> to vector<4x16x16xf32>
    %50 = arith.addf %47, %49 : vector<4x16x16xf32>
    %cst_24 = arith.constant dense<0xFF800000> : vector<4x16xf32>
    %51 = vector.multi_reduction <maximumf>, %50, %cst_24 [2] : vector<4x16x16xf32> to vector<4x16xf32>
    %52 = vector.shape_cast %51 : vector<4x16xf32> to vector<4x16x1xf32>
    %53 = vector.broadcast %52 : vector<4x16x1xf32> to vector<4x16x16xf32>
    %54 = arith.subf %50, %53 : vector<4x16x16xf32>
    %55 = math.exp %54 : vector<4x16x16xf32>
    %cst_25 = arith.constant dense<0.000000e+00> : vector<4x16xf32>
    %56 = vector.multi_reduction <add>, %55, %cst_25 [2] : vector<4x16x16xf32> to vector<4x16xf32>
    %57 = vector.shape_cast %56 : vector<4x16xf32> to vector<4x16x1xf32>
    %58 = vector.broadcast %57 : vector<4x16x1xf32> to vector<4x16x16xf32>
    %59 = arith.divf %55, %58 : vector<4x16x16xf32>
    %60 = arith.truncf %59 : vector<4x16x16xf32> to vector<4x16x16xbf16>
    "tpu.trace_start"() <{level = 10 : i32, message = "wnm,wmd->wnd"}> : () -> ()
    %cst_26 = arith.constant dense<0.000000e+00> : vector<4x16x32xf32>
    %61 = tpu.matmul %60, %44, %cst_26 {dimension_numbers = #tpu.dot_dimension_numbers<[2], [1], [1], [2], [0, 0, 0, 1, 1, 2], [0], [0]>} : vector<4x16x16xbf16>, vector<4x16x32xbf16>, vector<4x16x32xf32> -> vector<4x16x32xf32>
    "tpu.trace_stop"() : () -> ()
    %62 = vector.extract_strided_slice %1 {offsets = [0, 0, 96], sizes = [4, 16, 32], strides = [1, 1, 1]} : vector<4x16x384xbf16> to vector<4x16x32xbf16>
    %63 = vector.extract_strided_slice %1 {offsets = [0, 0, 224], sizes = [4, 16, 32], strides = [1, 1, 1]} : vector<4x16x384xbf16> to vector<4x16x32xbf16>
    %64 = vector.extract_strided_slice %1 {offsets = [0, 0, 352], sizes = [4, 16, 32], strides = [1, 1, 1]} : vector<4x16x384xbf16> to vector<4x16x32xbf16>
    "tpu.trace_start"() <{level = 10 : i32, message = "wnd,wmd->wnm"}> : () -> ()
    %cst_27 = arith.constant dense<0.000000e+00> : vector<4x16x16xf32>
    %65 = tpu.matmul %62, %63, %cst_27 {dimension_numbers = #tpu.dot_dimension_numbers<[2], [2], [1], [1], [0, 0, 0, 1, 1, 1], [0], [0]>} : vector<4x16x32xbf16>, vector<4x16x32xbf16>, vector<4x16x16xf32> -> vector<4x16x16xf32>
    "tpu.trace_stop"() : () -> ()
    %cst_28 = arith.constant 0.176776692 : f32
    %66 = vector.broadcast %cst_28 : f32 to vector<4x16x16xf32>
    %67 = arith.mulf %65, %66 : vector<4x16x16xf32>
    %c3 = arith.constant 3 : index
    %c0_29 = arith.constant 0 : index
    %c0_30 = arith.constant 0 : index
    %c0_31 = arith.constant 0 : index
    %68 = vector.load %arg2[%c3, %c0_29, %c0_30, %c0_31] : memref<4x4x16x16xf32, #tpu.memory_space<vmem>>, vector<1x4x16x16xf32>
    %69 = vector.shape_cast %68 : vector<1x4x16x16xf32> to vector<4x16x16xf32>
    %70 = arith.addf %67, %69 : vector<4x16x16xf32>
    %cst_32 = arith.constant dense<0xFF800000> : vector<4x16xf32>
    %71 = vector.multi_reduction <maximumf>, %70, %cst_32 [2] : vector<4x16x16xf32> to vector<4x16xf32>
    %72 = vector.shape_cast %71 : vector<4x16xf32> to vector<4x16x1xf32>
    %73 = vector.broadcast %72 : vector<4x16x1xf32> to vector<4x16x16xf32>
    %74 = arith.subf %70, %73 : vector<4x16x16xf32>
    %75 = math.exp %74 : vector<4x16x16xf32>
    %cst_33 = arith.constant dense<0.000000e+00> : vector<4x16xf32>
    %76 = vector.multi_reduction <add>, %75, %cst_33 [2] : vector<4x16x16xf32> to vector<4x16xf32>
    %77 = vector.shape_cast %76 : vector<4x16xf32> to vector<4x16x1xf32>
    %78 = vector.broadcast %77 : vector<4x16x1xf32> to vector<4x16x16xf32>
    %79 = arith.divf %75, %78 : vector<4x16x16xf32>
    %80 = arith.truncf %79 : vector<4x16x16xf32> to vector<4x16x16xbf16>
    "tpu.trace_start"() <{level = 10 : i32, message = "wnm,wmd->wnd"}> : () -> ()
    %cst_34 = arith.constant dense<0.000000e+00> : vector<4x16x32xf32>
    %81 = tpu.matmul %80, %64, %cst_34 {dimension_numbers = #tpu.dot_dimension_numbers<[2], [1], [1], [2], [0, 0, 0, 1, 1, 2], [0], [0]>} : vector<4x16x16xbf16>, vector<4x16x32xbf16>, vector<4x16x32xf32> -> vector<4x16x32xf32>
    "tpu.trace_stop"() : () -> ()
    %82 = tpu.concatenate %21, %41, %61, %81 in 2 : vector<4x16x32xf32>, vector<4x16x32xf32>, vector<4x16x32xf32>, vector<4x16x32xf32> -> vector<4x16x128xf32>
    %83 = arith.truncf %82 : vector<4x16x128xf32> to vector<4x16x128xbf16>
    %c0_35 = arith.constant 0 : index
    %c0_36 = arith.constant 0 : index
    %c0_37 = arith.constant 0 : index
    %c0_38 = arith.constant 0 : index
    %84 = vector.load %arg3[%c0_35, %c0_36, %c0_37, %c0_38] : memref<1x4x16x128xbf16, #tpu.memory_space<vmem>>, vector<1x4x16x128xbf16>
    %85 = vector.shape_cast %84 : vector<1x4x16x128xbf16> to vector<4x16x128xbf16>
    %86 = vector.shape_cast %83 : vector<4x16x128xbf16> to vector<1x4x16x128xbf16>
    tpu.vector_store %arg3[%c0_35, %c0_36, %c0_37, %c0_38], %86 {strides = array<i32>} : memref<1x4x16x128xbf16, #tpu.memory_space<vmem>>, vector<1x4x16x128xbf16>,
    return
  }
  func.func @transform_0(%arg0: i32) -> (i32, i32, i32, i32) {
    %c0_i32 = arith.constant 0 : i32
    %c0_i32_0 = arith.constant 0 : i32
    %c0_i32_1 = arith.constant 0 : i32
    %c0_i32_2 = arith.constant 0 : i32
    return %arg0, %c0_i32, %c0_i32_0, %c0_i32_1 : i32, i32, i32, i32
  }
  func.func @transform_1(%arg0: i32) -> (i32, i32, i32, i32) {
    %c0_i32 = arith.constant 0 : i32
    %c0_i32_0 = arith.constant 0 : i32
    %c0_i32_1 = arith.constant 0 : i32
    %c0_i32_2 = arith.constant 0 : i32
    %c0_i32_3 = arith.constant 0 : i32
    return %c0_i32, %c0_i32_0, %c0_i32_1, %c0_i32_2 : i32, i32, i32, i32
  }
  func.func @transform_2(%arg0: i32) -> (i32, i32, i32, i32) {
    %c0_i32 = arith.constant 0 : i32
    %c0_i32_0 = arith.constant 0 : i32
    %c0_i32_1 = arith.constant 0 : i32
    %c0_i32_2 = arith.constant 0 : i32
    return %arg0, %c0_i32, %c0_i32_0, %c0_i32_1 : i32, i32, i32, i32
  }
}

module attributes {stable_mosaic.version = 11 : i64} {
  func.func @_proj_mlp_kernel(%arg0: i32, %arg1: memref<64x128xbf16, #tpu.memory_space<vmem>>, %arg2: memref<64x128xf32, #tpu.memory_space<vmem>>, %arg3: memref<128x128xbf16, #tpu.memory_space<vmem>>, %arg4: memref<1x128xf32, #tpu.memory_space<vmem>>, %arg5: memref<128x512xbf16, #tpu.memory_space<vmem>>, %arg6: memref<1x512xf32, #tpu.memory_space<vmem>>, %arg7: memref<512x128xbf16, #tpu.memory_space<vmem>>, %arg8: memref<1x128xf32, #tpu.memory_space<vmem>>, %arg9: memref<64x128xf32, #tpu.memory_space<vmem>>) attributes {dimension_semantics = [#tpu.dimension_semantics<parallel>], iteration_bounds = array<i64: 2>, scalar_prefetch = 0 : i64, scratch_operands = 0 : i64, tpu.core_type = #tpu.core_type<tc>, window_params = [{transform_indices = @transform_0, window_bounds = array<i64: 64, 128>}, {transform_indices = @transform_1, window_bounds = array<i64: 64, 128>}, {pipeline_mode = #tpu.pipeline_mode<synchronous>, transform_indices = @transform_2, window_bounds = array<i64: 128, 128>}, {pipeline_mode = #tpu.pipeline_mode<synchronous>, transform_indices = @transform_3, window_bounds = array<i64: 1, 128>}, {pipeline_mode = #tpu.pipeline_mode<synchronous>, transform_indices = @transform_4, window_bounds = array<i64: 128, 512>}, {pipeline_mode = #tpu.pipeline_mode<synchronous>, transform_indices = @transform_5, window_bounds = array<i64: 1, 512>}, {pipeline_mode = #tpu.pipeline_mode<synchronous>, transform_indices = @transform_6, window_bounds = array<i64: 512, 128>}, {pipeline_mode = #tpu.pipeline_mode<synchronous>, transform_indices = @transform_7, window_bounds = array<i64: 1, 128>}, {transform_indices = @transform_8, window_bounds = array<i64: 64, 128>}]} {
    %c0 = arith.constant 0 : index
    %c0_0 = arith.constant 0 : index
    %0 = vector.load %arg1[%c0, %c0_0] : memref<64x128xbf16, #tpu.memory_space<vmem>>, vector<64x128xbf16>
    %c0_1 = arith.constant 0 : index
    %c0_2 = arith.constant 0 : index
    %1 = vector.load %arg3[%c0_1, %c0_2] : memref<128x128xbf16, #tpu.memory_space<vmem>>, vector<128x128xbf16>
    %cst = arith.constant dense<0.000000e+00> : vector<64x128xf32>
    %2 = tpu.matmul %0, %1, %cst {dimension_numbers = #tpu.dot_dimension_numbers<[1], [0], [0], [1], [0, 0, 1, 1], [], []>} : vector<64x128xbf16>, vector<128x128xbf16>, vector<64x128xf32> -> vector<64x128xf32>
    %c0_3 = arith.constant 0 : index
    %c0_4 = arith.constant 0 : index
    %3 = vector.load %arg4[%c0_3, %c0_4] : memref<1x128xf32, #tpu.memory_space<vmem>>, vector<1x128xf32>
    %4 = vector.broadcast %3 : vector<1x128xf32> to vector<64x128xf32>
    %5 = arith.addf %2, %4 : vector<64x128xf32>
    %c0_5 = arith.constant 0 : index
    %c0_6 = arith.constant 0 : index
    %6 = vector.load %arg2[%c0_5, %c0_6] : memref<64x128xf32, #tpu.memory_space<vmem>>, vector<64x128xf32>
    %7 = arith.addf %6, %5 : vector<64x128xf32>
    %cst_7 = arith.constant dense<0.000000e+00> : vector<64xf32>
    %8 = vector.multi_reduction <add>, %7, %cst_7 [1] : vector<64x128xf32> to vector<64xf32>
    %9 = vector.shape_cast %8 : vector<64xf32> to vector<64x1xf32>
    %cst_8 = arith.constant 1.280000e+02 : f32
    %10 = vector.broadcast %cst_8 : f32 to vector<64x1xf32>
    %11 = arith.divf %9, %10 : vector<64x1xf32>
    %12 = vector.broadcast %11 : vector<64x1xf32> to vector<64x128xf32>
    %13 = arith.subf %7, %12 : vector<64x128xf32>
    %14 = arith.mulf %13, %13 : vector<64x128xf32>
    %cst_9 = arith.constant dense<0.000000e+00> : vector<64xf32>
    %15 = vector.multi_reduction <add>, %14, %cst_9 [1] : vector<64x128xf32> to vector<64xf32>
    %16 = vector.shape_cast %15 : vector<64xf32> to vector<64x1xf32>
    %cst_10 = arith.constant 1.280000e+02 : f32
    %17 = vector.broadcast %cst_10 : f32 to vector<64x1xf32>
    %18 = arith.divf %16, %17 : vector<64x1xf32>
    %19 = vector.broadcast %11 : vector<64x1xf32> to vector<64x128xf32>
    %20 = arith.subf %7, %19 : vector<64x128xf32>
    %cst_11 = arith.constant 9.99999974E-6 : f32
    %21 = vector.broadcast %cst_11 : f32 to vector<64x1xf32>
    %22 = arith.addf %18, %21 : vector<64x1xf32>
    %23 = math.rsqrt %22 : vector<64x1xf32>
    %24 = vector.broadcast %23 : vector<64x1xf32> to vector<64x128xf32>
    %25 = arith.mulf %20, %24 : vector<64x128xf32>
    %26 = arith.truncf %25 : vector<64x128xf32> to vector<64x128xbf16>
    %c0_12 = arith.constant 0 : index
    %c0_13 = arith.constant 0 : index
    %27 = vector.load %arg5[%c0_12, %c0_13] : memref<128x512xbf16, #tpu.memory_space<vmem>>, vector<128x512xbf16>
    %cst_14 = arith.constant dense<0.000000e+00> : vector<64x512xf32>
    %28 = tpu.matmul %26, %27, %cst_14 {dimension_numbers = #tpu.dot_dimension_numbers<[1], [0], [0], [1], [0, 0, 1, 1], [], []>} : vector<64x128xbf16>, vector<128x512xbf16>, vector<64x512xf32> -> vector<64x512xf32>
    %c0_15 = arith.constant 0 : index
    %c0_16 = arith.constant 0 : index
    %29 = vector.load %arg6[%c0_15, %c0_16] : memref<1x512xf32, #tpu.memory_space<vmem>>, vector<1x512xf32>
    %30 = vector.broadcast %29 : vector<1x512xf32> to vector<64x512xf32>
    %31 = arith.addf %28, %30 : vector<64x512xf32>
    %cst_17 = arith.constant 5.000000e-01 : f32
    %32 = vector.broadcast %cst_17 : f32 to vector<64x512xf32>
    %33 = arith.mulf %32, %31 : vector<64x512xf32>
    %cst_18 = arith.constant 0.707106769 : f32
    %34 = vector.broadcast %cst_18 : f32 to vector<64x512xf32>
    %35 = arith.mulf %31, %34 : vector<64x512xf32>
    %36 = math.erf %35 : vector<64x512xf32>
    %cst_19 = arith.constant 1.000000e+00 : f32
    %37 = vector.broadcast %cst_19 : f32 to vector<64x512xf32>
    %38 = arith.addf %37, %36 : vector<64x512xf32>
    %39 = arith.mulf %33, %38 : vector<64x512xf32>
    %40 = arith.truncf %39 : vector<64x512xf32> to vector<64x512xbf16>
    %c0_20 = arith.constant 0 : index
    %c0_21 = arith.constant 0 : index
    %41 = vector.load %arg7[%c0_20, %c0_21] : memref<512x128xbf16, #tpu.memory_space<vmem>>, vector<512x128xbf16>
    %cst_22 = arith.constant dense<0.000000e+00> : vector<64x128xf32>
    %42 = tpu.matmul %40, %41, %cst_22 {dimension_numbers = #tpu.dot_dimension_numbers<[1], [0], [0], [1], [0, 0, 1, 1], [], []>} : vector<64x512xbf16>, vector<512x128xbf16>, vector<64x128xf32> -> vector<64x128xf32>
    %c0_23 = arith.constant 0 : index
    %c0_24 = arith.constant 0 : index
    %43 = vector.load %arg8[%c0_23, %c0_24] : memref<1x128xf32, #tpu.memory_space<vmem>>, vector<1x128xf32>
    %44 = vector.broadcast %43 : vector<1x128xf32> to vector<64x128xf32>
    %45 = arith.addf %42, %44 : vector<64x128xf32>
    %46 = arith.addf %7, %45 : vector<64x128xf32>
    %c0_25 = arith.constant 0 : index
    %c0_26 = arith.constant 0 : index
    %47 = vector.load %arg9[%c0_25, %c0_26] : memref<64x128xf32, #tpu.memory_space<vmem>>, vector<64x128xf32>
    tpu.vector_store %arg9[%c0_25, %c0_26], %46 {strides = array<i32>} : memref<64x128xf32, #tpu.memory_space<vmem>>, vector<64x128xf32>,
    return
  }
  func.func @transform_0(%arg0: i32) -> (i32, i32) {
    %c0_i32 = arith.constant 0 : i32
    %c0_i32_0 = arith.constant 0 : i32
    return %arg0, %c0_i32 : i32, i32
  }
  func.func @transform_1(%arg0: i32) -> (i32, i32) {
    %c0_i32 = arith.constant 0 : i32
    %c0_i32_0 = arith.constant 0 : i32
    return %arg0, %c0_i32 : i32, i32
  }
  func.func @transform_2(%arg0: i32) -> (i32, i32) {
    %c0_i32 = arith.constant 0 : i32
    %c0_i32_0 = arith.constant 0 : i32
    %c0_i32_1 = arith.constant 0 : i32
    return %c0_i32, %c0_i32_0 : i32, i32
  }
  func.func @transform_3(%arg0: i32) -> (i32, i32) {
    %c0_i32 = arith.constant 0 : i32
    %c0_i32_0 = arith.constant 0 : i32
    %c0_i32_1 = arith.constant 0 : i32
    return %c0_i32, %c0_i32_0 : i32, i32
  }
  func.func @transform_4(%arg0: i32) -> (i32, i32) {
    %c0_i32 = arith.constant 0 : i32
    %c0_i32_0 = arith.constant 0 : i32
    %c0_i32_1 = arith.constant 0 : i32
    return %c0_i32, %c0_i32_0 : i32, i32
  }
  func.func @transform_5(%arg0: i32) -> (i32, i32) {
    %c0_i32 = arith.constant 0 : i32
    %c0_i32_0 = arith.constant 0 : i32
    %c0_i32_1 = arith.constant 0 : i32
    return %c0_i32, %c0_i32_0 : i32, i32
  }
  func.func @transform_6(%arg0: i32) -> (i32, i32) {
    %c0_i32 = arith.constant 0 : i32
    %c0_i32_0 = arith.constant 0 : i32
    %c0_i32_1 = arith.constant 0 : i32
    return %c0_i32, %c0_i32_0 : i32, i32
  }
  func.func @transform_7(%arg0: i32) -> (i32, i32) {
    %c0_i32 = arith.constant 0 : i32
    %c0_i32_0 = arith.constant 0 : i32
    %c0_i32_1 = arith.constant 0 : i32
    return %c0_i32, %c0_i32_0 : i32, i32
  }
  func.func @transform_8(%arg0: i32) -> (i32, i32) {
    %c0_i32 = arith.constant 0 : i32
    %c0_i32_0 = arith.constant 0 : i32
    return %arg0, %c0_i32 : i32, i32
  }
}

</mosaic_0001>

<llo_original>
// kernel: _lambda_.6
$region0: #{_lambda_.6}
  #allocation0 [shape = 'u32[]', space=smem, size = 0x4, offset = 0x4, fixed_abs, tag = 'smem constant byte address 0x4 - core index']
  #allocation1 [shape = 'u32[144,128]{1,0:T(1,128)}', space=vmem, size = 0x12000, scoped, tag = 'internal scratch']
  %s0 = inlined_call_operand.vmem [shape: f32[128,128], index: 0, kind: input, shape index: {}]
  %s1 = inlined_call_operand.vmem [shape: bf16[128,384], index: 1, kind: input, shape index: {}]
  %s2 = inlined_call_operand.vmem [shape: f32[1,384], index: 2, kind: input, shape index: {}]
  %s3 = inlined_call_operand.vmem [shape: bf16[128,384], index: 3, kind: output, shape index: {}]
  %s4 = sld [smem:[#allocation0]]
  $region45: #{_lambda_.6} parent=0
    _
  %s6 = ssub.s32 1, %s4
  %s7 = scalar_select 0, %s6, %s4
  loop: start=0, step=1, limit=4
  $region2: #{_lambda_.6} parent=0 // loop_pre_header
    _
  $region3: #{_lambda_.6} parent=0 // loop_header
    %s9 = sphi 0, %s13
    %p10 = scmp.ge.s32.totalorder %s9, 4
    %s19 = sphi 0, %s21
    %s22 = sphi 0, %s19
    %s23 = sphi 0, %s22
    %s39 = sphi 0, %s23
    %s43 = sphi 0, %s43
    %s45 = sphi 0, %s43
    %s46 = sphi 0, %s45
    %s60 = sphi 0, %s46
    %s64 = sphi 0, %s64
    %s66 = sphi 0, %s64
    %s67 = sphi 0, %s66
    %s81 = sphi 0, %s67
    %s87 = sphi 0, %s89
    %s90 = sphi 0, %s87
    %s91 = sphi 0, %s90
    %s107 = sphi 0, %s91
  $region4: #{_lambda_.6} parent=0 // loop_header_branch
    %12 = sbr.rel (%p10) target = $region8
  $region5: #{_lambda_.6} parent=0 // loop_body
    %s14 = ssub.s32 %s9, 1
    %s15 = ssub.s32 %s9, 2
    %s16 = sadd.s32 %s9, 1
    %s17 = ssub.s32 %s9, %s16
    %p18 = scmp.eq.s32.totalorder %s17, 0
    %s20 = sadd.s32 %s19, 1
    %s21 = scalar_select %p18, %s19, %s20
    %p24 = pneg %p18
    %p25 = scmp.eq.s32.totalorder %s9, 1
    %p26 = por %p24, %p25
    %p27 = scmp.ne.s32.totalorder %s19, %s22
    %p28 = scmp.eq.s32.totalorder %s9, 0
    %p29 = por %p27, %p28
    %p30 = scmp.ne.s32.totalorder %s19, %s22
    %p31 = scmp.eq.s32.totalorder %s14, 1
    %p32 = por %p30, %p31
    %p33 = scmp.ne.s32.totalorder %s22, %s23
    %p34 = scmp.eq.s32.totalorder %s14, 0
    %p35 = por %p33, %p34
    %p36 = scmp.ne.s32.totalorder %s22, %s23
    %p37 = scmp.eq.s32.totalorder %s15, 1
    %p38 = por %p36, %p37
    %p40 = scmp.ne.s32.totalorder %s23, %s39
    %p41 = scmp.eq.s32.totalorder %s15, 0
    %p42 = por %p40, %p41
    %s44 = sadd.s32 %s43, 1
    %p47 = scmp.eq.s32.totalorder %s9, 1
    %p48 = scmp.ne.s32.totalorder %s43, %s45
    %p49 = scmp.eq.s32.totalorder %s9, 0
    %p50 = por %p48, %p49
    %p51 = scmp.ne.s32.totalorder %s43, %s45
    %p52 = scmp.eq.s32.totalorder %s14, 1
    %p53 = por %p51, %p52
    %p54 = scmp.ne.s32.totalorder %s45, %s46
    %p55 = scmp.eq.s32.totalorder %s14, 0
    %p56 = por %p54, %p55
    %p57 = scmp.ne.s32.totalorder %s45, %s46
    %p58 = scmp.eq.s32.totalorder %s15, 1
    %p59 = por %p57, %p58
    %p61 = scmp.ne.s32.totalorder %s46, %s60
    %p62 = scmp.eq.s32.totalorder %s15, 0
    %p63 = por %p61, %p62
    %s65 = sadd.s32 %s64, 1
    %p68 = scmp.eq.s32.totalorder %s9, 1
    %p69 = scmp.ne.s32.totalorder %s64, %s66
    %p70 = scmp.eq.s32.totalorder %s9, 0
    %p71 = por %p69, %p70
    %p72 = scmp.ne.s32.totalorder %s64, %s66
    %p73 = scmp.eq.s32.totalorder %s14, 1
    %p74 = por %p72, %p73
    %p75 = scmp.ne.s32.totalorder %s66, %s67
    %p76 = scmp.eq.s32.totalorder %s14, 0
    %p77 = por %p75, %p76
    %p78 = scmp.ne.s32.totalorder %s66, %s67
    %p79 = scmp.eq.s32.totalorder %s15, 1
    %p80 = por %p78, %p79
    %p82 = scmp.ne.s32.totalorder %s67, %s81
    %p83 = scmp.eq.s32.totalorder %s15, 0
    %p84 = por %p82, %p83
    %s85 = ssub.s32 %s9, %s16
    %p86 = scmp.eq.s32.totalorder %s85, 0
    %s88 = sadd.s32 %s87, 1
    %s89 = scalar_select %p86, %s87, %s88
    %p92 = pneg %p86
    %p93 = scmp.eq.s32.totalorder %s9, 1
    %p94 = por %p92, %p93
    %p95 = scmp.ne.s32.totalorder %s87, %s90
    %p96 = scmp.eq.s32.totalorder %s9, 0
    %p97 = por %p95, %p96
    %p98 = scmp.ne.s32.totalorder %s87, %s90
    %p99 = scmp.eq.s32.totalorder %s14, 1
    %p100 = por %p98, %p99
    %p101 = scmp.ne.s32.totalorder %s90, %s91
    %p102 = scmp.eq.s32.totalorder %s14, 0
    %p103 = por %p101, %p102
    %p104 = scmp.ne.s32.totalorder %s90, %s91
    %p105 = scmp.eq.s32.totalorder %s15, 1
    %p106 = por %p104, %p105
    %p108 = scmp.ne.s32.totalorder %s91, %s107
    %p109 = scmp.eq.s32.totalorder %s15, 0
    %p110 = por %p108, %p109
    %p111 = scmp.le.s32.totalorder 1, %s9
    %p112 = scmp.lt.s32.totalorder %s9, 3
    %p113 = pnand %p111, %p112
    %p114 = pneg %p113
    // Predicated region
    $region9: #{_lambda_.6} parent=5 // pred_check
      _
    $region10: #{_lambda_.6} parent=5 // pred_check_branch
      %116 = sbr.rel (%p113) target = $region12
    $region11: #{_lambda_.6} parent=5 // pred_region
      %s117 = ssub.s32 %s9, 1
      // Predicated region
      $region13: #{_lambda_.6} parent=11 // pred_check
        %p118 = pneg %p56
      $region14: #{_lambda_.6} parent=11 // pred_check_branch
        %120 = sbr.rel (%p118) target = $region16
      $region15: #{_lambda_.6} parent=11 // pred_region
        _
      $region16: #{_lambda_.6} parent=11 // pred_fallthru
        _
      // Predicated region
      $region17: #{_lambda_.6} parent=11 // pred_check
        %p121 = pneg %p77
      $region18: #{_lambda_.6} parent=11 // pred_check_branch
        %123 = sbr.rel (%p121) target = $region20
      $region19: #{_lambda_.6} parent=11 // pred_region
        _
      $region20: #{_lambda_.6} parent=11 // pred_fallthru
        _
    $region12: #{_lambda_.6} parent=5 // pred_fallthru
      _
    %p124 = scmp.lt.s32.totalorder %s9, 2
    // Predicated region
    $region21: #{_lambda_.6} parent=5 // pred_check
      %p125 = pneg %p124
    $region22: #{_lambda_.6} parent=5 // pred_check_branch
      %127 = sbr.rel (%p125) target = $region24
    $region23: #{_lambda_.6} parent=5 // pred_region
      // Predicated region
      $region25: #{_lambda_.6} parent=23 // pred_check
        %p128 = pneg %p29
      $region26: #{_lambda_.6} parent=23 // pred_check_branch
        %130 = sbr.rel (%p128) target = $region28
      $region27: #{_lambda_.6} parent=23 // pred_region
        %s131 = smul.u32 8, %s9
        %p132 = scmp.lt.s32.totalorder %s131, 15
        %s133 = scalar_select %p132, %s131, 15
        %s134 = smul.addr %s133, 8
        %s135 = scalar_lea.vmem %s0, %s134
        %s136 = smul.u32 8, %s9
      $region28: #{_lambda_.6} parent=23 // pred_fallthru
        _
    $region24: #{_lambda_.6} parent=5 // pred_fallthru
      _
    %p137 = scmp.le.s32.totalorder 1, %s9
    %p138 = scmp.lt.s32.totalorder %s9, 3
    %p139 = pnand %p137, %p138
    %p140 = pneg %p139
    // Predicated region
    $region29: #{_lambda_.6} parent=5 // pred_check
      _
    $region30: #{_lambda_.6} parent=5 // pred_check_branch
      %142 = sbr.rel (%p139) target = $region32
    $region31: #{_lambda_.6} parent=5 // pred_region
      %s143 = ssub.s32 %s9, 1
      %s144 = smul.u32 8, %s14
      %p145 = scmp.lt.s32.totalorder %s144, 15
      %s146 = scalar_select %p145, %s144, 15
      %s147 = smul.addr %s146, 8
      %s148 = scalar_lea.vmem %s0, %s147
      %p149 = pneg %p35
      %p150 = pneg %p32
      %p151 = pneg %p56
      %p152 = pneg %p53
      %p153 = pneg %p77
      %p154 = pneg %p74
      %p155 = pneg %p103
      %p156 = pneg %p100
      %s157 = smul.u32 8, %s14
      %p158 = scmp.lt.s32.totalorder %s157, 15
      %s159 = scalar_select %p158, %s157, 15
      %s160 = smul.addr %s159, 3
      %s161 = smul.addr %s160, 4
      %s162 = scalar_lea.vmem %s3, %s161
      %s163 = smul.u32 8, %s14
      %p164 = scmp.lt.s32.totalorder %s163, 15
      %s165 = scalar_select %p164, %s163, 15
      %s166 = smul.addr %s165, 8
      %s167 = scalar_lea.vmem %s0, %s166
      %s168 = smul.u32 8, %s14
      %s169 = smul.u32 8, %s14
      %p170 = scmp.lt.s32.totalorder %s169, 15
      %s171 = scalar_select %p170, %s169, 15
      %s172 = smul.addr %s171, 3
      %s173 = smul.addr %s172, 4
      %s174 = scalar_lea.vmem %s3, %s173
      %s175 = smul.u32 8, %s14
      %v177 = vld [vmem:[%s167] sm:$0xff]
      %v178 = vld [vmem:[%s167 + $0x8] sm:$0xff]
      %v179 = vld [vmem:[%s167 + $0x10] sm:$0xff]
      %v180 = vld [vmem:[%s167 + $0x18] sm:$0xff]
      %v181 = vld [vmem:[%s167 + $0x20] sm:$0xff]
      %v182 = vld [vmem:[%s167 + $0x28] sm:$0xff]
      %v183 = vld [vmem:[%s167 + $0x30] sm:$0xff]
      %v184 = vld [vmem:[%s167 + $0x38] sm:$0xff]
      %185 = vadd.xlane.f32.xlu0 %v177
      %v186 = vpop.xlane.xlu0 %185
      %187 = vadd.xlane.f32.xlu0 %v178
      %v188 = vpop.xlane.xlu0 %187
      %189 = vadd.xlane.f32.xlu0 %v179
      %v190 = vpop.xlane.xlu0 %189
      %191 = vadd.xlane.f32.xlu0 %v180
      %v192 = vpop.xlane.xlu0 %191
      %193 = vadd.xlane.f32.xlu0 %v181
      %v194 = vpop.xlane.xlu0 %193
      %195 = vadd.xlane.f32.xlu0 %v182
      %v196 = vpop.xlane.xlu0 %195
      %197 = vadd.xlane.f32.xlu0 %v183
      %v198 = vpop.xlane.xlu0 %197
      %199 = vadd.xlane.f32.xlu0 %v184
      %v200 = vpop.xlane.xlu0 %199
      %v201 = vrcp.pop 128.0
      %v202 = vmul.f32 %v186, %v201
      %v203 = vmul.f32 %v188, %v201
      %v204 = vmul.f32 %v190, %v201
      %v205 = vmul.f32 %v192, %v201
      %v206 = vmul.f32 %v194, %v201
      %v207 = vmul.f32 %v196, %v201
      %v208 = vmul.f32 %v198, %v201
      %v209 = vmul.f32 %v200, %v201
      %v210 = vsub.f32 %v177, %v202
      %v211 = vsub.f32 %v178, %v203
      %v212 = vsub.f32 %v179, %v204
      %v213 = vsub.f32 %v180, %v205
      %v214 = vsub.f32 %v181, %v206
      %v215 = vsub.f32 %v182, %v207
      %v216 = vsub.f32 %v183, %v208
      %v217 = vsub.f32 %v184, %v209
      %v218 = vmul.f32 %v210, %v210
      %v219 = vmul.f32 %v211, %v211
      %v220 = vmul.f32 %v212, %v212
      %v221 = vmul.f32 %v213, %v213
      %v222 = vmul.f32 %v214, %v214
      %v223 = vmul.f32 %v215, %v215
      %v224 = vmul.f32 %v216, %v216
      %v225 = vmul.f32 %v217, %v217
      %226 = vadd.xlane.f32.xlu0 %v218
      %v227 = vpop.xlane.xlu0 %226
      %228 = vadd.xlane.f32.xlu0 %v219
      %v229 = vpop.xlane.xlu0 %228
      %230 = vadd.xlane.f32.xlu0 %v220
      %v231 = vpop.xlane.xlu0 %230
      %232 = vadd.xlane.f32.xlu0 %v221
      %v233 = vpop.xlane.xlu0 %232
      %234 = vadd.xlane.f32.xlu0 %v222
      %v235 = vpop.xlane.xlu0 %234
      %236 = vadd.xlane.f32.xlu0 %v223
      %v237 = vpop.xlane.xlu0 %236
      %238 = vadd.xlane.f32.xlu0 %v224
      %v239 = vpop.xlane.xlu0 %238
      %240 = vadd.xlane.f32.xlu0 %v225
      %v241 = vpop.xlane.xlu0 %240
      %v242 = vmul.f32 %v227, %v201
      %v243 = vmul.f32 %v229, %v201
      %v244 = vmul.f32 %v231, %v201
      %v245 = vmul.f32 %v233, %v201
      %v246 = vmul.f32 %v235, %v201
      %v247 = vmul.f32 %v237, %v201
      %v248 = vmul.f32 %v239, %v201
      %v249 = vmul.f32 %v241, %v201
      %v250 = vadd.f32 %v242, 1e-05
      %v251 = vadd.f32 %v243, 1e-05
      %v252 = vadd.f32 %v244, 1e-05
      %v253 = vadd.f32 %v245, 1e-05
      %v254 = vadd.f32 %v246, 1e-05
      %v255 = vadd.f32 %v247, 1e-05
      %v256 = vadd.f32 %v248, 1e-05
      %v257 = vadd.f32 %v249, 1e-05
      %v258 = vrsqrt.pop %v250
      %v259 = vrsqrt.pop %v251
      %v260 = vrsqrt.pop %v252
      %v261 = vrsqrt.pop %v253
      %v262 = vrsqrt.pop %v254
      %v263 = vrsqrt.pop %v255
      %v264 = vrsqrt.pop %v256
      %v265 = vrsqrt.pop %v257
      %v266 = vmul.f32 %v210, %v258
      %v267 = vmul.f32 %v211, %v259
      %v268 = vmul.f32 %v212, %v260
      %v269 = vmul.f32 %v213, %v261
      %v270 = vmul.f32 %v214, %v262
      %v271 = vmul.f32 %v215, %v263
      %v272 = vmul.f32 %v216, %v264
      %v273 = vmul.f32 %v217, %v265
      %v274 = vpack.c.bf16 %v267, %v266
      %v275 = vpack.c.bf16 %v269, %v268
      %v276 = vpack.c.bf16 %v271, %v270
      %v277 = vpack.c.bf16 %v273, %v272
      %v278 = vld [vmem:[%s1] sm:$0xff]
      %v279 = vld [vmem:[%s1 + $0x8] sm:$0xf]
      %v280 = vld [vmem:[%s1 + $0xc] sm:$0xff]
      %v281 = vld [vmem:[%s1 + $0x14] sm:$0xf]
      %v282 = vld [vmem:[%s1 + $0x18] sm:$0xff]
      %v283 = vld [vmem:[%s1 + $0x20] sm:$0xf]
      %v284 = vld [vmem:[%s1 + $0x24] sm:$0xff]
      %v285 = vld [vmem:[%s1 + $0x2c] sm:$0xf]
      %v286 = vld [vmem:[%s1 + $0x30] sm:$0xff]
      %v287 = vld [vmem:[%s1 + $0x38] sm:$0xf]
      %v288 = vld [vmem:[%s1 + $0x3c] sm:$0xff]
      %v289 = vld [vmem:[%s1 + $0x44] sm:$0xf]
      %v290 = vld [vmem:[%s1 + $0x48] sm:$0xff]
      %v291 = vld [vmem:[%s1 + $0x50] sm:$0xf]
      %v292 = vld [vmem:[%s1 + $0x54] sm:$0xff]
      %v293 = vld [vmem:[%s1 + $0x5c] sm:$0xf]
      %v294 = vld [vmem:[%s1 + $0x60] sm:$0xff]
      %v295 = vld [vmem:[%s1 + $0x68] sm:$0xf]
      %v296 = vld [vmem:[%s1 + $0x6c] sm:$0xff]
      %v297 = vld [vmem:[%s1 + $0x74] sm:$0xf]
      %v298 = vld [vmem:[%s1 + $0x78] sm:$0xff]
      %v299 = vld [vmem:[%s1 + $0x80] sm:$0xf]
      %v300 = vld [vmem:[%s1 + $0x84] sm:$0xff]
      %v301 = vld [vmem:[%s1 + $0x8c] sm:$0xf]
      %v302 = vld [vmem:[%s1 + $0x90] sm:$0xff]
      %v303 = vld [vmem:[%s1 + $0x98] sm:$0xf]
      %v304 = vld [vmem:[%s1 + $0x9c] sm:$0xff]
      %v305 = vld [vmem:[%s1 + $0xa4] sm:$0xf]
      %v306 = vld [vmem:[%s1 + $0xa8] sm:$0xff]
      %v307 = vld [vmem:[%s1 + $0xb0] sm:$0xf]
      %v308 = vld [vmem:[%s1 + $0xb4] sm:$0xff]
      %v309 = vld [vmem:[%s1 + $0xbc] sm:$0xf]
      %v310 = vld [vmem:[%s2] sm:$0x7]
      %v312 = vlaneseq
      %v313 = vshrl.u32 %v312, 7
      %v314 = vsub.s32 0, %v313
      %v315 = vrot.slane %v310, %v314
      %v316 = vlaneseq
      %v317 = vshrl.u32 %v316, 7
      %v318 = vsub.s32 1, %v317
      %v319 = vrot.slane %v310, %v318
      %v320 = vlaneseq
      %v321 = vshrl.u32 %v320, 7
      %v322 = vsub.s32 2, %v321
      %v323 = vrot.slane %v310, %v322
      %v359 = vunpack.c.l.b16 %v278
      %v360 = vunpack.c.h.b16 %v278
      %v361 = vunpack.c.l.b16 %v279
      %v362 = vunpack.c.l.b16 %v280
      %v363 = vunpack.c.h.b16 %v280
      %v364 = vunpack.c.l.b16 %v281
      %v365 = vunpack.c.l.b16 %v282
      %v366 = vunpack.c.h.b16 %v282
      %v367 = vunpack.c.l.b16 %v283
      %v368 = vunpack.c.l.b16 %v284
      %v369 = vunpack.c.h.b16 %v284
      %v370 = vunpack.c.l.b16 %v285
      %v371 = vunpack.c.l.b16 %v286
      %v372 = vunpack.c.h.b16 %v286
      %v373 = vunpack.c.l.b16 %v287
      %v374 = vunpack.c.l.b16 %v288
      %v375 = vunpack.c.h.b16 %v288
      %v376 = vunpack.c.l.b16 %v289
      %v377 = vunpack.c.l.b16 %v290
      %v378 = vunpack.c.h.b16 %v290
      %v379 = vunpack.c.l.b16 %v291
      %v380 = vunpack.c.l.b16 %v292
      %v381 = vunpack.c.h.b16 %v292
      %v382 = vunpack.c.l.b16 %v293
      %v383 = vunpack.c.l.b16 %v294
      %v384 = vunpack.c.h.b16 %v294
      %v385 = vunpack.c.l.b16 %v295
      %v386 = vunpack.c.l.b16 %v296
      %v387 = vunpack.c.h.b16 %v296
      %v388 = vunpack.c.l.b16 %v297
      %v389 = vunpack.c.l.b16 %v298
      %v390 = vunpack.c.h.b16 %v298
      %v391 = vunpack.c.l.b16 %v299
      %v392 = vunpack.c.l.b16 %v300
      %v393 = vunpack.c.h.b16 %v300
      %v394 = vunpack.c.l.b16 %v301
      %v395 = vunpack.c.l.b16 %v302
      %v396 = vunpack.c.h.b16 %v302
      %v397 = vunpack.c.l.b16 %v303
      %v398 = vunpack.c.l.b16 %v304
      %v399 = vunpack.c.h.b16 %v304
      %v400 = vunpack.c.l.b16 %v305
      %v401 = vunpack.c.l.b16 %v306
      %v402 = vunpack.c.h.b16 %v306
      %v403 = vunpack.c.l.b16 %v307
      %v404 = vunpack.c.l.b16 %v308
      %v405 = vunpack.c.h.b16 %v308
      %v406 = vunpack.c.l.b16 %v309
      %v407 = vpack.c.b16 %v362, %v359
      %v408 = vpack.c.b16 %v363, %v360
      %v409 = vpack.c.b16 %v364, %v361
      %v410 = vpack.c.b16 %v368, %v365
      %v411 = vpack.c.b16 %v369, %v366
      %v412 = vpack.c.b16 %v370, %v367
      %v413 = vpack.c.b16 %v374, %v371
      %v414 = vpack.c.b16 %v375, %v372
      %v415 = vpack.c.b16 %v376, %v373
      %v416 = vpack.c.b16 %v380, %v377
      %v417 = vpack.c.b16 %v381, %v378
      %v418 = vpack.c.b16 %v382, %v379
      %v419 = vpack.c.b16 %v386, %v383
      %v420 = vpack.c.b16 %v387, %v384
      %v421 = vpack.c.b16 %v388, %v385
      %v422 = vpack.c.b16 %v392, %v389
      %v423 = vpack.c.b16 %v393, %v390
      %v424 = vpack.c.b16 %v394, %v391
      %v425 = vpack.c.b16 %v398, %v395
      %v426 = vpack.c.b16 %v399, %v396
      %v427 = vpack.c.b16 %v400, %v397
      %v428 = vpack.c.b16 %v404, %v401
      %v429 = vpack.c.b16 %v405, %v402
      %v430 = vpack.c.b16 %v406, %v403
      %455 = vmatprep.subr.bf16.mxu0 %v408
      %456 = vmatpush1.bf16.msra.mxu0 %v407
      %457 = vmatprep.subr.bf16.mxu0 %v411
      %458 = vmatpush1.bf16.msra.mxu0 %v410
      %459 = vmatprep.subr.bf16.mxu0 %v414
      %460 = vmatpush1.bf16.msra.mxu0 %v413
      %461 = vmatprep.subr.bf16.mxu0 %v417
      %462 = vmatpush1.bf16.msra.mxu0 %v416
      %463 = vmatprep.subr.bf16.mxu0 %v420
      %464 = vmatpush1.bf16.msra.mxu0 %v419
      %465 = vmatprep.subr.bf16.mxu0 %v423
      %466 = vmatpush1.bf16.msra.mxu0 %v422
      %467 = vmatprep.subr.bf16.mxu0 %v426
      %468 = vmatpush1.bf16.msra.mxu0 %v425
      %469 = vmatprep.subr.bf16.mxu0 %v429
      %470 = vmatpush1.bf16.msra.mxu0 %v428
      %471 = vmatprep.subr.bf16.mxu0 0
      %472 = vmatpush1.bf16.msra.mxu0 0
      %473 = vmatprep.subr.bf16.mxu0 0
      %474 = vmatpush1.bf16.msra.mxu0 0
      %475 = vmatprep.subr.bf16.mxu0 0
      %476 = vmatpush1.bf16.msra.mxu0 0
      %477 = vmatprep.subr.bf16.mxu0 0
      %478 = vmatpush1.bf16.msra.mxu0 0
      %479 = vmatprep.subr.bf16.mxu0 0
      %480 = vmatpush1.bf16.msra.mxu0 0
      %481 = vmatprep.subr.bf16.mxu0 0
      %482 = vmatpush1.bf16.msra.mxu0 0
      %483 = vmatprep.subr.bf16.mxu0 0
      %484 = vmatpush1.bf16.msra.mxu0 0
      %485 = vmatprep.subr.bf16.mxu0 0
      %486 = vmatpush1.bf16.msra.mxu0 0
      %487 = vmatprep.mubr.bf16.mxu0 0
      %488 = vmatmul.mubr.bf16.gmra.mrb[0].mxu0 %v274
      %v489 = vpop.f32.mrb[0].mxu0
      %v490 = vadd.f32 %v315, %v489
      %v491 = vpop.f32.mrb[0].mxu0
      %v492 = vadd.f32 %v319, %v491
      %v493 = vpop.f32.mrb[0].mxu0
      %v494 = vadd.f32 %v315, %v493
      %v495 = vpop.f32.mrb[0].mxu0
      %v496 = vadd.f32 %v319, %v495
      %497 = vmatprep.mubr.bf16.mxu0 0
      %498 = vmatmul.mubr.bf16.gmra.mrb[0].mxu0 %v275
      %v499 = vpop.f32.mrb[0].mxu0
      %v500 = vadd.f32 %v315, %v499
      %v501 = vpop.f32.mrb[0].mxu0
      %v502 = vadd.f32 %v319, %v501
      %v503 = vpop.f32.mrb[0].mxu0
      %v504 = vadd.f32 %v315, %v503
      %v505 = vpop.f32.mrb[0].mxu0
      %v506 = vadd.f32 %v319, %v505
      %507 = vmatprep.mubr.bf16.mxu0 0
      %508 = vmatmul.mubr.bf16.gmra.mrb[0].mxu0 %v276
      %v509 = vpop.f32.mrb[0].mxu0
      %v510 = vadd.f32 %v315, %v509
      %v511 = vpop.f32.mrb[0].mxu0
      %v512 = vadd.f32 %v319, %v511
      %v513 = vpop.f32.mrb[0].mxu0
      %v514 = vadd.f32 %v315, %v513
      %v515 = vpop.f32.mrb[0].mxu0
      %v516 = vadd.f32 %v319, %v515
      %517 = vmatprep.mubr.bf16.mxu0 0
      %518 = vmatmul.mubr.bf16.gmra.mrb[0].mxu0 %v277
      %v519 = vpop.f32.mrb[0].mxu0
      %v520 = vadd.f32 %v315, %v519
      %v521 = vpop.f32.mrb[0].mxu0
      %v522 = vadd.f32 %v319, %v521
      %v523 = vpop.f32.mrb[0].mxu0
      %v524 = vadd.f32 %v315, %v523
      %v525 = vpop.f32.mrb[0].mxu0
      %v526 = vadd.f32 %v319, %v525
      %527 = vdwg.mxu0
      %528 = vmatprep.subr.bf16.mxu0 0
      %529 = vmatpush1.bf16.msra.mxu0 %v409
      %530 = vmatprep.subr.bf16.mxu0 0
      %531 = vmatpush1.bf16.msra.mxu0 %v412
      %532 = vmatprep.subr.bf16.mxu0 0
      %533 = vmatpush1.bf16.msra.mxu0 %v415
      %534 = vmatprep.subr.bf16.mxu0 0
      %535 = vmatpush1.bf16.msra.mxu0 %v418
      %536 = vmatprep.subr.bf16.mxu0 0
      %537 = vmatpush1.bf16.msra.mxu0 %v421
      %538 = vmatprep.subr.bf16.mxu0 0
      %539 = vmatpush1.bf16.msra.mxu0 %v424
      %540 = vmatprep.subr.bf16.mxu0 0
      %541 = vmatpush1.bf16.msra.mxu0 %v427
      %542 = vmatprep.subr.bf16.mxu0 0
      %543 = vmatpush1.bf16.msra.mxu0 %v430
      %544 = vmatprep.subr.bf16.mxu0 0
      %545 = vmatpush1.bf16.msra.mxu0 0
      %546 = vmatprep.subr.bf16.mxu0 0
      %547 = vmatpush1.bf16.msra.mxu0 0
      %548 = vmatprep.subr.bf16.mxu0 0
      %549 = vmatpush1.bf16.msra.mxu0 0
      %550 = vmatprep.subr.bf16.mxu0 0
      %551 = vmatpush1.bf16.msra.mxu0 0
      %552 = vmatprep.subr.bf16.mxu0 0
      %553 = vmatpush1.bf16.msra.mxu0 0
      %554 = vmatprep.subr.bf16.mxu0 0
      %555 = vmatpush1.bf16.msra.mxu0 0
      %556 = vmatprep.subr.bf16.mxu0 0
      %557 = vmatpush1.bf16.msra.mxu0 0
      %558 = vmatprep.subr.bf16.mxu0 0
      %559 = vmatpush1.bf16.msra.mxu0 0
      %560 = vmatprep.mubr.bf16.mxu0 0
      %561 = vmatmul.mubr.bf16.gmra.mrb[0].mxu0 %v274
      %v562 = vpop.f32.mrb[0].mxu0
      %v563 = vadd.f32 %v323, %v562
      %v564 = vpop.f32.mrb[0].mxu0
      %v565 = vpop.f32.mrb[0].mxu0
      %v566 = vadd.f32 %v323, %v565
      %v567 = vpop.f32.mrb[0].mxu0
      %568 = vmatprep.mubr.bf16.mxu0 0
      %569 = vmatmul.mubr.bf16.gmra.mrb[0].mxu0 %v275
      %v570 = vpop.f32.mrb[0].mxu0
      %v571 = vadd.f32 %v323, %v570
      %v572 = vpop.f32.mrb[0].mxu0
      %v573 = vpop.f32.mrb[0].mxu0
      %v574 = vadd.f32 %v323, %v573
      %v575 = vpop.f32.mrb[0].mxu0
      %576 = vmatprep.mubr.bf16.mxu0 0
      %577 = vmatmul.mubr.bf16.gmra.mrb[0].mxu0 %v276
      %v578 = vpop.f32.mrb[0].mxu0
      %v579 = vadd.f32 %v323, %v578
      %v580 = vpop.f32.mrb[0].mxu0
      %v581 = vpop.f32.mrb[0].mxu0
      %v582 = vadd.f32 %v323, %v581
      %v583 = vpop.f32.mrb[0].mxu0
      %584 = vmatprep.mubr.bf16.mxu0 0
      %585 = vmatmul.mubr.bf16.gmra.mrb[0].mxu0 %v277
      %v586 = vpop.f32.mrb[0].mxu0
      %v587 = vadd.f32 %v323, %v586
      %v588 = vpop.f32.mrb[0].mxu0
      %v589 = vpop.f32.mrb[0].mxu0
      %v590 = vadd.f32 %v323, %v589
      %v591 = vpop.f32.mrb[0].mxu0
      %592 = vdwg.mxu0
      %v593 = vpack.c.bf16 %v494, %v490
      %v594 = vpack.c.bf16 %v496, %v492
      %v595 = vpack.c.bf16 %v566, %v563
      %v596 = vpack.c.bf16 %v504, %v500
      %v597 = vpack.c.bf16 %v506, %v502
      %v598 = vpack.c.bf16 %v574, %v571
      %v599 = vpack.c.bf16 %v514, %v510
      %v600 = vpack.c.bf16 %v516, %v512
      %v601 = vpack.c.bf16 %v582, %v579
      %v602 = vpack.c.bf16 %v524, %v520
      %v603 = vpack.c.bf16 %v526, %v522
      %v604 = vpack.c.bf16 %v590, %v587
      %v617 = vunpack.c.l.b16 %v593
      %v618 = vunpack.c.l.b16 %v594
      %v619 = vunpack.c.l.b16 %v595
      %v620 = vunpack.c.h.b16 %v593
      %v621 = vunpack.c.h.b16 %v594
      %v622 = vunpack.c.h.b16 %v595
      %v623 = vunpack.c.l.b16 %v596
      %v624 = vunpack.c.l.b16 %v597
      %v625 = vunpack.c.l.b16 %v598
      %v626 = vunpack.c.h.b16 %v596
      %v627 = vunpack.c.h.b16 %v597
      %v628 = vunpack.c.h.b16 %v598
      %v629 = vunpack.c.l.b16 %v599
      %v630 = vunpack.c.l.b16 %v600
      %v631 = vunpack.c.l.b16 %v601
      %v632 = vunpack.c.h.b16 %v599
      %v633 = vunpack.c.h.b16 %v600
      %v634 = vunpack.c.h.b16 %v601
      %v635 = vunpack.c.l.b16 %v602
      %v636 = vunpack.c.l.b16 %v603
      %v637 = vunpack.c.l.b16 %v604
      %v638 = vunpack.c.h.b16 %v602
      %v639 = vunpack.c.h.b16 %v603
      %v640 = vunpack.c.h.b16 %v604
      %v641 = vpack.c.b16 %v618, %v617
      %v642 = vpack.c.b16 %v619, %v619
      %v643 = vpack.c.b16 %v621, %v620
      %v644 = vpack.c.b16 %v622, %v622
      %v645 = vpack.c.b16 %v624, %v623
      %v646 = vpack.c.b16 %v625, %v625
      %v647 = vpack.c.b16 %v627, %v626
      %v648 = vpack.c.b16 %v628, %v628
      %v649 = vpack.c.b16 %v630, %v629
      %v650 = vpack.c.b16 %v631, %v631
      %v651 = vpack.c.b16 %v633, %v632
      %v652 = vpack.c.b16 %v634, %v634
      %v653 = vpack.c.b16 %v636, %v635
      %v654 = vpack.c.b16 %v637, %v637
      %v655 = vpack.c.b16 %v639, %v638
      %v656 = vpack.c.b16 %v640, %v640
      %673 = vst [vmem:[%s174] sm:$0xff] %v641
      %674 = vst [vmem:[%s174 + $0x8] sm:$0xf] %v642
      %675 = vst [vmem:[%s174 + $0xc] sm:$0xff] %v643
      %676 = vst [vmem:[%s174 + $0x14] sm:$0xf] %v644
      %677 = vst [vmem:[%s174 + $0x18] sm:$0xff] %v645
      %678 = vst [vmem:[%s174 + $0x20] sm:$0xf] %v646
      %679 = vst [vmem:[%s174 + $0x24] sm:$0xff] %v647
      %680 = vst [vmem:[%s174 + $0x2c] sm:$0xf] %v648
      %681 = vst [vmem:[%s174 + $0x30] sm:$0xff] %v649
      %682 = vst [vmem:[%s174 + $0x38] sm:$0xf] %v650
      %683 = vst [vmem:[%s174 + $0x3c] sm:$0xff] %v651
      %684 = vst [vmem:[%s174 + $0x44] sm:$0xf] %v652
      %685 = vst [vmem:[%s174 + $0x48] sm:$0xff] %v653
      %686 = vst [vmem:[%s174 + $0x50] sm:$0xf] %v654
      %687 = vst [vmem:[%s174 + $0x54] sm:$0xff] %v655
      %688 = vst [vmem:[%s174 + $0x5c] sm:$0xf] %v656
      %s689 = smul.u32 8, %s14
      %p690 = scmp.lt.s32.totalorder %s689, 15
      %s691 = scalar_select %p690, %s689, 15
      %s692 = smul.addr %s691, 3
      %s693 = smul.addr %s692, 4
      %s694 = scalar_lea.vmem %s3, %s693
      // Predicated region
      $region33: #{_lambda_.6} parent=31 // pred_check
        %p695 = pneg %p100
      $region34: #{_lambda_.6} parent=31 // pred_check_branch
        %697 = sbr.rel (%p695) target = $region36
      $region35: #{_lambda_.6} parent=31 // pred_region
        %s698 = smul.u32 8, %s14
      $region36: #{_lambda_.6} parent=31 // pred_fallthru
        _
    $region32: #{_lambda_.6} parent=5 // pred_fallthru
      _
    %p699 = scmp.le.s32.totalorder 2, %s9
    // Predicated region
    $region37: #{_lambda_.6} parent=5 // pred_check
      %p700 = pneg %p699
    $region38: #{_lambda_.6} parent=5 // pred_check_branch
      %702 = sbr.rel (%p700) target = $region40
    $region39: #{_lambda_.6} parent=5 // pred_region
      %s703 = ssub.s32 %s9, 2
      // Predicated region
      $region41: #{_lambda_.6} parent=39 // pred_check
        %p704 = pneg %p106
      $region42: #{_lambda_.6} parent=39 // pred_check_branch
        %706 = sbr.rel (%p704) target = $region44
      $region43: #{_lambda_.6} parent=39 // pred_region
        %s707 = smul.u32 8, %s15
        %p708 = scmp.lt.s32.totalorder %s707, 15
        %s709 = scalar_select %p708, %s707, 15
        %s710 = smul.addr %s709, 3
        %s711 = smul.addr %s710, 4
        %s712 = scalar_lea.vmem %s3, %s711
      $region44: #{_lambda_.6} parent=39 // pred_fallthru
        _
    $region40: #{_lambda_.6} parent=5 // pred_fallthru
      _
  $region6: #{_lambda_.6} parent=0 // loop_footer
    %s13 = sadd.s32 1, %s9
  $region7: #{_lambda_.6} parent=0 // loop_footer_branch
    %8 = sbr.rel target = $region3
  $region8: #{_lambda_.6} parent=0 // loop_exit
    _

// kernel: _lambda_.8
$region0: #{_lambda_.8}
  #allocation0 [shape = 'u32[]', space=smem, size = 0x4, offset = 0x4, fixed_abs, tag = 'smem constant byte address 0x4 - core index']
  #allocation1 [shape = 'u32[144,128]{1,0:T(1,128)}', space=vmem, size = 0x12000, scoped, tag = 'internal scratch']
  %s0 = inlined_call_operand.vmem [shape: bf16[128,128], index: 0, kind: input, shape index: {}]
  %s1 = inlined_call_operand.vmem [shape: f32[128,128], index: 1, kind: input, shape index: {}]
  %s2 = inlined_call_operand.vmem [shape: bf16[128,128], index: 2, kind: input, shape index: {}]
  %s3 = inlined_call_operand.vmem [shape: f32[1,128], index: 3, kind: input, shape index: {}]
  %s4 = inlined_call_operand.vmem [shape: bf16[128,512], index: 4, kind: input, shape index: {}]
  %s5 = inlined_call_operand.vmem [shape: f32[1,512], index: 5, kind: input, shape index: {}]
  %s6 = inlined_call_operand.vmem [shape: bf16[512,128], index: 6, kind: input, shape index: {}]
  %s7 = inlined_call_operand.vmem [shape: f32[1,128], index: 7, kind: input, shape index: {}]
  %s8 = inlined_call_operand.vmem [shape: f32[128,128], index: 8, kind: output, shape index: {}]
  %s9 = sld [smem:[#allocation0]]
  $region65: #{_lambda_.8} parent=0
    _
  %s11 = ssub.s32 1, %s9
  %s12 = scalar_select 0, %s11, %s9
  loop: start=0, step=1, limit=4
  $region2: #{_lambda_.8} parent=0 // loop_pre_header
    _
  $region3: #{_lambda_.8} parent=0 // loop_header
    %s14 = sphi 0, %s18
    %p15 = scmp.ge.s32.totalorder %s14, 4
    %s24 = sphi 0, %s26
    %s27 = sphi 0, %s24
    %s28 = sphi 0, %s27
    %s44 = sphi 0, %s28
    %s50 = sphi 0, %s52
    %s53 = sphi 0, %s50
    %s54 = sphi 0, %s53
    %s70 = sphi 0, %s54
    %s74 = sphi 0, %s74
    %s76 = sphi 0, %s74
    %s77 = sphi 0, %s76
    %s91 = sphi 0, %s77
    %s95 = sphi 0, %s95
    %s97 = sphi 0, %s95
    %s98 = sphi 0, %s97
    %s112 = sphi 0, %s98
    %s116 = sphi 0, %s116
    %s118 = sphi 0, %s116
    %s119 = sphi 0, %s118
    %s133 = sphi 0, %s119
    %s137 = sphi 0, %s137
    %s139 = sphi 0, %s137
    %s140 = sphi 0, %s139
    %s154 = sphi 0, %s140
    %s158 = sphi 0, %s158
    %s160 = sphi 0, %s158
    %s161 = sphi 0, %s160
    %s175 = sphi 0, %s161
    %s179 = sphi 0, %s179
    %s181 = sphi 0, %s179
    %s182 = sphi 0, %s181
    %s196 = sphi 0, %s182
    %s202 = sphi 0, %s204
    %s205 = sphi 0, %s202
    %s206 = sphi 0, %s205
    %s222 = sphi 0, %s206
  $region4: #{_lambda_.8} parent=0 // loop_header_branch
    %17 = sbr.rel (%p15) target = $region8
  $region5: #{_lambda_.8} parent=0 // loop_body
    %s19 = ssub.s32 %s14, 1
    %s20 = ssub.s32 %s14, 2
    %s21 = sadd.s32 %s14, 1
    %s22 = ssub.s32 %s14, %s21
    %p23 = scmp.eq.s32.totalorder %s22, 0
    %s25 = sadd.s32 %s24, 1
    %s26 = scalar_select %p23, %s24, %s25
    %p29 = pneg %p23
    %p30 = scmp.eq.s32.totalorder %s14, 1
    %p31 = por %p29, %p30
    %p32 = scmp.ne.s32.totalorder %s24, %s27
    %p33 = scmp.eq.s32.totalorder %s14, 0
    %p34 = por %p32, %p33
    %p35 = scmp.ne.s32.totalorder %s24, %s27
    %p36 = scmp.eq.s32.totalorder %s19, 1
    %p37 = por %p35, %p36
    %p38 = scmp.ne.s32.totalorder %s27, %s28
    %p39 = scmp.eq.s32.totalorder %s19, 0
    %p40 = por %p38, %p39
    %p41 = scmp.ne.s32.totalorder %s27, %s28
    %p42 = scmp.eq.s32.totalorder %s20, 1
    %p43 = por %p41, %p42
    %p45 = scmp.ne.s32.totalorder %s28, %s44
    %p46 = scmp.eq.s32.totalorder %s20, 0
    %p47 = por %p45, %p46
    %s48 = ssub.s32 %s14, %s21
    %p49 = scmp.eq.s32.totalorder %s48, 0
    %s51 = sadd.s32 %s50, 1
    %s52 = scalar_select %p49, %s50, %s51
    %p55 = pneg %p49
    %p56 = scmp.eq.s32.totalorder %s14, 1
    %p57 = por %p55, %p56
    %p58 = scmp.ne.s32.totalorder %s50, %s53
    %p59 = scmp.eq.s32.totalorder %s14, 0
    %p60 = por %p58, %p59
    %p61 = scmp.ne.s32.totalorder %s50, %s53
    %p62 = scmp.eq.s32.totalorder %s19, 1
    %p63 = por %p61, %p62
    %p64 = scmp.ne.s32.totalorder %s53, %s54
    %p65 = scmp.eq.s32.totalorder %s19, 0
    %p66 = por %p64, %p65
    %p67 = scmp.ne.s32.totalorder %s53, %s54
    %p68 = scmp.eq.s32.totalorder %s20, 1
    %p69 = por %p67, %p68
    %p71 = scmp.ne.s32.totalorder %s54, %s70
    %p72 = scmp.eq.s32.totalorder %s20, 0
    %p73 = por %p71, %p72
    %s75 = sadd.s32 %s74, 1
    %p78 = scmp.eq.s32.totalorder %s14, 1
    %p79 = scmp.ne.s32.totalorder %s74, %s76
    %p80 = scmp.eq.s32.totalorder %s14, 0
    %p81 = por %p79, %p80
    %p82 = scmp.ne.s32.totalorder %s74, %s76
    %p83 = scmp.eq.s32.totalorder %s19, 1
    %p84 = por %p82, %p83
    %p85 = scmp.ne.s32.totalorder %s76, %s77
    %p86 = scmp.eq.s32.totalorder %s19, 0
    %p87 = por %p85, %p86
    %p88 = scmp.ne.s32.totalorder %s76, %s77
    %p89 = scmp.eq.s32.totalorder %s20, 1
    %p90 = por %p88, %p89
    %p92 = scmp.ne.s32.totalorder %s77, %s91
    %p93 = scmp.eq.s32.totalorder %s20, 0
    %p94 = por %p92, %p93
    %s96 = sadd.s32 %s95, 1
    %p99 = scmp.eq.s32.totalorder %s14, 1
    %p100 = scmp.ne.s32.totalorder %s95, %s97
    %p101 = scmp.eq.s32.totalorder %s14, 0
    %p102 = por %p100, %p101
    %p103 = scmp.ne.s32.totalorder %s95, %s97
    %p104 = scmp.eq.s32.totalorder %s19, 1
    %p105 = por %p103, %p104
    %p106 = scmp.ne.s32.totalorder %s97, %s98
    %p107 = scmp.eq.s32.totalorder %s19, 0
    %p108 = por %p106, %p107
    %p109 = scmp.ne.s32.totalorder %s97, %s98
    %p110 = scmp.eq.s32.totalorder %s20, 1
    %p111 = por %p109, %p110
    %p113 = scmp.ne.s32.totalorder %s98, %s112
    %p114 = scmp.eq.s32.totalorder %s20, 0
    %p115 = por %p113, %p114
    %s117 = sadd.s32 %s116, 1
    %p120 = scmp.eq.s32.totalorder %s14, 1
    %p121 = scmp.ne.s32.totalorder %s116, %s118
    %p122 = scmp.eq.s32.totalorder %s14, 0
    %p123 = por %p121, %p122
    %p124 = scmp.ne.s32.totalorder %s116, %s118
    %p125 = scmp.eq.s32.totalorder %s19, 1
    %p126 = por %p124, %p125
    %p127 = scmp.ne.s32.totalorder %s118, %s119
    %p128 = scmp.eq.s32.totalorder %s19, 0
    %p129 = por %p127, %p128
    %p130 = scmp.ne.s32.totalorder %s118, %s119
    %p131 = scmp.eq.s32.totalorder %s20, 1
    %p132 = por %p130, %p131
    %p134 = scmp.ne.s32.totalorder %s119, %s133
    %p135 = scmp.eq.s32.totalorder %s20, 0
    %p136 = por %p134, %p135
    %s138 = sadd.s32 %s137, 1
    %p141 = scmp.eq.s32.totalorder %s14, 1
    %p142 = scmp.ne.s32.totalorder %s137, %s139
    %p143 = scmp.eq.s32.totalorder %s14, 0
    %p144 = por %p142, %p143
    %p145 = scmp.ne.s32.totalorder %s137, %s139
    %p146 = scmp.eq.s32.totalorder %s19, 1
    %p147 = por %p145, %p146
    %p148 = scmp.ne.s32.totalorder %s139, %s140
    %p149 = scmp.eq.s32.totalorder %s19, 0
    %p150 = por %p148, %p149
    %p151 = scmp.ne.s32.totalorder %s139, %s140
    %p152 = scmp.eq.s32.totalorder %s20, 1
    %p153 = por %p151, %p152
    %p155 = scmp.ne.s32.totalorder %s140, %s154
    %p156 = scmp.eq.s32.totalorder %s20, 0
    %p157 = por %p155, %p156
    %s159 = sadd.s32 %s158, 1
    %p162 = scmp.eq.s32.totalorder %s14, 1
    %p163 = scmp.ne.s32.totalorder %s158, %s160
    %p164 = scmp.eq.s32.totalorder %s14, 0
    %p165 = por %p163, %p164
    %p166 = scmp.ne.s32.totalorder %s158, %s160
    %p167 = scmp.eq.s32.totalorder %s19, 1
    %p168 = por %p166, %p167
    %p169 = scmp.ne.s32.totalorder %s160, %s161
    %p170 = scmp.eq.s32.totalorder %s19, 0
    %p171 = por %p169, %p170
    %p172 = scmp.ne.s32.totalorder %s160, %s161
    %p173 = scmp.eq.s32.totalorder %s20, 1
    %p174 = por %p172, %p173
    %p176 = scmp.ne.s32.totalorder %s161, %s175
    %p177 = scmp.eq.s32.totalorder %s20, 0
    %p178 = por %p176, %p177
    %s180 = sadd.s32 %s179, 1
    %p183 = scmp.eq.s32.totalorder %s14, 1
    %p184 = scmp.ne.s32.totalorder %s179, %s181
    %p185 = scmp.eq.s32.totalorder %s14, 0
    %p186 = por %p184, %p185
    %p187 = scmp.ne.s32.totalorder %s179, %s181
    %p188 = scmp.eq.s32.totalorder %s19, 1
    %p189 = por %p187, %p188
    %p190 = scmp.ne.s32.totalorder %s181, %s182
    %p191 = scmp.eq.s32.totalorder %s19, 0
    %p192 = por %p190, %p191
    %p193 = scmp.ne.s32.totalorder %s181, %s182
    %p194 = scmp.eq.s32.totalorder %s20, 1
    %p195 = por %p193, %p194
    %p197 = scmp.ne.s32.totalorder %s182, %s196
    %p198 = scmp.eq.s32.totalorder %s20, 0
    %p199 = por %p197, %p198
    %s200 = ssub.s32 %s14, %s21
    %p201 = scmp.eq.s32.totalorder %s200, 0
    %s203 = sadd.s32 %s202, 1
    %s204 = scalar_select %p201, %s202, %s203
    %p207 = pneg %p201
    %p208 = scmp.eq.s32.totalorder %s14, 1
    %p209 = por %p207, %p208
    %p210 = scmp.ne.s32.totalorder %s202, %s205
    %p211 = scmp.eq.s32.totalorder %s14, 0
    %p212 = por %p210, %p211
    %p213 = scmp.ne.s32.totalorder %s202, %s205
    %p214 = scmp.eq.s32.totalorder %s19, 1
    %p215 = por %p213, %p214
    %p216 = scmp.ne.s32.totalorder %s205, %s206
    %p217 = scmp.eq.s32.totalorder %s19, 0
    %p218 = por %p216, %p217
    %p219 = scmp.ne.s32.totalorder %s205, %s206
    %p220 = scmp.eq.s32.totalorder %s20, 1
    %p221 = por %p219, %p220
    %p223 = scmp.ne.s32.totalorder %s206, %s222
    %p224 = scmp.eq.s32.totalorder %s20, 0
    %p225 = por %p223, %p224
    %p226 = scmp.le.s32.totalorder 1, %s14
    %p227 = scmp.lt.s32.totalorder %s14, 3
    %p228 = pnand %p226, %p227
    %p229 = pneg %p228
    // Predicated region
    $region9: #{_lambda_.8} parent=5 // pred_check
      _
    $region10: #{_lambda_.8} parent=5 // pred_check_branch
      %231 = sbr.rel (%p228) target = $region12
    $region11: #{_lambda_.8} parent=5 // pred_region
      %s232 = ssub.s32 %s14, 1
      // Predicated region
      $region13: #{_lambda_.8} parent=11 // pred_check
        %p233 = pneg %p87
      $region14: #{_lambda_.8} parent=11 // pred_check_branch
        %235 = sbr.rel (%p233) target = $region16
      $region15: #{_lambda_.8} parent=11 // pred_region
        _
      $region16: #{_lambda_.8} parent=11 // pred_fallthru
        _
      // Predicated region
      $region17: #{_lambda_.8} parent=11 // pred_check
        %p236 = pneg %p108
      $region18: #{_lambda_.8} parent=11 // pred_check_branch
        %238 = sbr.rel (%p236) target = $region20
      $region19: #{_lambda_.8} parent=11 // pred_region
        _
      $region20: #{_lambda_.8} parent=11 // pred_fallthru
        _
      // Predicated region
      $region21: #{_lambda_.8} parent=11 // pred_check
        %p239 = pneg %p129
      $region22: #{_lambda_.8} parent=11 // pred_check_branch
        %241 = sbr.rel (%p239) target = $region24
      $region23: #{_lambda_.8} parent=11 // pred_region
        _
      $region24: #{_lambda_.8} parent=11 // pred_fallthru
        _
      // Predicated region
      $region25: #{_lambda_.8} parent=11 // pred_check
        %p242 = pneg %p150
      $region26: #{_lambda_.8} parent=11 // pred_check_branch
        %244 = sbr.rel (%p242) target = $region28
      $region27: #{_lambda_.8} parent=11 // pred_region
        _
      $region28: #{_lambda_.8} parent=11 // pred_fallthru
        _
      // Predicated region
      $region29: #{_lambda_.8} parent=11 // pred_check
        %p245 = pneg %p171
      $region30: #{_lambda_.8} parent=11 // pred_check_branch
        %247 = sbr.rel (%p245) target = $region32
      $region31: #{_lambda_.8} parent=11 // pred_region
        _
      $region32: #{_lambda_.8} parent=11 // pred_fallthru
        _
      // Predicated region
      $region33: #{_lambda_.8} parent=11 // pred_check
        %p248 = pneg %p192
      $region34: #{_lambda_.8} parent=11 // pred_check_branch
        %250 = sbr.rel (%p248) target = $region36
      $region35: #{_lambda_.8} parent=11 // pred_region
        _
      $region36: #{_lambda_.8} parent=11 // pred_fallthru
        _
    $region12: #{_lambda_.8} parent=5 // pred_fallthru
      _
    %p251 = scmp.lt.s32.totalorder %s14, 2
    // Predicated region
    $region37: #{_lambda_.8} parent=5 // pred_check
      %p252 = pneg %p251
    $region38: #{_lambda_.8} parent=5 // pred_check_branch
      %254 = sbr.rel (%p252) target = $region40
    $region39: #{_lambda_.8} parent=5 // pred_region
      // Predicated region
      $region41: #{_lambda_.8} parent=39 // pred_check
        %p255 = pneg %p34
      $region42: #{_lambda_.8} parent=39 // pred_check_branch
        %257 = sbr.rel (%p255) target = $region44
      $region43: #{_lambda_.8} parent=39 // pred_region
        %s258 = smul.u32 8, %s14
        %p259 = scmp.lt.s32.totalorder %s258, 15
        %s260 = scalar_select %p259, %s258, 15
        %s261 = smul.addr %s260, 4
        %s262 = scalar_lea.vmem %s0, %s261
        %s263 = smul.u32 8, %s14
      $region44: #{_lambda_.8} parent=39 // pred_fallthru
        _
      // Predicated region
      $region45: #{_lambda_.8} parent=39 // pred_check
        %p264 = pneg %p60
      $region46: #{_lambda_.8} parent=39 // pred_check_branch
        %266 = sbr.rel (%p264) target = $region48
      $region47: #{_lambda_.8} parent=39 // pred_region
        %s267 = smul.u32 8, %s14
        %p268 = scmp.lt.s32.totalorder %s267, 15
        %s269 = scalar_select %p268, %s267, 15
        %s270 = smul.addr %s269, 8
        %s271 = scalar_lea.vmem %s1, %s270
        %s272 = smul.u32 8, %s14
      $region48: #{_lambda_.8} parent=39 // pred_fallthru
        _
    $region40: #{_lambda_.8} parent=5 // pred_fallthru
      _
    %p273 = scmp.le.s32.totalorder 1, %s14
    %p274 = scmp.lt.s32.totalorder %s14, 3
    %p275 = pnand %p273, %p274
    %p276 = pneg %p275
    // Predicated region
    $region49: #{_lambda_.8} parent=5 // pred_check
      _
    $region50: #{_lambda_.8} parent=5 // pred_check_branch
      %278 = sbr.rel (%p275) target = $region52
    $region51: #{_lambda_.8} parent=5 // pred_region
      %s279 = ssub.s32 %s14, 1
      %s280 = smul.u32 8, %s19
      %p281 = scmp.lt.s32.totalorder %s280, 15
      %s282 = scalar_select %p281, %s280, 15
      %s283 = smul.addr %s282, 4
      %s284 = scalar_lea.vmem %s0, %s283
      %p285 = pneg %p40
      %p286 = pneg %p37
      %s287 = smul.u32 8, %s19
      %p288 = scmp.lt.s32.totalorder %s287, 15
      %s289 = scalar_select %p288, %s287, 15
      %s290 = smul.addr %s289, 8
      %s291 = scalar_lea.vmem %s1, %s290
      %p292 = pneg %p66
      %p293 = pneg %p63
      %p294 = pneg %p87
      %p295 = pneg %p84
      %p296 = pneg %p108
      %p297 = pneg %p105
      %p298 = pneg %p129
      %p299 = pneg %p126
      %p300 = pneg %p150
      %p301 = pneg %p147
      %p302 = pneg %p171
      %p303 = pneg %p168
      %p304 = pneg %p192
      %p305 = pneg %p189
      %p306 = pneg %p218
      %p307 = pneg %p215
      %s308 = smul.u32 8, %s19
      %p309 = scmp.lt.s32.totalorder %s308, 15
      %s310 = scalar_select %p309, %s308, 15
      %s311 = smul.addr %s310, 8
      %s312 = scalar_lea.vmem %s8, %s311
      %s313 = smul.u32 8, %s19
      %p314 = scmp.lt.s32.totalorder %s313, 15
      %s315 = scalar_select %p314, %s313, 15
      %s316 = smul.addr %s315, 4
      %s317 = scalar_lea.vmem %s0, %s316
      %s318 = smul.u32 8, %s19
      %s319 = smul.u32 8, %s19
      %p320 = scmp.lt.s32.totalorder %s319, 15
      %s321 = scalar_select %p320, %s319, 15
      %s322 = smul.addr %s321, 8
      %s323 = scalar_lea.vmem %s1, %s322
      %s324 = smul.u32 8, %s19
      %s325 = smul.u32 8, %s19
      %p326 = scmp.lt.s32.totalorder %s325, 15
      %s327 = scalar_select %p326, %s325, 15
      %s328 = smul.addr %s327, 8
      %s329 = scalar_lea.vmem %s8, %s328
      %s330 = smul.u32 8, %s19
      %v332 = vld [vmem:[%s317] sm:$0xf]
      %v333 = vld [vmem:[%s317 + $0x4] sm:$0xf]
      %v334 = vld [vmem:[%s317 + $0x8] sm:$0xf]
      %v335 = vld [vmem:[%s317 + $0xc] sm:$0xf]
      %v336 = vld [vmem:[%s317 + $0x10] sm:$0xf]
      %v337 = vld [vmem:[%s317 + $0x14] sm:$0xf]
      %v338 = vld [vmem:[%s317 + $0x18] sm:$0xf]
      %v339 = vld [vmem:[%s317 + $0x1c] sm:$0xf]
      %v340 = vld [vmem:[%s2] sm:$0xf]
      %v341 = vld [vmem:[%s2 + $0x4] sm:$0xf]
      %v342 = vld [vmem:[%s2 + $0x8] sm:$0xf]
      %v343 = vld [vmem:[%s2 + $0xc] sm:$0xf]
      %v344 = vld [vmem:[%s2 + $0x10] sm:$0xf]
      %v345 = vld [vmem:[%s2 + $0x14] sm:$0xf]
      %v346 = vld [vmem:[%s2 + $0x18] sm:$0xf]
      %v347 = vld [vmem:[%s2 + $0x1c] sm:$0xf]
      %v348 = vld [vmem:[%s2 + $0x20] sm:$0xf]
      %v349 = vld [vmem:[%s2 + $0x24] sm:$0xf]
      %v350 = vld [vmem:[%s2 + $0x28] sm:$0xf]
      %v351 = vld [vmem:[%s2 + $0x2c] sm:$0xf]
      %v352 = vld [vmem:[%s2 + $0x30] sm:$0xf]
      %v353 = vld [vmem:[%s2 + $0x34] sm:$0xf]
      %v354 = vld [vmem:[%s2 + $0x38] sm:$0xf]
      %v355 = vld [vmem:[%s2 + $0x3c] sm:$0xf]
      %v356 = vld [vmem:[%s3] sm:$0x1]
      %v358 = vlaneseq
      %v359 = vshrl.u32 %v358, 7
      %v360 = vsub.s32 0, %v359
      %v361 = vrot.slane %v356, %v360
      %v371 = vunpack.c.l.b16 %v332
      %v372 = vunpack.c.l.b16 %v333
      %v373 = vunpack.c.l.b16 %v334
      %v374 = vunpack.c.l.b16 %v335
      %v375 = vunpack.c.l.b16 %v336
      %v376 = vunpack.c.l.b16 %v337
      %v377 = vunpack.c.l.b16 %v338
      %v378 = vunpack.c.l.b16 %v339
      %v379 = vpack.c.b16 %v372, %v371
      %v380 = vpack.c.b16 %v374, %v373
      %v381 = vpack.c.b16 %v376, %v375
      %v382 = vpack.c.b16 %v378, %v377
      %v403 = vunpack.c.l.b16 %v340
      %v404 = vunpack.c.l.b16 %v341
      %v405 = vunpack.c.l.b16 %v342
      %v406 = vunpack.c.l.b16 %v343
      %v407 = vunpack.c.l.b16 %v344
      %v408 = vunpack.c.l.b16 %v345
      %v409 = vunpack.c.l.b16 %v346
      %v410 = vunpack.c.l.b16 %v347
      %v411 = vunpack.c.l.b16 %v348
      %v412 = vunpack.c.l.b16 %v349
      %v413 = vunpack.c.l.b16 %v350
      %v414 = vunpack.c.l.b16 %v351
      %v415 = vunpack.c.l.b16 %v352
      %v416 = vunpack.c.l.b16 %v353
      %v417 = vunpack.c.l.b16 %v354
      %v418 = vunpack.c.l.b16 %v355
      %v419 = vpack.c.b16 %v404, %v403
      %v420 = vpack.c.b16 %v406, %v405
      %v421 = vpack.c.b16 %v408, %v407
      %v422 = vpack.c.b16 %v410, %v409
      %v423 = vpack.c.b16 %v412, %v411
      %v424 = vpack.c.b16 %v414, %v413
      %v425 = vpack.c.b16 %v416, %v415
      %v426 = vpack.c.b16 %v418, %v417
      %435 = vmatprep.subr.bf16.mxu0 0
      %436 = vmatpush1.bf16.msra.mxu0 %v419
      %437 = vmatprep.subr.bf16.mxu0 0
      %438 = vmatpush1.bf16.msra.mxu0 %v420
      %439 = vmatprep.subr.bf16.mxu0 0
      %440 = vmatpush1.bf16.msra.mxu0 %v421
      %441 = vmatprep.subr.bf16.mxu0 0
      %442 = vmatpush1.bf16.msra.mxu0 %v422
      %443 = vmatprep.subr.bf16.mxu0 0
      %444 = vmatpush1.bf16.msra.mxu0 %v423
      %445 = vmatprep.subr.bf16.mxu0 0
      %446 = vmatpush1.bf16.msra.mxu0 %v424
      %447 = vmatprep.subr.bf16.mxu0 0
      %448 = vmatpush1.bf16.msra.mxu0 %v425
      %449 = vmatprep.subr.bf16.mxu0 0
      %450 = vmatpush1.bf16.msra.mxu0 %v426
      %451 = vmatprep.subr.bf16.mxu0 0
      %452 = vmatpush1.bf16.msra.mxu0 0
      %453 = vmatprep.subr.bf16.mxu0 0
      %454 = vmatpush1.bf16.msra.mxu0 0
      %455 = vmatprep.subr.bf16.mxu0 0
      %456 = vmatpush1.bf16.msra.mxu0 0
      %457 = vmatprep.subr.bf16.mxu0 0
      %458 = vmatpush1.bf16.msra.mxu0 0
      %459 = vmatprep.subr.bf16.mxu0 0
      %460 = vmatpush1.bf16.msra.mxu0 0
      %461 = vmatprep.subr.bf16.mxu0 0
      %462 = vmatpush1.bf16.msra.mxu0 0
      %463 = vmatprep.subr.bf16.mxu0 0
      %464 = vmatpush1.bf16.msra.mxu0 0
      %465 = vmatprep.subr.bf16.mxu0 0
      %466 = vmatpush1.bf16.msra.mxu0 0
      %467 = vmatprep.mubr.bf16.mxu0 0
      %468 = vmatmul.mubr.bf16.gmra.mrb[0].mxu0 %v379
      %v469 = vpop.f32.mrb[0].mxu0
      %v470 = vadd.f32 %v361, %v469
      %v471 = vpop.f32.mrb[0].mxu0
      %v472 = vpop.f32.mrb[0].mxu0
      %v473 = vadd.f32 %v361, %v472
      %v474 = vpop.f32.mrb[0].mxu0
      %475 = vmatprep.mubr.bf16.mxu0 0
      %476 = vmatmul.mubr.bf16.gmra.mrb[0].mxu0 %v380
      %v477 = vpop.f32.mrb[0].mxu0
      %v478 = vadd.f32 %v361, %v477
      %v479 = vpop.f32.mrb[0].mxu0
      %v480 = vpop.f32.mrb[0].mxu0
      %v481 = vadd.f32 %v361, %v480
      %v482 = vpop.f32.mrb[0].mxu0
      %483 = vmatprep.mubr.bf16.mxu0 0
      %484 = vmatmul.mubr.bf16.gmra.mrb[0].mxu0 %v381
      %v485 = vpop.f32.mrb[0].mxu0
      %v486 = vadd.f32 %v361, %v485
      %v487 = vpop.f32.mrb[0].mxu0
      %v488 = vpop.f32.mrb[0].mxu0
      %v489 = vadd.f32 %v361, %v488
      %v490 = vpop.f32.mrb[0].mxu0
      %491 = vmatprep.mubr.bf16.mxu0 0
      %492 = vmatmul.mubr.bf16.gmra.mrb[0].mxu0 %v382
      %v493 = vpop.f32.mrb[0].mxu0
      %v494 = vadd.f32 %v361, %v493
      %v495 = vpop.f32.mrb[0].mxu0
      %v496 = vpop.f32.mrb[0].mxu0
      %v497 = vadd.f32 %v361, %v496
      %v498 = vpop.f32.mrb[0].mxu0
      %499 = vdwg.mxu0
      %v500 = vld [vmem:[%s323] sm:$0xff]
      %v501 = vld [vmem:[%s323 + $0x8] sm:$0xff]
      %v502 = vld [vmem:[%s323 + $0x10] sm:$0xff]
      %v503 = vld [vmem:[%s323 + $0x18] sm:$0xff]
      %v504 = vld [vmem:[%s323 + $0x20] sm:$0xff]
      %v505 = vld [vmem:[%s323 + $0x28] sm:$0xff]
      %v506 = vld [vmem:[%s323 + $0x30] sm:$0xff]
      %v507 = vld [vmem:[%s323 + $0x38] sm:$0xff]
      %v508 = vadd.f32 %v500, %v470
      %v509 = vadd.f32 %v501, %v473
      %v510 = vadd.f32 %v502, %v478
      %v511 = vadd.f32 %v503, %v481
      %v512 = vadd.f32 %v504, %v486
      %v513 = vadd.f32 %v505, %v489
      %v514 = vadd.f32 %v506, %v494
      %v515 = vadd.f32 %v507, %v497
      %516 = vadd.xlane.f32.xlu0 %v508
      %v517 = vpop.xlane.xlu0 %516
      %518 = vadd.xlane.f32.xlu0 %v509
      %v519 = vpop.xlane.xlu0 %518
      %520 = vadd.xlane.f32.xlu0 %v510
      %v521 = vpop.xlane.xlu0 %520
      %522 = vadd.xlane.f32.xlu0 %v511
      %v523 = vpop.xlane.xlu0 %522
      %524 = vadd.xlane.f32.xlu0 %v512
      %v525 = vpop.xlane.xlu0 %524
      %526 = vadd.xlane.f32.xlu0 %v513
      %v527 = vpop.xlane.xlu0 %526
      %528 = vadd.xlane.f32.xlu0 %v514
      %v529 = vpop.xlane.xlu0 %528
      %530 = vadd.xlane.f32.xlu0 %v515
      %v531 = vpop.xlane.xlu0 %530
      %v532 = vrcp.pop 128.0
      %v533 = vmul.f32 %v517, %v532
      %v534 = vmul.f32 %v519, %v532
      %v535 = vmul.f32 %v521, %v532
      %v536 = vmul.f32 %v523, %v532
      %v537 = vmul.f32 %v525, %v532
      %v538 = vmul.f32 %v527, %v532
      %v539 = vmul.f32 %v529, %v532
      %v540 = vmul.f32 %v531, %v532
      %v541 = vsub.f32 %v508, %v533
      %v542 = vsub.f32 %v509, %v534
      %v543 = vsub.f32 %v510, %v535
      %v544 = vsub.f32 %v511, %v536
      %v545 = vsub.f32 %v512, %v537
      %v546 = vsub.f32 %v513, %v538
      %v547 = vsub.f32 %v514, %v539
      %v548 = vsub.f32 %v515, %v540
      %v549 = vmul.f32 %v541, %v541
      %v550 = vmul.f32 %v542, %v542
      %v551 = vmul.f32 %v543, %v543
      %v552 = vmul.f32 %v544, %v544
      %v553 = vmul.f32 %v545, %v545
      %v554 = vmul.f32 %v546, %v546
      %v555 = vmul.f32 %v547, %v547
      %v556 = vmul.f32 %v548, %v548
      %557 = vadd.xlane.f32.xlu0 %v549
      %v558 = vpop.xlane.xlu0 %557
      %559 = vadd.xlane.f32.xlu0 %v550
      %v560 = vpop.xlane.xlu0 %559
      %561 = vadd.xlane.f32.xlu0 %v551
      %v562 = vpop.xlane.xlu0 %561
      %563 = vadd.xlane.f32.xlu0 %v552
      %v564 = vpop.xlane.xlu0 %563
      %565 = vadd.xlane.f32.xlu0 %v553
      %v566 = vpop.xlane.xlu0 %565
      %567 = vadd.xlane.f32.xlu0 %v554
      %v568 = vpop.xlane.xlu0 %567
      %569 = vadd.xlane.f32.xlu0 %v555
      %v570 = vpop.xlane.xlu0 %569
      %571 = vadd.xlane.f32.xlu0 %v556
      %v572 = vpop.xlane.xlu0 %571
      %v573 = vmul.f32 %v558, %v532
      %v574 = vmul.f32 %v560, %v532
      %v575 = vmul.f32 %v562, %v532
      %v576 = vmul.f32 %v564, %v532
      %v577 = vmul.f32 %v566, %v532
      %v578 = vmul.f32 %v568, %v532
      %v579 = vmul.f32 %v570, %v532
      %v580 = vmul.f32 %v572, %v532
      %v581 = vadd.f32 %v573, 1e-05
      %v582 = vadd.f32 %v574, 1e-05
      %v583 = vadd.f32 %v575, 1e-05
      %v584 = vadd.f32 %v576, 1e-05
      %v585 = vadd.f32 %v577, 1e-05
      %v586 = vadd.f32 %v578, 1e-05
      %v587 = vadd.f32 %v579, 1e-05
      %v588 = vadd.f32 %v580, 1e-05
      %v589 = vrsqrt.pop %v581
      %v590 = vrsqrt.pop %v582
      %v591 = vrsqrt.pop %v583
      %v592 = vrsqrt.pop %v584
      %v593 = vrsqrt.pop %v585
      %v594 = vrsqrt.pop %v586
      %v595 = vrsqrt.pop %v587
      %v596 = vrsqrt.pop %v588
      %v597 = vmul.f32 %v541, %v589
      %v598 = vmul.f32 %v542, %v590
      %v599 = vmul.f32 %v543, %v591
      %v600 = vmul.f32 %v544, %v592
      %v601 = vmul.f32 %v545, %v593
      %v602 = vmul.f32 %v546, %v594
      %v603 = vmul.f32 %v547, %v595
      %v604 = vmul.f32 %v548, %v596
      %v605 = vpack.c.bf16 %v598, %v597
      %v606 = vpack.c.bf16 %v600, %v599
      %v607 = vpack.c.bf16 %v602, %v601
      %v608 = vpack.c.bf16 %v604, %v603
      %v609 = vld [vmem:[%s4] sm:$0xff]
      %v610 = vld [vmem:[%s4 + $0x8] sm:$0xff]
      %v611 = vld [vmem:[%s4 + $0x10] sm:$0xff]
      %v612 = vld [vmem:[%s4 + $0x18] sm:$0xff]
      %v613 = vld [vmem:[%s4 + $0x20] sm:$0xff]
      %v614 = vld [vmem:[%s4 + $0x28] sm:$0xff]
      %v615 = vld [vmem:[%s4 + $0x30] sm:$0xff]
      %v616 = vld [vmem:[%s4 + $0x38] sm:$0xff]
      %v617 = vld [vmem:[%s4 + $0x40] sm:$0xff]
      %v618 = vld [vmem:[%s4 + $0x48] sm:$0xff]
      %v619 = vld [vmem:[%s4 + $0x50] sm:$0xff]
      %v620 = vld [vmem:[%s4 + $0x58] sm:$0xff]
      %v621 = vld [vmem:[%s4 + $0x60] sm:$0xff]
      %v622 = vld [vmem:[%s4 + $0x68] sm:$0xff]
      %v623 = vld [vmem:[%s4 + $0x70] sm:$0xff]
      %v624 = vld [vmem:[%s4 + $0x78] sm:$0xff]
      %v625 = vld [vmem:[%s4 + $0x80] sm:$0xff]
      %v626 = vld [vmem:[%s4 + $0x88] sm:$0xff]
      %v627 = vld [vmem:[%s4 + $0x90] sm:$0xff]
      %v628 = vld [vmem:[%s4 + $0x98] sm:$0xff]
      %v629 = vld [vmem:[%s4 + $0xa0] sm:$0xff]
      %v630 = vld [vmem:[%s4 + $0xa8] sm:$0xff]
      %v631 = vld [vmem:[%s4 + $0xb0] sm:$0xff]
      %v632 = vld [vmem:[%s4 + $0xb8] sm:$0xff]
      %v633 = vld [vmem:[%s4 + $0xc0] sm:$0xff]
      %v634 = vld [vmem:[%s4 + $0xc8] sm:$0xff]
      %v635 = vld [vmem:[%s4 + $0xd0] sm:$0xff]
      %v636 = vld [vmem:[%s4 + $0xd8] sm:$0xff]
      %v637 = vld [vmem:[%s4 + $0xe0] sm:$0xff]
      %v638 = vld [vmem:[%s4 + $0xe8] sm:$0xff]
      %v639 = vld [vmem:[%s4 + $0xf0] sm:$0xff]
      %v640 = vld [vmem:[%s4 + $0xf8] sm:$0xff]
      %v641 = vld [vmem:[%s5] sm:$0xf]
      %v643 = vlaneseq
      %v644 = vshrl.u32 %v643, 7
      %v645 = vsub.s32 0, %v644
      %v646 = vrot.slane %v641, %v645
      %v647 = vlaneseq
      %v648 = vshrl.u32 %v647, 7
      %v649 = vsub.s32 1, %v648
      %v650 = vrot.slane %v641, %v649
      %v651 = vlaneseq
      %v652 = vshrl.u32 %v651, 7
      %v653 = vsub.s32 2, %v652
      %v654 = vrot.slane %v641, %v653
      %v655 = vlaneseq
      %v656 = vshrl.u32 %v655, 7
      %v657 = vsub.s32 3, %v656
      %v658 = vrot.slane %v641, %v657
      %v695 = vunpack.c.l.b16 %v609
      %v696 = vunpack.c.h.b16 %v609
      %v697 = vunpack.c.l.b16 %v610
      %v698 = vunpack.c.h.b16 %v610
      %v699 = vunpack.c.l.b16 %v611
      %v700 = vunpack.c.h.b16 %v611
      %v701 = vunpack.c.l.b16 %v612
      %v702 = vunpack.c.h.b16 %v612
      %v703 = vunpack.c.l.b16 %v613
      %v704 = vunpack.c.h.b16 %v613
      %v705 = vunpack.c.l.b16 %v614
      %v706 = vunpack.c.h.b16 %v614
      %v707 = vunpack.c.l.b16 %v615
      %v708 = vunpack.c.h.b16 %v615
      %v709 = vunpack.c.l.b16 %v616
      %v710 = vunpack.c.h.b16 %v616
      %v711 = vunpack.c.l.b16 %v617
      %v712 = vunpack.c.h.b16 %v617
      %v713 = vunpack.c.l.b16 %v618
      %v714 = vunpack.c.h.b16 %v618
      %v715 = vunpack.c.l.b16 %v619
      %v716 = vunpack.c.h.b16 %v619
      %v717 = vunpack.c.l.b16 %v620
      %v718 = vunpack.c.h.b16 %v620
      %v719 = vunpack.c.l.b16 %v621
      %v720 = vunpack.c.h.b16 %v621
      %v721 = vunpack.c.l.b16 %v622
      %v722 = vunpack.c.h.b16 %v622
      %v723 = vunpack.c.l.b16 %v623
      %v724 = vunpack.c.h.b16 %v623
      %v725 = vunpack.c.l.b16 %v624
      %v726 = vunpack.c.h.b16 %v624
      %v727 = vunpack.c.l.b16 %v625
      %v728 = vunpack.c.h.b16 %v625
      %v729 = vunpack.c.l.b16 %v626
      %v730 = vunpack.c.h.b16 %v626
      %v731 = vunpack.c.l.b16 %v627
      %v732 = vunpack.c.h.b16 %v627
      %v733 = vunpack.c.l.b16 %v628
      %v734 = vunpack.c.h.b16 %v628
      %v735 = vunpack.c.l.b16 %v629
      %v736 = vunpack.c.h.b16 %v629
      %v737 = vunpack.c.l.b16 %v630
      %v738 = vunpack.c.h.b16 %v630
      %v739 = vunpack.c.l.b16 %v631
      %v740 = vunpack.c.h.b16 %v631
      %v741 = vunpack.c.l.b16 %v632
      %v742 = vunpack.c.h.b16 %v632
      %v743 = vunpack.c.l.b16 %v633
      %v744 = vunpack.c.h.b16 %v633
      %v745 = vunpack.c.l.b16 %v634
      %v746 = vunpack.c.h.b16 %v634
      %v747 = vunpack.c.l.b16 %v635
      %v748 = vunpack.c.h.b16 %v635
      %v749 = vunpack.c.l.b16 %v636
      %v750 = vunpack.c.h.b16 %v636
      %v751 = vunpack.c.l.b16 %v637
      %v752 = vunpack.c.h.b16 %v637
      %v753 = vunpack.c.l.b16 %v638
      %v754 = vunpack.c.h.b16 %v638
      %v755 = vunpack.c.l.b16 %v639
      %v756 = vunpack.c.h.b16 %v639
      %v757 = vunpack.c.l.b16 %v640
      %v758 = vunpack.c.h.b16 %v640
      %v759 = vpack.c.b16 %v699, %v695
      %v760 = vpack.c.b16 %v700, %v696
      %v761 = vpack.c.b16 %v701, %v697
      %v762 = vpack.c.b16 %v702, %v698
      %v763 = vpack.c.b16 %v707, %v703
      %v764 = vpack.c.b16 %v708, %v704
      %v765 = vpack.c.b16 %v709, %v705
      %v766 = vpack.c.b16 %v710, %v706
      %v767 = vpack.c.b16 %v715, %v711
      %v768 = vpack.c.b16 %v716, %v712
      %v769 = vpack.c.b16 %v717, %v713
      %v770 = vpack.c.b16 %v718, %v714
      %v771 = vpack.c.b16 %v723, %v719
      %v772 = vpack.c.b16 %v724, %v720
      %v773 = vpack.c.b16 %v725, %v721
      %v774 = vpack.c.b16 %v726, %v722
      %v775 = vpack.c.b16 %v731, %v727
      %v776 = vpack.c.b16 %v732, %v728
      %v777 = vpack.c.b16 %v733, %v729
      %v778 = vpack.c.b16 %v734, %v730
      %v779 = vpack.c.b16 %v739, %v735
      %v780 = vpack.c.b16 %v740, %v736
      %v781 = vpack.c.b16 %v741, %v737
      %v782 = vpack.c.b16 %v742, %v738
      %v783 = vpack.c.b16 %v747, %v743
      %v784 = vpack.c.b16 %v748, %v744
      %v785 = vpack.c.b16 %v749, %v745
      %v786 = vpack.c.b16 %v750, %v746
      %v787 = vpack.c.b16 %v755, %v751
      %v788 = vpack.c.b16 %v756, %v752
      %v789 = vpack.c.b16 %v757, %v753
      %v790 = vpack.c.b16 %v758, %v754
      %823 = vmatprep.subr.bf16.mxu0 %v760
      %824 = vmatpush1.bf16.msra.mxu0 %v759
      %825 = vmatprep.subr.bf16.mxu0 %v764
      %826 = vmatpush1.bf16.msra.mxu0 %v763
      %827 = vmatprep.subr.bf16.mxu0 %v768
      %828 = vmatpush1.bf16.msra.mxu0 %v767
      %829 = vmatprep.subr.bf16.mxu0 %v772
      %830 = vmatpush1.bf16.msra.mxu0 %v771
      %831 = vmatprep.subr.bf16.mxu0 %v776
      %832 = vmatpush1.bf16.msra.mxu0 %v775
      %833 = vmatprep.subr.bf16.mxu0 %v780
      %834 = vmatpush1.bf16.msra.mxu0 %v779
      %835 = vmatprep.subr.bf16.mxu0 %v784
      %836 = vmatpush1.bf16.msra.mxu0 %v783
      %837 = vmatprep.subr.bf16.mxu0 %v788
      %838 = vmatpush1.bf16.msra.mxu0 %v787
      %839 = vmatprep.subr.bf16.mxu0 0
      %840 = vmatpush1.bf16.msra.mxu0 0
      %841 = vmatprep.subr.bf16.mxu0 0
      %842 = vmatpush1.bf16.msra.mxu0 0
      %843 = vmatprep.subr.bf16.mxu0 0
      %844 = vmatpush1.bf16.msra.mxu0 0
      %845 = vmatprep.subr.bf16.mxu0 0
      %846 = vmatpush1.bf16.msra.mxu0 0
      %847 = vmatprep.subr.bf16.mxu0 0
      %848 = vmatpush1.bf16.msra.mxu0 0
      %849 = vmatprep.subr.bf16.mxu0 0
      %850 = vmatpush1.bf16.msra.mxu0 0
      %851 = vmatprep.subr.bf16.mxu0 0
      %852 = vmatpush1.bf16.msra.mxu0 0
      %853 = vmatprep.subr.bf16.mxu0 0
      %854 = vmatpush1.bf16.msra.mxu0 0
      %855 = vmatprep.mubr.bf16.mxu0 0
      %856 = vmatmul.mubr.bf16.gmra.mrb[0].mxu0 %v605
      %v857 = vpop.f32.mrb[0].mxu0
      %v858 = vadd.f32 %v646, %v857
      %v859 = vpop.f32.mrb[0].mxu0
      %v860 = vadd.f32 %v650, %v859
      %v861 = vpop.f32.mrb[0].mxu0
      %v862 = vadd.f32 %v646, %v861
      %v863 = vpop.f32.mrb[0].mxu0
      %v864 = vadd.f32 %v650, %v863
      %865 = vmatprep.mubr.bf16.mxu0 0
      %866 = vmatmul.mubr.bf16.gmra.mrb[0].mxu0 %v606
      %v867 = vpop.f32.mrb[0].mxu0
      %v868 = vadd.f32 %v646, %v867
      %v869 = vpop.f32.mrb[0].mxu0
      %v870 = vadd.f32 %v650, %v869
      %v871 = vpop.f32.mrb[0].mxu0
      %v872 = vadd.f32 %v646, %v871
      %v873 = vpop.f32.mrb[0].mxu0
      %v874 = vadd.f32 %v650, %v873
      %875 = vmatprep.mubr.bf16.mxu0 0
      %876 = vmatmul.mubr.bf16.gmra.mrb[0].mxu0 %v607
      %v877 = vpop.f32.mrb[0].mxu0
      %v878 = vadd.f32 %v646, %v877
      %v879 = vpop.f32.mrb[0].mxu0
      %v880 = vadd.f32 %v650, %v879
      %v881 = vpop.f32.mrb[0].mxu0
      %v882 = vadd.f32 %v646, %v881
      %v883 = vpop.f32.mrb[0].mxu0
      %v884 = vadd.f32 %v650, %v883
      %885 = vmatprep.mubr.bf16.mxu0 0
      %886 = vmatmul.mubr.bf16.gmra.mrb[0].mxu0 %v608
      %v887 = vpop.f32.mrb[0].mxu0
      %v888 = vadd.f32 %v646, %v887
      %v889 = vpop.f32.mrb[0].mxu0
      %v890 = vadd.f32 %v650, %v889
      %v891 = vpop.f32.mrb[0].mxu0
      %v892 = vadd.f32 %v646, %v891
      %v893 = vpop.f32.mrb[0].mxu0
      %v894 = vadd.f32 %v650, %v893
      %895 = vdwg.mxu0
      %896 = vmatprep.subr.bf16.mxu0 %v762
      %897 = vmatpush1.bf16.msra.mxu0 %v761
      %898 = vmatprep.subr.bf16.mxu0 %v766
      %899 = vmatpush1.bf16.msra.mxu0 %v765
      %900 = vmatprep.subr.bf16.mxu0 %v770
      %901 = vmatpush1.bf16.msra.mxu0 %v769
      %902 = vmatprep.subr.bf16.mxu0 %v774
      %903 = vmatpush1.bf16.msra.mxu0 %v773
      %904 = vmatprep.subr.bf16.mxu0 %v778
      %905 = vmatpush1.bf16.msra.mxu0 %v777
      %906 = vmatprep.subr.bf16.mxu0 %v782
      %907 = vmatpush1.bf16.msra.mxu0 %v781
      %908 = vmatprep.subr.bf16.mxu0 %v786
      %909 = vmatpush1.bf16.msra.mxu0 %v785
      %910 = vmatprep.subr.bf16.mxu0 %v790
      %911 = vmatpush1.bf16.msra.mxu0 %v789
      %912 = vmatprep.subr.bf16.mxu0 0
      %913 = vmatpush1.bf16.msra.mxu0 0
      %914 = vmatprep.subr.bf16.mxu0 0
      %915 = vmatpush1.bf16.msra.mxu0 0
      %916 = vmatprep.subr.bf16.mxu0 0
      %917 = vmatpush1.bf16.msra.mxu0 0
      %918 = vmatprep.subr.bf16.mxu0 0
      %919 = vmatpush1.bf16.msra.mxu0 0
      %920 = vmatprep.subr.bf16.mxu0 0
      %921 = vmatpush1.bf16.msra.mxu0 0
      %922 = vmatprep.subr.bf16.mxu0 0
      %923 = vmatpush1.bf16.msra.mxu0 0
      %924 = vmatprep.subr.bf16.mxu0 0
      %925 = vmatpush1.bf16.msra.mxu0 0
      %926 = vmatprep.subr.bf16.mxu0 0
      %927 = vmatpush1.bf16.msra.mxu0 0
      %928 = vmatprep.mubr.bf16.mxu0 0
      %929 = vmatmul.mubr.bf16.gmra.mrb[0].mxu0 %v605
      %v930 = vpop.f32.mrb[0].mxu0
      %v931 = vadd.f32 %v654, %v930
      %v932 = vpop.f32.mrb[0].mxu0
      %v933 = vadd.f32 %v658, %v932
      %v934 = vpop.f32.mrb[0].mxu0
      %v935 = vadd.f32 %v654, %v934
      %v936 = vpop.f32.mrb[0].mxu0
      %v937 = vadd.f32 %v658, %v936
      %938 = vmatprep.mubr.bf16.mxu0 0
      %939 = vmatmul.mubr.bf16.gmra.mrb[0].mxu0 %v606
      %v940 = vpop.f32.mrb[0].mxu0
      %v941 = vadd.f32 %v654, %v940
      %v942 = vpop.f32.mrb[0].mxu0
      %v943 = vadd.f32 %v658, %v942
      %v944 = vpop.f32.mrb[0].mxu0
      %v945 = vadd.f32 %v654, %v944
      %v946 = vpop.f32.mrb[0].mxu0
      %v947 = vadd.f32 %v658, %v946
      %948 = vmatprep.mubr.bf16.mxu0 0
      %949 = vmatmul.mubr.bf16.gmra.mrb[0].mxu0 %v607
      %v950 = vpop.f32.mrb[0].mxu0
      %v951 = vadd.f32 %v654, %v950
      %v952 = vpop.f32.mrb[0].mxu0
      %v953 = vadd.f32 %v658, %v952
      %v954 = vpop.f32.mrb[0].mxu0
      %v955 = vadd.f32 %v654, %v954
      %v956 = vpop.f32.mrb[0].mxu0
      %v957 = vadd.f32 %v658, %v956
      %958 = vmatprep.mubr.bf16.mxu0 0
      %959 = vmatmul.mubr.bf16.gmra.mrb[0].mxu0 %v608
      %v960 = vpop.f32.mrb[0].mxu0
      %v961 = vadd.f32 %v654, %v960
      %v962 = vpop.f32.mrb[0].mxu0
      %v963 = vadd.f32 %v658, %v962
      %v964 = vpop.f32.mrb[0].mxu0
      %v965 = vadd.f32 %v654, %v964
      %v966 = vpop.f32.mrb[0].mxu0
      %v967 = vadd.f32 %v658, %v966
      %968 = vdwg.mxu0
      %v969 = vmul.f32 %v858, 0.5
      %v970 = vmul.f32 %v860, 0.5
      %v971 = vmul.f32 %v931, 0.5
      %v972 = vmul.f32 %v933, 0.5
      %v973 = vmul.f32 %v862, 0.5
      %v974 = vmul.f32 %v864, 0.5
      %v975 = vmul.f32 %v935, 0.5
      %v976 = vmul.f32 %v937, 0.5
      %v977 = vmul.f32 %v868, 0.5
      %v978 = vmul.f32 %v870, 0.5
      %v979 = vmul.f32 %v941, 0.5
      %v980 = vmul.f32 %v943, 0.5
      %v981 = vmul.f32 %v872, 0.5
      %v982 = vmul.f32 %v874, 0.5
      %v983 = vmul.f32 %v945, 0.5
      %v984 = vmul.f32 %v947, 0.5
      %v985 = vmul.f32 %v878, 0.5
      %v986 = vmul.f32 %v880, 0.5
      %v987 = vmul.f32 %v951, 0.5
      %v988 = vmul.f32 %v953, 0.5
      %v989 = vmul.f32 %v882, 0.5
      %v990 = vmul.f32 %v884, 0.5
      %v991 = vmul.f32 %v955, 0.5
      %v992 = vmul.f32 %v957, 0.5
      %v993 = vmul.f32 %v888, 0.5
      %v994 = vmul.f32 %v890, 0.5
      %v995 = vmul.f32 %v961, 0.5
      %v996 = vmul.f32 %v963, 0.5
      %v997 = vmul.f32 %v892, 0.5
      %v998 = vmul.f32 %v894, 0.5
      %v999 = vmul.f32 %v965, 0.5
      %v1000 = vmul.f32 %v967, 0.5
      %v1001 = vmul.f32 %v858, 0.70710677
      %v1002 = vmul.f32 %v860, 0.70710677
      %v1003 = vmul.f32 %v931, 0.70710677
      %v1004 = vmul.f32 %v933, 0.70710677
      %v1005 = vmul.f32 %v862, 0.70710677
      %v1006 = vmul.f32 %v864, 0.70710677
      %v1007 = vmul.f32 %v935, 0.70710677
      %v1008 = vmul.f32 %v937, 0.70710677
      %v1009 = vmul.f32 %v868, 0.70710677
      %v1010 = vmul.f32 %v870, 0.70710677
      %v1011 = vmul.f32 %v941, 0.70710677
      %v1012 = vmul.f32 %v943, 0.70710677
      %v1013 = vmul.f32 %v872, 0.70710677
      %v1014 = vmul.f32 %v874, 0.70710677
      %v1015 = vmul.f32 %v945, 0.70710677
      %v1016 = vmul.f32 %v947, 0.70710677
      %v1017 = vmul.f32 %v878, 0.70710677
      %v1018 = vmul.f32 %v880, 0.70710677
      %v1019 = vmul.f32 %v951, 0.70710677
      %v1020 = vmul.f32 %v953, 0.70710677
      %v1021 = vmul.f32 %v882, 0.70710677
      %v1022 = vmul.f32 %v884, 0.70710677
      %v1023 = vmul.f32 %v955, 0.70710677
      %v1024 = vmul.f32 %v957, 0.70710677
      %v1025 = vmul.f32 %v888, 0.70710677
      %v1026 = vmul.f32 %v890, 0.70710677
      %v1027 = vmul.f32 %v961, 0.70710677
      %v1028 = vmul.f32 %v963, 0.70710677
      %v1029 = vmul.f32 %v892, 0.70710677
      %v1030 = vmul.f32 %v894, 0.70710677
      %v1031 = vmul.f32 %v965, 0.70710677
      %v1032 = vmul.f32 %v967, 0.70710677
      %v1033 = verf.f32.pop %v1001
      %v1034 = verf.f32.pop %v1002
      %v1035 = verf.f32.pop %v1003
      %v1036 = verf.f32.pop %v1004
      %v1037 = verf.f32.pop %v1005
      %v1038 = verf.f32.pop %v1006
      %v1039 = verf.f32.pop %v1007
      %v1040 = verf.f32.pop %v1008
      %v1041 = verf.f32.pop %v1009
      %v1042 = verf.f32.pop %v1010
      %v1043 = verf.f32.pop %v1011
      %v1044 = verf.f32.pop %v1012
      %v1045 = verf.f32.pop %v1013
      %v1046 = verf.f32.pop %v1014
      %v1047 = verf.f32.pop %v1015
      %v1048 = verf.f32.pop %v1016
      %v1049 = verf.f32.pop %v1017
      %v1050 = verf.f32.pop %v1018
      %v1051 = verf.f32.pop %v1019
      %v1052 = verf.f32.pop %v1020
      %v1053 = verf.f32.pop %v1021
      %v1054 = verf.f32.pop %v1022
      %v1055 = verf.f32.pop %v1023
      %v1056 = verf.f32.pop %v1024
      %v1057 = verf.f32.pop %v1025
      %v1058 = verf.f32.pop %v1026
      %v1059 = verf.f32.pop %v1027
      %v1060 = verf.f32.pop %v1028
      %v1061 = verf.f32.pop %v1029
      %v1062 = verf.f32.pop %v1030
      %v1063 = verf.f32.pop %v1031
      %v1064 = verf.f32.pop %v1032
      %v1065 = vadd.f32 %v1033, 1.0
      %v1066 = vadd.f32 %v1034, 1.0
      %v1067 = vadd.f32 %v1035, 1.0
      %v1068 = vadd.f32 %v1036, 1.0
      %v1069 = vadd.f32 %v1037, 1.0
      %v1070 = vadd.f32 %v1038, 1.0
      %v1071 = vadd.f32 %v1039, 1.0
      %v1072 = vadd.f32 %v1040, 1.0
      %v1073 = vadd.f32 %v1041, 1.0
      %v1074 = vadd.f32 %v1042, 1.0
      %v1075 = vadd.f32 %v1043, 1.0
      %v1076 = vadd.f32 %v1044, 1.0
      %v1077 = vadd.f32 %v1045, 1.0
      %v1078 = vadd.f32 %v1046, 1.0
      %v1079 = vadd.f32 %v1047, 1.0
      %v1080 = vadd.f32 %v1048, 1.0
      %v1081 = vadd.f32 %v1049, 1.0
      %v1082 = vadd.f32 %v1050, 1.0
      %v1083 = vadd.f32 %v1051, 1.0
      %v1084 = vadd.f32 %v1052, 1.0
      %v1085 = vadd.f32 %v1053, 1.0
      %v1086 = vadd.f32 %v1054, 1.0
      %v1087 = vadd.f32 %v1055, 1.0
      %v1088 = vadd.f32 %v1056, 1.0
      %v1089 = vadd.f32 %v1057, 1.0
      %v1090 = vadd.f32 %v1058, 1.0
      %v1091 = vadd.f32 %v1059, 1.0
      %v1092 = vadd.f32 %v1060, 1.0
      %v1093 = vadd.f32 %v1061, 1.0
      %v1094 = vadd.f32 %v1062, 1.0
      %v1095 = vadd.f32 %v1063, 1.0
      %v1096 = vadd.f32 %v1064, 1.0
      %v1097 = vmul.f32 %v969, %v1065
      %v1098 = vmul.f32 %v970, %v1066
      %v1099 = vmul.f32 %v971, %v1067
      %v1100 = vmul.f32 %v972, %v1068
      %v1101 = vmul.f32 %v973, %v1069
      %v1102 = vmul.f32 %v974, %v1070
      %v1103 = vmul.f32 %v975, %v1071
      %v1104 = vmul.f32 %v976, %v1072
      %v1105 = vmul.f32 %v977, %v1073
      %v1106 = vmul.f32 %v978, %v1074
      %v1107 = vmul.f32 %v979, %v1075
      %v1108 = vmul.f32 %v980, %v1076
      %v1109 = vmul.f32 %v981, %v1077
      %v1110 = vmul.f32 %v982, %v1078
      %v1111 = vmul.f32 %v983, %v1079
      %v1112 = vmul.f32 %v984, %v1080
      %v1113 = vmul.f32 %v985, %v1081
      %v1114 = vmul.f32 %v986, %v1082
      %v1115 = vmul.f32 %v987, %v1083
      %v1116 = vmul.f32 %v988, %v1084
      %v1117 = vmul.f32 %v989, %v1085
      %v1118 = vmul.f32 %v990, %v1086
      %v1119 = vmul.f32 %v991, %v1087
      %v1120 = vmul.f32 %v992, %v1088
      %v1121 = vmul.f32 %v993, %v1089
      %v1122 = vmul.f32 %v994, %v1090
      %v1123 = vmul.f32 %v995, %v1091
      %v1124 = vmul.f32 %v996, %v1092
      %v1125 = vmul.f32 %v997, %v1093
      %v1126 = vmul.f32 %v998, %v1094
      %v1127 = vmul.f32 %v999, %v1095
      %v1128 = vmul.f32 %v1000, %v1096
      %v1129 = vpack.c.bf16 %v1101, %v1097
      %v1130 = vpack.c.bf16 %v1102, %v1098
      %v1131 = vpack.c.bf16 %v1103, %v1099
      %v1132 = vpack.c.bf16 %v1104, %v1100
      %v1133 = vpack.c.bf16 %v1109, %v1105
      %v1134 = vpack.c.bf16 %v1110, %v1106
      %v1135 = vpack.c.bf16 %v1111, %v1107
      %v1136 = vpack.c.bf16 %v1112, %v1108
      %v1137 = vpack.c.bf16 %v1117, %v1113
      %v1138 = vpack.c.bf16 %v1118, %v1114
      %v1139 = vpack.c.bf16 %v1119, %v1115
      %v1140 = vpack.c.bf16 %v1120, %v1116
      %v1141 = vpack.c.bf16 %v1125, %v1121
      %v1142 = vpack.c.bf16 %v1126, %v1122
      %v1143 = vpack.c.bf16 %v1127, %v1123
      %v1144 = vpack.c.bf16 %v1128, %v1124
      %v1145 = vld [vmem:[%s6] sm:$0xf]
      %v1146 = vld [vmem:[%s6 + $0x4] sm:$0xf]
      %v1147 = vld [vmem:[%s6 + $0x8] sm:$0xf]
      %v1148 = vld [vmem:[%s6 + $0xc] sm:$0xf]
      %v1149 = vld [vmem:[%s6 + $0x10] sm:$0xf]
      %v1150 = vld [vmem:[%s6 + $0x14] sm:$0xf]
      %v1151 = vld [vmem:[%s6 + $0x18] sm:$0xf]
      %v1152 = vld [vmem:[%s6 + $0x1c] sm:$0xf]
      %v1153 = vld [vmem:[%s6 + $0x20] sm:$0xf]
      %v1154 = vld [vmem:[%s6 + $0x24] sm:$0xf]
      %v1155 = vld [vmem:[%s6 + $0x28] sm:$0xf]
      %v1156 = vld [vmem:[%s6 + $0x2c] sm:$0xf]
      %v1157 = vld [vmem:[%s6 + $0x30] sm:$0xf]
      %v1158 = vld [vmem:[%s6 + $0x34] sm:$0xf]
      %v1159 = vld [vmem:[%s6 + $0x38] sm:$0xf]
      %v1160 = vld [vmem:[%s6 + $0x3c] sm:$0xf]
      %v1161 = vld [vmem:[%s6 + $0x40] sm:$0xf]
      %v1162 = vld [vmem:[%s6 + $0x44] sm:$0xf]
      %v1163 = vld [vmem:[%s6 + $0x48] sm:$0xf]
      %v1164 = vld [vmem:[%s6 + $0x4c] sm:$0xf]
      %v1165 = vld [vmem:[%s6 + $0x50] sm:$0xf]
      %v1166 = vld [vmem:[%s6 + $0x54] sm:$0xf]
      %v1167 = vld [vmem:[%s6 + $0x58] sm:$0xf]
      %v1168 = vld [vmem:[%s6 + $0x5c] sm:$0xf]
      %v1169 = vld [vmem:[%s6 + $0x60] sm:$0xf]
      %v1170 = vld [vmem:[%s6 + $0x64] sm:$0xf]
      %v1171 = vld [vmem:[%s6 + $0x68] sm:$0xf]
      %v1172 = vld [vmem:[%s6 + $0x6c] sm:$0xf]
      %v1173 = vld [vmem:[%s6 + $0x70] sm:$0xf]
      %v1174 = vld [vmem:[%s6 + $0x74] sm:$0xf]
      %v1175 = vld [vmem:[%s6 + $0x78] sm:$0xf]
      %v1176 = vld [vmem:[%s6 + $0x7c] sm:$0xf]
      %v1177 = vld [vmem:[%s6 + $0x80] sm:$0xf]
      %v1178 = vld [vmem:[%s6 + $0x84] sm:$0xf]
      %v1179 = vld [vmem:[%s6 + $0x88] sm:$0xf]
      %v1180 = vld [vmem:[%s6 + $0x8c] sm:$0xf]
      %v1181 = vld [vmem:[%s6 + $0x90] sm:$0xf]
      %v1182 = vld [vmem:[%s6 + $0x94] sm:$0xf]
      %v1183 = vld [vmem:[%s6 + $0x98] sm:$0xf]
      %v1184 = vld [vmem:[%s6 + $0x9c] sm:$0xf]
      %v1185 = vld [vmem:[%s6 + $0xa0] sm:$0xf]
      %v1186 = vld [vmem:[%s6 + $0xa4] sm:$0xf]
      %v1187 = vld [vmem:[%s6 + $0xa8] sm:$0xf]
      %v1188 = vld [vmem:[%s6 + $0xac] sm:$0xf]
      %v1189 = vld [vmem:[%s6 + $0xb0] sm:$0xf]
      %v1190 = vld [vmem:[%s6 + $0xb4] sm:$0xf]
      %v1191 = vld [vmem:[%s6 + $0xb8] sm:$0xf]
      %v1192 = vld [vmem:[%s6 + $0xbc] sm:$0xf]
      %v1193 = vld [vmem:[%s6 + $0xc0] sm:$0xf]
      %v1194 = vld [vmem:[%s6 + $0xc4] sm:$0xf]
      %v1195 = vld [vmem:[%s6 + $0xc8] sm:$0xf]
      %v1196 = vld [vmem:[%s6 + $0xcc] sm:$0xf]
      %v1197 = vld [vmem:[%s6 + $0xd0] sm:$0xf]
      %v1198 = vld [vmem:[%s6 + $0xd4] sm:$0xf]
      %v1199 = vld [vmem:[%s6 + $0xd8] sm:$0xf]
      %v1200 = vld [vmem:[%s6 + $0xdc] sm:$0xf]
      %v1201 = vld [vmem:[%s6 + $0xe0] sm:$0xf]
      %v1202 = vld [vmem:[%s6 + $0xe4] sm:$0xf]
      %v1203 = vld [vmem:[%s6 + $0xe8] sm:$0xf]
      %v1204 = vld [vmem:[%s6 + $0xec] sm:$0xf]
      %v1205 = vld [vmem:[%s6 + $0xf0] sm:$0xf]
      %v1206 = vld [vmem:[%s6 + $0xf4] sm:$0xf]
      %v1207 = vld [vmem:[%s6 + $0xf8] sm:$0xf]
      %v1208 = vld [vmem:[%s6 + $0xfc] sm:$0xf]
      %v1209 = vld [vmem:[%s7] sm:$0x1]
      %v1211 = vlaneseq
      %v1212 = vshrl.u32 %v1211, 7
      %v1213 = vsub.s32 0, %v1212
      %v1214 = vrot.slane %v1209, %v1213
      %v1280 = vunpack.c.l.b16 %v1145
      %v1281 = vunpack.c.l.b16 %v1146
      %v1282 = vunpack.c.l.b16 %v1147
      %v1283 = vunpack.c.l.b16 %v1148
      %v1284 = vunpack.c.l.b16 %v1149
      %v1285 = vunpack.c.l.b16 %v1150
      %v1286 = vunpack.c.l.b16 %v1151
      %v1287 = vunpack.c.l.b16 %v1152
      %v1288 = vunpack.c.l.b16 %v1153
      %v1289 = vunpack.c.l.b16 %v1154
      %v1290 = vunpack.c.l.b16 %v1155
      %v1291 = vunpack.c.l.b16 %v1156
      %v1292 = vunpack.c.l.b16 %v1157
      %v1293 = vunpack.c.l.b16 %v1158
      %v1294 = vunpack.c.l.b16 %v1159
      %v1295 = vunpack.c.l.b16 %v1160
      %v1296 = vunpack.c.l.b16 %v1161
      %v1297 = vunpack.c.l.b16 %v1162
      %v1298 = vunpack.c.l.b16 %v1163
      %v1299 = vunpack.c.l.b16 %v1164
      %v1300 = vunpack.c.l.b16 %v1165
      %v1301 = vunpack.c.l.b16 %v1166
      %v1302 = vunpack.c.l.b16 %v1167
      %v1303 = vunpack.c.l.b16 %v1168
      %v1304 = vunpack.c.l.b16 %v1169
      %v1305 = vunpack.c.l.b16 %v1170
      %v1306 = vunpack.c.l.b16 %v1171
      %v1307 = vunpack.c.l.b16 %v1172
      %v1308 = vunpack.c.l.b16 %v1173
      %v1309 = vunpack.c.l.b16 %v1174
      %v1310 = vunpack.c.l.b16 %v1175
      %v1311 = vunpack.c.l.b16 %v1176
      %v1312 = vunpack.c.l.b16 %v1177
      %v1313 = vunpack.c.l.b16 %v1178
      %v1314 = vunpack.c.l.b16 %v1179
      %v1315 = vunpack.c.l.b16 %v1180
      %v1316 = vunpack.c.l.b16 %v1181
      %v1317 = vunpack.c.l.b16 %v1182
      %v1318 = vunpack.c.l.b16 %v1183
      %v1319 = vunpack.c.l.b16 %v1184
      %v1320 = vunpack.c.l.b16 %v1185
      %v1321 = vunpack.c.l.b16 %v1186
      %v1322 = vunpack.c.l.b16 %v1187
      %v1323 = vunpack.c.l.b16 %v1188
      %v1324 = vunpack.c.l.b16 %v1189
      %v1325 = vunpack.c.l.b16 %v1190
      %v1326 = vunpack.c.l.b16 %v1191
      %v1327 = vunpack.c.l.b16 %v1192
      %v1328 = vunpack.c.l.b16 %v1193
      %v1329 = vunpack.c.l.b16 %v1194
      %v1330 = vunpack.c.l.b16 %v1195
      %v1331 = vunpack.c.l.b16 %v1196
      %v1332 = vunpack.c.l.b16 %v1197
      %v1333 = vunpack.c.l.b16 %v1198
      %v1334 = vunpack.c.l.b16 %v1199
      %v1335 = vunpack.c.l.b16 %v1200
      %v1336 = vunpack.c.l.b16 %v1201
      %v1337 = vunpack.c.l.b16 %v1202
      %v1338 = vunpack.c.l.b16 %v1203
      %v1339 = vunpack.c.l.b16 %v1204
      %v1340 = vunpack.c.l.b16 %v1205
      %v1341 = vunpack.c.l.b16 %v1206
      %v1342 = vunpack.c.l.b16 %v1207
      %v1343 = vunpack.c.l.b16 %v1208
      %v1344 = vpack.c.b16 %v1281, %v1280
      %v1345 = vpack.c.b16 %v1283, %v1282
      %v1346 = vpack.c.b16 %v1285, %v1284
      %v1347 = vpack.c.b16 %v1287, %v1286
      %v1348 = vpack.c.b16 %v1289, %v1288
      %v1349 = vpack.c.b16 %v1291, %v1290
      %v1350 = vpack.c.b16 %v1293, %v1292
      %v1351 = vpack.c.b16 %v1295, %v1294
      %v1352 = vpack.c.b16 %v1297, %v1296
      %v1353 = vpack.c.b16 %v1299, %v1298
      %v1354 = vpack.c.b16 %v1301, %v1300
      %v1355 = vpack.c.b16 %v1303, %v1302
      %v1356 = vpack.c.b16 %v1305, %v1304
      %v1357 = vpack.c.b16 %v1307, %v1306
      %v1358 = vpack.c.b16 %v1309, %v1308
      %v1359 = vpack.c.b16 %v1311, %v1310
      %v1360 = vpack.c.b16 %v1313, %v1312
      %v1361 = vpack.c.b16 %v1315, %v1314
      %v1362 = vpack.c.b16 %v1317, %v1316
      %v1363 = vpack.c.b16 %v1319, %v1318
      %v1364 = vpack.c.b16 %v1321, %v1320
      %v1365 = vpack.c.b16 %v1323, %v1322
      %v1366 = vpack.c.b16 %v1325, %v1324
      %v1367 = vpack.c.b16 %v1327, %v1326
      %v1368 = vpack.c.b16 %v1329, %v1328
      %v1369 = vpack.c.b16 %v1331, %v1330
      %v1370 = vpack.c.b16 %v1333, %v1332
      %v1371 = vpack.c.b16 %v1335, %v1334
      %v1372 = vpack.c.b16 %v1337, %v1336
      %v1373 = vpack.c.b16 %v1339, %v1338
      %v1374 = vpack.c.b16 %v1341, %v1340
      %v1375 = vpack.c.b16 %v1343, %v1342
      %1408 = vmatprep.subr.bf16.mxu0 0
      %1409 = vmatpush1.bf16.msra.mxu0 %v1344
      %1410 = vmatprep.subr.bf16.mxu0 0
      %1411 = vmatpush1.bf16.msra.mxu0 %v1345
      %1412 = vmatprep.subr.bf16.mxu0 0
      %1413 = vmatpush1.bf16.msra.mxu0 %v1346
      %1414 = vmatprep.subr.bf16.mxu0 0
      %1415 = vmatpush1.bf16.msra.mxu0 %v1347
      %1416 = vmatprep.subr.bf16.mxu0 0
      %1417 = vmatpush1.bf16.msra.mxu0 %v1348
      %1418 = vmatprep.subr.bf16.mxu0 0
      %1419 = vmatpush1.bf16.msra.mxu0 %v1349
      %1420 = vmatprep.subr.bf16.mxu0 0
      %1421 = vmatpush1.bf16.msra.mxu0 %v1350
      %1422 = vmatprep.subr.bf16.mxu0 0
      %1423 = vmatpush1.bf16.msra.mxu0 %v1351
      %1424 = vmatprep.subr.bf16.mxu0 0
      %1425 = vmatpush1.bf16.msra.mxu0 %v1352
      %1426 = vmatprep.subr.bf16.mxu0 0
      %1427 = vmatpush1.bf16.msra.mxu0 %v1353
      %1428 = vmatprep.subr.bf16.mxu0 0
      %1429 = vmatpush1.bf16.msra.mxu0 %v1354
      %1430 = vmatprep.subr.bf16.mxu0 0
      %1431 = vmatpush1.bf16.msra.mxu0 %v1355
      %1432 = vmatprep.subr.bf16.mxu0 0
      %1433 = vmatpush1.bf16.msra.mxu0 %v1356
      %1434 = vmatprep.subr.bf16.mxu0 0
      %1435 = vmatpush1.bf16.msra.mxu0 %v1357
      %1436 = vmatprep.subr.bf16.mxu0 0
      %1437 = vmatpush1.bf16.msra.mxu0 %v1358
      %1438 = vmatprep.subr.bf16.mxu0 0
      %1439 = vmatpush1.bf16.msra.mxu0 %v1359
      %1440 = vmatprep.mubr.bf16.mxu0 %v1130
      %1441 = vmatmul.mubr.bf16.gmra.mrb[0].mxu0 %v1129
      %v1442 = vpop.f32.mrb[0].mxu0
      %v1443 = vadd.f32 %v1214, %v1442
      %v1444 = vpop.f32.mrb[0].mxu0
      %v1445 = vpop.f32.mrb[0].mxu0
      %v1446 = vadd.f32 %v1214, %v1445
      %v1447 = vpop.f32.mrb[0].mxu0
      %1448 = vmatprep.mubr.bf16.mxu0 %v1134
      %1449 = vmatmul.mubr.bf16.gmra.mrb[0].mxu0 %v1133
      %v1450 = vpop.f32.mrb[0].mxu0
      %v1451 = vadd.f32 %v1214, %v1450
      %v1452 = vpop.f32.mrb[0].mxu0
      %v1453 = vpop.f32.mrb[0].mxu0
      %v1454 = vadd.f32 %v1214, %v1453
      %v1455 = vpop.f32.mrb[0].mxu0
      %1456 = vmatprep.mubr.bf16.mxu0 %v1138
      %1457 = vmatmul.mubr.bf16.gmra.mrb[0].mxu0 %v1137
      %v1458 = vpop.f32.mrb[0].mxu0
      %v1459 = vadd.f32 %v1214, %v1458
      %v1460 = vpop.f32.mrb[0].mxu0
      %v1461 = vpop.f32.mrb[0].mxu0
      %v1462 = vadd.f32 %v1214, %v1461
      %v1463 = vpop.f32.mrb[0].mxu0
      %1464 = vmatprep.mubr.bf16.mxu0 %v1142
      %1465 = vmatmul.mubr.bf16.gmra.mrb[0].mxu0 %v1141
      %v1466 = vpop.f32.mrb[0].mxu0
      %v1467 = vadd.f32 %v1214, %v1466
      %v1468 = vpop.f32.mrb[0].mxu0
      %v1469 = vpop.f32.mrb[0].mxu0
      %v1470 = vadd.f32 %v1214, %v1469
      %v1471 = vpop.f32.mrb[0].mxu0
      %1472 = vdwg.mxu0
      %1473 = vmatprep.subr.bf16.mxu0 0
      %1474 = vmatpush1.bf16.msra.mxu0 %v1360
      %1475 = vmatprep.subr.bf16.mxu0 0
      %1476 = vmatpush1.bf16.msra.mxu0 %v1361
      %1477 = vmatprep.subr.bf16.mxu0 0
      %1478 = vmatpush1.bf16.msra.mxu0 %v1362
      %1479 = vmatprep.subr.bf16.mxu0 0
      %1480 = vmatpush1.bf16.msra.mxu0 %v1363
      %1481 = vmatprep.subr.bf16.mxu0 0
      %1482 = vmatpush1.bf16.msra.mxu0 %v1364
      %1483 = vmatprep.subr.bf16.mxu0 0
      %1484 = vmatpush1.bf16.msra.mxu0 %v1365
      %1485 = vmatprep.subr.bf16.mxu0 0
      %1486 = vmatpush1.bf16.msra.mxu0 %v1366
      %1487 = vmatprep.subr.bf16.mxu0 0
      %1488 = vmatpush1.bf16.msra.mxu0 %v1367
      %1489 = vmatprep.subr.bf16.mxu0 0
      %1490 = vmatpush1.bf16.msra.mxu0 %v1368
      %1491 = vmatprep.subr.bf16.mxu0 0
      %1492 = vmatpush1.bf16.msra.mxu0 %v1369
      %1493 = vmatprep.subr.bf16.mxu0 0
      %1494 = vmatpush1.bf16.msra.mxu0 %v1370
      %1495 = vmatprep.subr.bf16.mxu0 0
      %1496 = vmatpush1.bf16.msra.mxu0 %v1371
      %1497 = vmatprep.subr.bf16.mxu0 0
      %1498 = vmatpush1.bf16.msra.mxu0 %v1372
      %1499 = vmatprep.subr.bf16.mxu0 0
      %1500 = vmatpush1.bf16.msra.mxu0 %v1373
      %1501 = vmatprep.subr.bf16.mxu0 0
      %1502 = vmatpush1.bf16.msra.mxu0 %v1374
      %1503 = vmatprep.subr.bf16.mxu0 0
      %1504 = vmatpush1.bf16.msra.mxu0 %v1375
      %1505 = vmatprep.mubr.bf16.mxu0 %v1132
      %1506 = vmatmul.mubr.bf16.gmra.mrb[0].mxu0 %v1131
      %v1507 = vpop.f32.mrb[0].mxu0
      %v1508 = vadd.f32 %v1443, %v1507
      %v1509 = vpop.f32.mrb[0].mxu0
      %v1510 = vpop.f32.mrb[0].mxu0
      %v1511 = vadd.f32 %v1446, %v1510
      %v1512 = vpop.f32.mrb[0].mxu0
      %1513 = vmatprep.mubr.bf16.mxu0 %v1136
      %1514 = vmatmul.mubr.bf16.gmra.mrb[0].mxu0 %v1135
      %v1515 = vpop.f32.mrb[0].mxu0
      %v1516 = vadd.f32 %v1451, %v1515
      %v1517 = vpop.f32.mrb[0].mxu0
      %v1518 = vpop.f32.mrb[0].mxu0
      %v1519 = vadd.f32 %v1454, %v1518
      %v1520 = vpop.f32.mrb[0].mxu0
      %1521 = vmatprep.mubr.bf16.mxu0 %v1140
      %1522 = vmatmul.mubr.bf16.gmra.mrb[0].mxu0 %v1139
      %v1523 = vpop.f32.mrb[0].mxu0
      %v1524 = vadd.f32 %v1459, %v1523
      %v1525 = vpop.f32.mrb[0].mxu0
      %v1526 = vpop.f32.mrb[0].mxu0
      %v1527 = vadd.f32 %v1462, %v1526
      %v1528 = vpop.f32.mrb[0].mxu0
      %1529 = vmatprep.mubr.bf16.mxu0 %v1144
      %1530 = vmatmul.mubr.bf16.gmra.mrb[0].mxu0 %v1143
      %v1531 = vpop.f32.mrb[0].mxu0
      %v1532 = vadd.f32 %v1467, %v1531
      %v1533 = vpop.f32.mrb[0].mxu0
      %v1534 = vpop.f32.mrb[0].mxu0
      %v1535 = vadd.f32 %v1470, %v1534
      %v1536 = vpop.f32.mrb[0].mxu0
      %1537 = vdwg.mxu0
      %v1538 = vadd.f32 %v508, %v1508
      %v1539 = vadd.f32 %v509, %v1511
      %v1540 = vadd.f32 %v510, %v1516
      %v1541 = vadd.f32 %v511, %v1519
      %v1542 = vadd.f32 %v512, %v1524
      %v1543 = vadd.f32 %v513, %v1527
      %v1544 = vadd.f32 %v514, %v1532
      %v1545 = vadd.f32 %v515, %v1535
      %1546 = vst [vmem:[%s329] sm:$0xff] %v1538
      %1547 = vst [vmem:[%s329 + $0x8] sm:$0xff] %v1539
      %1548 = vst [vmem:[%s329 + $0x10] sm:$0xff] %v1540
      %1549 = vst [vmem:[%s329 + $0x18] sm:$0xff] %v1541
      %1550 = vst [vmem:[%s329 + $0x20] sm:$0xff] %v1542
      %1551 = vst [vmem:[%s329 + $0x28] sm:$0xff] %v1543
      %1552 = vst [vmem:[%s329 + $0x30] sm:$0xff] %v1544
      %1553 = vst [vmem:[%s329 + $0x38] sm:$0xff] %v1545
      %s1554 = smul.u32 8, %s19
      %p1555 = scmp.lt.s32.totalorder %s1554, 15
      %s1556 = scalar_select %p1555, %s1554, 15
      %s1557 = smul.addr %s1556, 8
      %s1558 = scalar_lea.vmem %s8, %s1557
      // Predicated region
      $region53: #{_lambda_.8} parent=51 // pred_check
        %p1559 = pneg %p215
      $region54: #{_lambda_.8} parent=51 // pred_check_branch
        %1561 = sbr.rel (%p1559) target = $region56
      $region55: #{_lambda_.8} parent=51 // pred_region
        %s1562 = smul.u32 8, %s19
      $region56: #{_lambda_.8} parent=51 // pred_fallthru
        _
    $region52: #{_lambda_.8} parent=5 // pred_fallthru
      _
    %p1563 = scmp.le.s32.totalorder 2, %s14
    // Predicated region
    $region57: #{_lambda_.8} parent=5 // pred_check
      %p1564 = pneg %p1563
    $region58: #{_lambda_.8} parent=5 // pred_check_branch
      %1566 = sbr.rel (%p1564) target = $region60
    $region59: #{_lambda_.8} parent=5 // pred_region
      %s1567 = ssub.s32 %s14, 2
      // Predicated region
      $region61: #{_lambda_.8} parent=59 // pred_check
        %p1568 = pneg %p221
      $region62: #{_lambda_.8} parent=59 // pred_check_branch
        %1570 = sbr.rel (%p1568) target = $region64
      $region63: #{_lambda_.8} parent=59 // pred_region
        %s1571 = smul.u32 8, %s20
        %p1572 = scmp.lt.s32.totalorder %s1571, 15
        %s1573 = scalar_select %p1572, %s1571, 15
        %s1574 = smul.addr %s1573, 8
        %s1575 = scalar_lea.vmem %s8, %s1574
      $region64: #{_lambda_.8} parent=59 // pred_fallthru
        _
    $region60: #{_lambda_.8} parent=5 // pred_fallthru
      _
  $region6: #{_lambda_.8} parent=0 // loop_footer
    %s18 = sadd.s32 1, %s14
  $region7: #{_lambda_.8} parent=0 // loop_footer_branch
    %13 = sbr.rel target = $region3
  $region8: #{_lambda_.8} parent=0 // loop_exit
    _

// kernel: _lambda_.7
$region0: #{_lambda_.7}
  #allocation0 [shape = 'u32[]', space=smem, size = 0x4, offset = 0x4, fixed_abs, tag = 'smem constant byte address 0x4 - core index']
  #allocation1 [shape = 'u32[144,128]{1,0:T(1,128)}', space=vmem, size = 0x12000, scoped, tag = 'internal scratch']
  %s0 = inlined_call_operand.vmem [shape: bf16[2,4,16,384], index: 0, kind: input, shape index: {}]
  %s1 = inlined_call_operand.vmem [shape: f32[4,4,16,16], index: 1, kind: input, shape index: {}]
  %s2 = inlined_call_operand.vmem [shape: bf16[2,4,16,128], index: 2, kind: output, shape index: {}]
  %s3 = sld [smem:[#allocation0]]
  $region41: #{_lambda_.7} parent=0
    _
  %s5 = ssub.s32 1, %s3
  %s6 = scalar_select 0, %s5, %s3
  loop: start=0, step=1, limit=4
  $region2: #{_lambda_.7} parent=0 // loop_pre_header
    _
  $region3: #{_lambda_.7} parent=0 // loop_header
    %s8 = sphi 0, %s12
    %p9 = scmp.ge.s32.totalorder %s8, 4
    %s18 = sphi 0, %s20
    %s21 = sphi 0, %s18
    %s22 = sphi 0, %s21
    %s38 = sphi 0, %s22
    %s42 = sphi 0, %s42
    %s44 = sphi 0, %s42
    %s45 = sphi 0, %s44
    %s59 = sphi 0, %s45
    %s65 = sphi 0, %s67
    %s68 = sphi 0, %s65
    %s69 = sphi 0, %s68
    %s85 = sphi 0, %s69
  $region4: #{_lambda_.7} parent=0 // loop_header_branch
    %11 = sbr.rel (%p9) target = $region8
  $region5: #{_lambda_.7} parent=0 // loop_body
    %s13 = ssub.s32 %s8, 1
    %s14 = ssub.s32 %s8, 2
    %s15 = sadd.s32 %s8, 1
    %s16 = ssub.s32 %s8, %s15
    %p17 = scmp.eq.s32.totalorder %s16, 0
    %s19 = sadd.s32 %s18, 1
    %s20 = scalar_select %p17, %s18, %s19
    %p23 = pneg %p17
    %p24 = scmp.eq.s32.totalorder %s8, 1
    %p25 = por %p23, %p24
    %p26 = scmp.ne.s32.totalorder %s18, %s21
    %p27 = scmp.eq.s32.totalorder %s8, 0
    %p28 = por %p26, %p27
    %p29 = scmp.ne.s32.totalorder %s18, %s21
    %p30 = scmp.eq.s32.totalorder %s13, 1
    %p31 = por %p29, %p30
    %p32 = scmp.ne.s32.totalorder %s21, %s22
    %p33 = scmp.eq.s32.totalorder %s13, 0
    %p34 = por %p32, %p33
    %p35 = scmp.ne.s32.totalorder %s21, %s22
    %p36 = scmp.eq.s32.totalorder %s14, 1
    %p37 = por %p35, %p36
    %p39 = scmp.ne.s32.totalorder %s22, %s38
    %p40 = scmp.eq.s32.totalorder %s14, 0
    %p41 = por %p39, %p40
    %s43 = sadd.s32 %s42, 1
    %p46 = scmp.eq.s32.totalorder %s8, 1
    %p47 = scmp.ne.s32.totalorder %s42, %s44
    %p48 = scmp.eq.s32.totalorder %s8, 0
    %p49 = por %p47, %p48
    %p50 = scmp.ne.s32.totalorder %s42, %s44
    %p51 = scmp.eq.s32.totalorder %s13, 1
    %p52 = por %p50, %p51
    %p53 = scmp.ne.s32.totalorder %s44, %s45
    %p54 = scmp.eq.s32.totalorder %s13, 0
    %p55 = por %p53, %p54
    %p56 = scmp.ne.s32.totalorder %s44, %s45
    %p57 = scmp.eq.s32.totalorder %s14, 1
    %p58 = por %p56, %p57
    %p60 = scmp.ne.s32.totalorder %s45, %s59
    %p61 = scmp.eq.s32.totalorder %s14, 0
    %p62 = por %p60, %p61
    %s63 = ssub.s32 %s8, %s15
    %p64 = scmp.eq.s32.totalorder %s63, 0
    %s66 = sadd.s32 %s65, 1
    %s67 = scalar_select %p64, %s65, %s66
    %p70 = pneg %p64
    %p71 = scmp.eq.s32.totalorder %s8, 1
    %p72 = por %p70, %p71
    %p73 = scmp.ne.s32.totalorder %s65, %s68
    %p74 = scmp.eq.s32.totalorder %s8, 0
    %p75 = por %p73, %p74
    %p76 = scmp.ne.s32.totalorder %s65, %s68
    %p77 = scmp.eq.s32.totalorder %s13, 1
    %p78 = por %p76, %p77
    %p79 = scmp.ne.s32.totalorder %s68, %s69
    %p80 = scmp.eq.s32.totalorder %s13, 0
    %p81 = por %p79, %p80
    %p82 = scmp.ne.s32.totalorder %s68, %s69
    %p83 = scmp.eq.s32.totalorder %s14, 1
    %p84 = por %p82, %p83
    %p86 = scmp.ne.s32.totalorder %s69, %s85
    %p87 = scmp.eq.s32.totalorder %s14, 0
    %p88 = por %p86, %p87
    %p89 = scmp.le.s32.totalorder 1, %s8
    %p90 = scmp.lt.s32.totalorder %s8, 3
    %p91 = pnand %p89, %p90
    %p92 = pneg %p91
    // Predicated region
    $region9: #{_lambda_.7} parent=5 // pred_check
      _
    $region10: #{_lambda_.7} parent=5 // pred_check_branch
      %94 = sbr.rel (%p91) target = $region12
    $region11: #{_lambda_.7} parent=5 // pred_region
      %s95 = ssub.s32 %s8, 1
      // Predicated region
      $region13: #{_lambda_.7} parent=11 // pred_check
        %p96 = pneg %p55
      $region14: #{_lambda_.7} parent=11 // pred_check_branch
        %98 = sbr.rel (%p96) target = $region16
      $region15: #{_lambda_.7} parent=11 // pred_region
        _
      $region16: #{_lambda_.7} parent=11 // pred_fallthru
        _
    $region12: #{_lambda_.7} parent=5 // pred_fallthru
      _
    %p99 = scmp.lt.s32.totalorder %s8, 2
    // Predicated region
    $region17: #{_lambda_.7} parent=5 // pred_check
      %p100 = pneg %p99
    $region18: #{_lambda_.7} parent=5 // pred_check_branch
      %102 = sbr.rel (%p100) target = $region20
    $region19: #{_lambda_.7} parent=5 // pred_region
      // Predicated region
      $region21: #{_lambda_.7} parent=19 // pred_check
        %p103 = pneg %p28
      $region22: #{_lambda_.7} parent=19 // pred_check_branch
        %105 = sbr.rel (%p103) target = $region24
      $region23: #{_lambda_.7} parent=19 // pred_region
        %p106 = scmp.lt.s32.totalorder %s8, 1
        %s107 = scalar_select %p106, %s8, 1
        %s108 = smul.addr %s107, 24
        %s109 = smul.addr %s108, 4
        %s110 = scalar_lea.vmem %s0, %s109
      $region24: #{_lambda_.7} parent=19 // pred_fallthru
        _
    $region20: #{_lambda_.7} parent=5 // pred_fallthru
      _
    %p111 = scmp.le.s32.totalorder 1, %s8
    %p112 = scmp.lt.s32.totalorder %s8, 3
    %p113 = pnand %p111, %p112
    %p114 = pneg %p113
    // Predicated region
    $region25: #{_lambda_.7} parent=5 // pred_check
      _
    $region26: #{_lambda_.7} parent=5 // pred_check_branch
      %116 = sbr.rel (%p113) target = $region28
    $region27: #{_lambda_.7} parent=5 // pred_region
      %s117 = ssub.s32 %s8, 1
      %p118 = scmp.lt.s32.totalorder %s13, 1
      %s119 = scalar_select %p118, %s13, 1
      %s120 = smul.addr %s119, 24
      %s121 = smul.addr %s120, 4
      %s122 = scalar_lea.vmem %s0, %s121
      %p123 = pneg %p34
      %p124 = pneg %p31
      %p125 = pneg %p55
      %p126 = pneg %p52
      %p127 = pneg %p81
      %p128 = pneg %p78
      %p129 = scmp.lt.s32.totalorder %s13, 1
      %s130 = scalar_select %p129, %s13, 1
      %s131 = smul.addr %s130, 8
      %s132 = smul.addr %s131, 4
      %s133 = scalar_lea.vmem %s2, %s132
      %p134 = scmp.lt.s32.totalorder %s13, 1
      %s135 = scalar_select %p134, %s13, 1
      %s136 = smul.addr %s135, 24
      %s137 = smul.addr %s136, 4
      %s138 = scalar_lea.vmem %s0, %s137
      %p139 = scmp.lt.s32.totalorder %s13, 1
      %s140 = scalar_select %p139, %s13, 1
      %s141 = smul.addr %s140, 8
      %s142 = smul.addr %s141, 4
      %s143 = scalar_lea.vmem %s2, %s142
      %v145 = vld [vmem:[%s138] sm:$0xff]
      %v146 = vld [vmem:[%s138 + $0x8] sm:$0xf]
      %v147 = vld [vmem:[%s138 + $0xc] sm:$0xff]
      %v148 = vld [vmem:[%s138 + $0x14] sm:$0xf]
      %v149 = vld [vmem:[%s138 + $0x18] sm:$0xff]
      %v150 = vld [vmem:[%s138 + $0x20] sm:$0xf]
      %v151 = vld [vmem:[%s138 + $0x24] sm:$0xff]
      %v152 = vld [vmem:[%s138 + $0x2c] sm:$0xf]
      %v153 = vld [vmem:[%s138 + $0x30] sm:$0xff]
      %v154 = vld [vmem:[%s138 + $0x38] sm:$0xf]
      %v155 = vld [vmem:[%s138 + $0x3c] sm:$0xff]
      %v156 = vld [vmem:[%s138 + $0x44] sm:$0xf]
      %v157 = vld [vmem:[%s138 + $0x48] sm:$0xff]
      %v158 = vld [vmem:[%s138 + $0x50] sm:$0xf]
      %v159 = vld [vmem:[%s138 + $0x54] sm:$0xff]
      %v160 = vld [vmem:[%s138 + $0x5c] sm:$0xf]
      %v163 = vrot.slane %v145, 4
      %v164 = vrot.slane %v147, 4
      %v165 = vunpack.c.l.b16 %v145
      %v166 = vunpack.c.l.b16 %v147
      %v167 = vpack.c.b16 %v166, %v165
      %v168 = vunpack.c.l.b16 %v163
      %v169 = vunpack.c.l.b16 %v164
      %v170 = vpack.c.b16 %v169, %v168
      %vm171 = vcmask 261120
      %v173 = vsel %vm171, %v167, 0
      %v176 = vsel %vm171, %v170, 0
      %178 = vmatprep.subr.bf16.mxu0 0
      %179 = vmatpush1.bf16.xpose.msra.mxu0 %v176
      %180 = vmatprep.subr.bf16.mxu0 0
      %181 = vmatpush1.bf16.xpose.msra.mxu0 0
      %182 = vmatprep.subr.bf16.mxu0 0
      %183 = vmatpush1.bf16.xpose.msra.mxu0 0
      %184 = vmatprep.subr.bf16.mxu0 0
      %185 = vmatpush1.bf16.xpose.msra.mxu0 0
      %186 = vmatprep.subr.bf16.mxu0 0
      %187 = vmatpush1.bf16.xpose.msra.mxu0 0
      %188 = vmatprep.subr.bf16.mxu0 0
      %189 = vmatpush1.bf16.xpose.msra.mxu0 0
      %190 = vmatprep.subr.bf16.mxu0 0
      %191 = vmatpush1.bf16.xpose.msra.mxu0 0
      %192 = vmatprep.subr.bf16.mxu0 0
      %193 = vmatpush1.bf16.xpose.msra.mxu0 0
      %194 = vmatprep.subr.bf16.mxu0 0
      %195 = vmatpush1.bf16.xpose.msra.mxu0 0
      %196 = vmatprep.subr.bf16.mxu0 0
      %197 = vmatpush1.bf16.xpose.msra.mxu0 0
      %198 = vmatprep.subr.bf16.mxu0 0
      %199 = vmatpush1.bf16.xpose.msra.mxu0 0
      %200 = vmatprep.subr.bf16.mxu0 0
      %201 = vmatpush1.bf16.xpose.msra.mxu0 0
      %202 = vmatprep.subr.bf16.mxu0 0
      %203 = vmatpush1.bf16.xpose.msra.mxu0 0
      %204 = vmatprep.subr.bf16.mxu0 0
      %205 = vmatpush1.bf16.xpose.msra.mxu0 0
      %206 = vmatprep.subr.bf16.mxu0 0
      %207 = vmatpush1.bf16.xpose.msra.mxu0 0
      %208 = vmatprep.subr.bf16.mxu0 0
      %209 = vmatpush1.bf16.xpose.msra.mxu0 0
      %210 = vmatprep.mubr.bf16.mxu0 0
      %211 = vmatmul.mubr.bf16.gmra.mrb[0].mxu0 %v173
      %v212 = vpop.f32.mrb[0].mxu0
      %v213 = vadd.f32 0.0, %v212
      %v214 = vpop.f32.mrb[0].mxu0
      %v215 = vpop.f32.mrb[0].mxu0
      %v216 = vadd.f32 0.0, %v215
      %v217 = vpop.f32.mrb[0].mxu0
      %218 = vdwg.mxu0
      %v221 = vrot.slane %v149, 4
      %v222 = vrot.slane %v151, 4
      %v223 = vunpack.c.l.b16 %v149
      %v224 = vunpack.c.l.b16 %v151
      %v225 = vpack.c.b16 %v224, %v223
      %v226 = vunpack.c.l.b16 %v221
      %v227 = vunpack.c.l.b16 %v222
      %v228 = vpack.c.b16 %v227, %v226
      %v230 = vsel %vm171, %v225, 0
      %v233 = vsel %vm171, %v228, 0
      %235 = vmatprep.subr.bf16.mxu0 0
      %236 = vmatpush1.bf16.xpose.msra.mxu0 %v233
      %237 = vmatprep.subr.bf16.mxu0 0
      %238 = vmatpush1.bf16.xpose.msra.mxu0 0
      %239 = vmatprep.subr.bf16.mxu0 0
      %240 = vmatpush1.bf16.xpose.msra.mxu0 0
      %241 = vmatprep.subr.bf16.mxu0 0
      %242 = vmatpush1.bf16.xpose.msra.mxu0 0
      %243 = vmatprep.subr.bf16.mxu0 0
      %244 = vmatpush1.bf16.xpose.msra.mxu0 0
      %245 = vmatprep.subr.bf16.mxu0 0
      %246 = vmatpush1.bf16.xpose.msra.mxu0 0
      %247 = vmatprep.subr.bf16.mxu0 0
      %248 = vmatpush1.bf16.xpose.msra.mxu0 0
      %249 = vmatprep.subr.bf16.mxu0 0
      %250 = vmatpush1.bf16.xpose.msra.mxu0 0
      %251 = vmatprep.subr.bf16.mxu0 0
      %252 = vmatpush1.bf16.xpose.msra.mxu0 0
      %253 = vmatprep.subr.bf16.mxu0 0
      %254 = vmatpush1.bf16.xpose.msra.mxu0 0
      %255 = vmatprep.subr.bf16.mxu0 0
      %256 = vmatpush1.bf16.xpose.msra.mxu0 0
      %257 = vmatprep.subr.bf16.mxu0 0
      %258 = vmatpush1.bf16.xpose.msra.mxu0 0
      %259 = vmatprep.subr.bf16.mxu0 0
      %260 = vmatpush1.bf16.xpose.msra.mxu0 0
      %261 = vmatprep.subr.bf16.mxu0 0
      %262 = vmatpush1.bf16.xpose.msra.mxu0 0
      %263 = vmatprep.subr.bf16.mxu0 0
      %264 = vmatpush1.bf16.xpose.msra.mxu0 0
      %265 = vmatprep.subr.bf16.mxu0 0
      %266 = vmatpush1.bf16.xpose.msra.mxu0 0
      %267 = vmatprep.mubr.bf16.mxu0 0
      %268 = vmatmul.mubr.bf16.gmra.mrb[0].mxu0 %v230
      %v269 = vpop.f32.mrb[0].mxu0
      %v270 = vadd.f32 0.0, %v269
      %v271 = vpop.f32.mrb[0].mxu0
      %v272 = vpop.f32.mrb[0].mxu0
      %v273 = vadd.f32 0.0, %v272
      %v274 = vpop.f32.mrb[0].mxu0
      %275 = vdwg.mxu0
      %v278 = vrot.slane %v153, 4
      %v279 = vrot.slane %v155, 4
      %v280 = vunpack.c.l.b16 %v153
      %v281 = vunpack.c.l.b16 %v155
      %v282 = vpack.c.b16 %v281, %v280
      %v283 = vunpack.c.l.b16 %v278
      %v284 = vunpack.c.l.b16 %v279
      %v285 = vpack.c.b16 %v284, %v283
      %v287 = vsel %vm171, %v282, 0
      %v290 = vsel %vm171, %v285, 0
      %292 = vmatprep.subr.bf16.mxu0 0
      %293 = vmatpush1.bf16.xpose.msra.mxu0 %v290
      %294 = vmatprep.subr.bf16.mxu0 0
      %295 = vmatpush1.bf16.xpose.msra.mxu0 0
      %296 = vmatprep.subr.bf16.mxu0 0
      %297 = vmatpush1.bf16.xpose.msra.mxu0 0
      %298 = vmatprep.subr.bf16.mxu0 0
      %299 = vmatpush1.bf16.xpose.msra.mxu0 0
      %300 = vmatprep.subr.bf16.mxu0 0
      %301 = vmatpush1.bf16.xpose.msra.mxu0 0
      %302 = vmatprep.subr.bf16.mxu0 0
      %303 = vmatpush1.bf16.xpose.msra.mxu0 0
      %304 = vmatprep.subr.bf16.mxu0 0
      %305 = vmatpush1.bf16.xpose.msra.mxu0 0
      %306 = vmatprep.subr.bf16.mxu0 0
      %307 = vmatpush1.bf16.xpose.msra.mxu0 0
      %308 = vmatprep.subr.bf16.mxu0 0
      %309 = vmatpush1.bf16.xpose.msra.mxu0 0
      %310 = vmatprep.subr.bf16.mxu0 0
      %311 = vmatpush1.bf16.xpose.msra.mxu0 0
      %312 = vmatprep.subr.bf16.mxu0 0
      %313 = vmatpush1.bf16.xpose.msra.mxu0 0
      %314 = vmatprep.subr.bf16.mxu0 0
      %315 = vmatpush1.bf16.xpose.msra.mxu0 0
      %316 = vmatprep.subr.bf16.mxu0 0
      %317 = vmatpush1.bf16.xpose.msra.mxu0 0
      %318 = vmatprep.subr.bf16.mxu0 0
      %319 = vmatpush1.bf16.xpose.msra.mxu0 0
      %320 = vmatprep.subr.bf16.mxu0 0
      %321 = vmatpush1.bf16.xpose.msra.mxu0 0
      %322 = vmatprep.subr.bf16.mxu0 0
      %323 = vmatpush1.bf16.xpose.msra.mxu0 0
      %324 = vmatprep.mubr.bf16.mxu0 0
      %325 = vmatmul.mubr.bf16.gmra.mrb[0].mxu0 %v287
      %v326 = vpop.f32.mrb[0].mxu0
      %v327 = vadd.f32 0.0, %v326
      %v328 = vpop.f32.mrb[0].mxu0
      %v329 = vpop.f32.mrb[0].mxu0
      %v330 = vadd.f32 0.0, %v329
      %v331 = vpop.f32.mrb[0].mxu0
      %332 = vdwg.mxu0
      %v335 = vrot.slane %v157, 4
      %v336 = vrot.slane %v159, 4
      %v337 = vunpack.c.l.b16 %v157
      %v338 = vunpack.c.l.b16 %v159
      %v339 = vpack.c.b16 %v338, %v337
      %v340 = vunpack.c.l.b16 %v335
      %v341 = vunpack.c.l.b16 %v336
      %v342 = vpack.c.b16 %v341, %v340
      %v344 = vsel %vm171, %v339, 0
      %v347 = vsel %vm171, %v342, 0
      %349 = vmatprep.subr.bf16.mxu0 0
      %350 = vmatpush1.bf16.xpose.msra.mxu0 %v347
      %351 = vmatprep.subr.bf16.mxu0 0
      %352 = vmatpush1.bf16.xpose.msra.mxu0 0
      %353 = vmatprep.subr.bf16.mxu0 0
      %354 = vmatpush1.bf16.xpose.msra.mxu0 0
      %355 = vmatprep.subr.bf16.mxu0 0
      %356 = vmatpush1.bf16.xpose.msra.mxu0 0
      %357 = vmatprep.subr.bf16.mxu0 0
      %358 = vmatpush1.bf16.xpose.msra.mxu0 0
      %359 = vmatprep.subr.bf16.mxu0 0
      %360 = vmatpush1.bf16.xpose.msra.mxu0 0
      %361 = vmatprep.subr.bf16.mxu0 0
      %362 = vmatpush1.bf16.xpose.msra.mxu0 0
      %363 = vmatprep.subr.bf16.mxu0 0
      %364 = vmatpush1.bf16.xpose.msra.mxu0 0
      %365 = vmatprep.subr.bf16.mxu0 0
      %366 = vmatpush1.bf16.xpose.msra.mxu0 0
      %367 = vmatprep.subr.bf16.mxu0 0
      %368 = vmatpush1.bf16.xpose.msra.mxu0 0
      %369 = vmatprep.subr.bf16.mxu0 0
      %370 = vmatpush1.bf16.xpose.msra.mxu0 0
      %371 = vmatprep.subr.bf16.mxu0 0
      %372 = vmatpush1.bf16.xpose.msra.mxu0 0
      %373 = vmatprep.subr.bf16.mxu0 0
      %374 = vmatpush1.bf16.xpose.msra.mxu0 0
      %375 = vmatprep.subr.bf16.mxu0 0
      %376 = vmatpush1.bf16.xpose.msra.mxu0 0
      %377 = vmatprep.subr.bf16.mxu0 0
      %378 = vmatpush1.bf16.xpose.msra.mxu0 0
      %379 = vmatprep.subr.bf16.mxu0 0
      %380 = vmatpush1.bf16.xpose.msra.mxu0 0
      %381 = vmatprep.mubr.bf16.mxu0 0
      %382 = vmatmul.mubr.bf16.gmra.mrb[0].mxu0 %v344
      %v383 = vpop.f32.mrb[0].mxu0
      %v384 = vadd.f32 0.0, %v383
      %v385 = vpop.f32.mrb[0].mxu0
      %v386 = vpop.f32.mrb[0].mxu0
      %v387 = vadd.f32 0.0, %v386
      %v388 = vpop.f32.mrb[0].mxu0
      %389 = vdwg.mxu0
      %v390 = vmul.f32 %v213, 0.17677669
      %v391 = vmul.f32 %v216, 0.17677669
      %v392 = vmul.f32 %v270, 0.17677669
      %v393 = vmul.f32 %v273, 0.17677669
      %v394 = vmul.f32 %v327, 0.17677669
      %v395 = vmul.f32 %v330, 0.17677669
      %v396 = vmul.f32 %v384, 0.17677669
      %v397 = vmul.f32 %v387, 0.17677669
      %v398 = vld [vmem:[%s1] sm:$0xff]
      %v399 = vld [vmem:[%s1 + $0x8] sm:$0xff]
      %v400 = vld [vmem:[%s1 + $0x10] sm:$0xff]
      %v401 = vld [vmem:[%s1 + $0x18] sm:$0xff]
      %v402 = vld [vmem:[%s1 + $0x20] sm:$0xff]
      %v403 = vld [vmem:[%s1 + $0x28] sm:$0xff]
      %v404 = vld [vmem:[%s1 + $0x30] sm:$0xff]
      %v405 = vld [vmem:[%s1 + $0x38] sm:$0xff]
      %v406 = vadd.f32 %v390, %v398
      %v407 = vadd.f32 %v391, %v399
      %v408 = vadd.f32 %v392, %v400
      %v409 = vadd.f32 %v393, %v401
      %v410 = vadd.f32 %v394, %v402
      %v411 = vadd.f32 %v395, %v403
      %v412 = vadd.f32 %v396, %v404
      %v413 = vadd.f32 %v397, %v405
      %vm414 = vcmask 130048
      %v415 = vsel %vm414, %v406, -inf
      %416 = vmax.xlane.f32.xlu0 %v415
      %v417 = vpop.xlane.xlu0 %416
      %v418 = vsel %vm414, %v407, -inf
      %419 = vmax.xlane.f32.xlu0 %v418
      %v420 = vpop.xlane.xlu0 %419
      %v421 = vsel %vm414, %v408, -inf
      %422 = vmax.xlane.f32.xlu0 %v421
      %v423 = vpop.xlane.xlu0 %422
      %v424 = vsel %vm414, %v409, -inf
      %425 = vmax.xlane.f32.xlu0 %v424
      %v426 = vpop.xlane.xlu0 %425
      %v427 = vsel %vm414, %v410, -inf
      %428 = vmax.xlane.f32.xlu0 %v427
      %v429 = vpop.xlane.xlu0 %428
      %v430 = vsel %vm414, %v411, -inf
      %431 = vmax.xlane.f32.xlu0 %v430
      %v432 = vpop.xlane.xlu0 %431
      %v433 = vsel %vm414, %v412, -inf
      %434 = vmax.xlane.f32.xlu0 %v433
      %v435 = vpop.xlane.xlu0 %434
      %v436 = vsel %vm414, %v413, -inf
      %437 = vmax.xlane.f32.xlu0 %v436
      %v438 = vpop.xlane.xlu0 %437
      %v439 = vsub.f32 %v406, %v417
      %v440 = vsub.f32 %v407, %v420
      %v441 = vsub.f32 %v408, %v423
      %v442 = vsub.f32 %v409, %v426
      %v443 = vsub.f32 %v410, %v429
      %v444 = vsub.f32 %v411, %v432
      %v445 = vsub.f32 %v412, %v435
      %v446 = vsub.f32 %v413, %v438
      %v447 = vmul.f32 %v439, 1.442695
      %v448 = vpow.pop %v447
      %v449 = vmul.f32 %v440, 1.442695
      %v450 = vpow.pop %v449
      %v451 = vmul.f32 %v441, 1.442695
      %v452 = vpow.pop %v451
      %v453 = vmul.f32 %v442, 1.442695
      %v454 = vpow.pop %v453
      %v455 = vmul.f32 %v443, 1.442695
      %v456 = vpow.pop %v455
      %v457 = vmul.f32 %v444, 1.442695
      %v458 = vpow.pop %v457
      %v459 = vmul.f32 %v445, 1.442695
      %v460 = vpow.pop %v459
      %v461 = vmul.f32 %v446, 1.442695
      %v462 = vpow.pop %v461
      %v463 = vsel %vm414, %v448, 0.0
      %464 = vadd.xlane.f32.xlu0 %v463
      %v465 = vpop.xlane.xlu0 %464
      %v466 = vsel %vm414, %v450, 0.0
      %467 = vadd.xlane.f32.xlu0 %v466
      %v468 = vpop.xlane.xlu0 %467
      %v469 = vsel %vm414, %v452, 0.0
      %470 = vadd.xlane.f32.xlu0 %v469
      %v471 = vpop.xlane.xlu0 %470
      %v472 = vsel %vm414, %v454, 0.0
      %473 = vadd.xlane.f32.xlu0 %v472
      %v474 = vpop.xlane.xlu0 %473
      %v475 = vsel %vm414, %v456, 0.0
      %476 = vadd.xlane.f32.xlu0 %v475
      %v477 = vpop.xlane.xlu0 %476
      %v478 = vsel %vm414, %v458, 0.0
      %479 = vadd.xlane.f32.xlu0 %v478
      %v480 = vpop.xlane.xlu0 %479
      %v481 = vsel %vm414, %v460, 0.0
      %482 = vadd.xlane.f32.xlu0 %v481
      %v483 = vpop.xlane.xlu0 %482
      %v484 = vsel %vm414, %v462, 0.0
      %485 = vadd.xlane.f32.xlu0 %v484
      %v486 = vpop.xlane.xlu0 %485
      %v487 = vrcp.pop %v465
      %v488 = vmul.f32 %v448, %v487
      %v489 = vrcp.pop %v468
      %v490 = vmul.f32 %v450, %v489
      %v491 = vrcp.pop %v471
      %v492 = vmul.f32 %v452, %v491
      %v493 = vrcp.pop %v474
      %v494 = vmul.f32 %v454, %v493
      %v495 = vrcp.pop %v477
      %v496 = vmul.f32 %v456, %v495
      %v497 = vrcp.pop %v480
      %v498 = vmul.f32 %v458, %v497
      %v499 = vrcp.pop %v483
      %v500 = vmul.f32 %v460, %v499
      %v501 = vrcp.pop %v486
      %v502 = vmul.f32 %v462, %v501
      %v503 = vpack.c.bf16 %v490, %v488
      %v504 = vpack.c.bf16 %v494, %v492
      %v505 = vpack.c.bf16 %v498, %v496
      %v506 = vpack.c.bf16 %v502, %v500
      %v509 = vunpack.c.l.b16 %v146
      %v510 = vunpack.c.l.b16 %v148
      %v511 = vpack.c.b16 %v510, %v509
      %v514 = vsel %vm414, %v503, 0
      %516 = vmatprep.subr.bf16.mxu0 0
      %517 = vmatpush1.bf16.msra.mxu0 %v511
      %518 = vmatprep.subr.bf16.mxu0 0
      %519 = vmatpush1.bf16.msra.mxu0 0
      %520 = vmatprep.subr.bf16.mxu0 0
      %521 = vmatpush1.bf16.msra.mxu0 0
      %522 = vmatprep.subr.bf16.mxu0 0
      %523 = vmatpush1.bf16.msra.mxu0 0
      %524 = vmatprep.subr.bf16.mxu0 0
      %525 = vmatpush1.bf16.msra.mxu0 0
      %526 = vmatprep.subr.bf16.mxu0 0
      %527 = vmatpush1.bf16.msra.mxu0 0
      %528 = vmatprep.subr.bf16.mxu0 0
      %529 = vmatpush1.bf16.msra.mxu0 0
      %530 = vmatprep.subr.bf16.mxu0 0
      %531 = vmatpush1.bf16.msra.mxu0 0
      %532 = vmatprep.subr.bf16.mxu0 0
      %533 = vmatpush1.bf16.msra.mxu0 0
      %534 = vmatprep.subr.bf16.mxu0 0
      %535 = vmatpush1.bf16.msra.mxu0 0
      %536 = vmatprep.subr.bf16.mxu0 0
      %537 = vmatpush1.bf16.msra.mxu0 0
      %538 = vmatprep.subr.bf16.mxu0 0
      %539 = vmatpush1.bf16.msra.mxu0 0
      %540 = vmatprep.subr.bf16.mxu0 0
      %541 = vmatpush1.bf16.msra.mxu0 0
      %542 = vmatprep.subr.bf16.mxu0 0
      %543 = vmatpush1.bf16.msra.mxu0 0
      %544 = vmatprep.subr.bf16.mxu0 0
      %545 = vmatpush1.bf16.msra.mxu0 0
      %546 = vmatprep.subr.bf16.mxu0 0
      %547 = vmatpush1.bf16.msra.mxu0 0
      %548 = vmatprep.mubr.bf16.mxu0 0
      %549 = vmatmul.mubr.bf16.gmra.mrb[0].mxu0 %v514
      %v550 = vpop.f32.mrb[0].mxu0
      %v551 = vadd.f32 0.0, %v550
      %v552 = vpop.f32.mrb[0].mxu0
      %v553 = vpop.f32.mrb[0].mxu0
      %v554 = vadd.f32 0.0, %v553
      %v555 = vpop.f32.mrb[0].mxu0
      %556 = vdwg.mxu0
      %v559 = vunpack.c.l.b16 %v150
      %v560 = vunpack.c.l.b16 %v152
      %v561 = vpack.c.b16 %v560, %v559
      %v564 = vsel %vm414, %v504, 0
      %566 = vmatprep.subr.bf16.mxu0 0
      %567 = vmatpush1.bf16.msra.mxu0 %v561
      %568 = vmatprep.subr.bf16.mxu0 0
      %569 = vmatpush1.bf16.msra.mxu0 0
      %570 = vmatprep.subr.bf16.mxu0 0
      %571 = vmatpush1.bf16.msra.mxu0 0
      %572 = vmatprep.subr.bf16.mxu0 0
      %573 = vmatpush1.bf16.msra.mxu0 0
      %574 = vmatprep.subr.bf16.mxu0 0
      %575 = vmatpush1.bf16.msra.mxu0 0
      %576 = vmatprep.subr.bf16.mxu0 0
      %577 = vmatpush1.bf16.msra.mxu0 0
      %578 = vmatprep.subr.bf16.mxu0 0
      %579 = vmatpush1.bf16.msra.mxu0 0
      %580 = vmatprep.subr.bf16.mxu0 0
      %581 = vmatpush1.bf16.msra.mxu0 0
      %582 = vmatprep.subr.bf16.mxu0 0
      %583 = vmatpush1.bf16.msra.mxu0 0
      %584 = vmatprep.subr.bf16.mxu0 0
      %585 = vmatpush1.bf16.msra.mxu0 0
      %586 = vmatprep.subr.bf16.mxu0 0
      %587 = vmatpush1.bf16.msra.mxu0 0
      %588 = vmatprep.subr.bf16.mxu0 0
      %589 = vmatpush1.bf16.msra.mxu0 0
      %590 = vmatprep.subr.bf16.mxu0 0
      %591 = vmatpush1.bf16.msra.mxu0 0
      %592 = vmatprep.subr.bf16.mxu0 0
      %593 = vmatpush1.bf16.msra.mxu0 0
      %594 = vmatprep.subr.bf16.mxu0 0
      %595 = vmatpush1.bf16.msra.mxu0 0
      %596 = vmatprep.subr.bf16.mxu0 0
      %597 = vmatpush1.bf16.msra.mxu0 0
      %598 = vmatprep.mubr.bf16.mxu0 0
      %599 = vmatmul.mubr.bf16.gmra.mrb[0].mxu0 %v564
      %v600 = vpop.f32.mrb[0].mxu0
      %v601 = vadd.f32 0.0, %v600
      %v602 = vpop.f32.mrb[0].mxu0
      %v603 = vpop.f32.mrb[0].mxu0
      %v604 = vadd.f32 0.0, %v603
      %v605 = vpop.f32.mrb[0].mxu0
      %606 = vdwg.mxu0
      %v609 = vunpack.c.l.b16 %v154
      %v610 = vunpack.c.l.b16 %v156
      %v611 = vpack.c.b16 %v610, %v609
      %v614 = vsel %vm414, %v505, 0
      %616 = vmatprep.subr.bf16.mxu0 0
      %617 = vmatpush1.bf16.msra.mxu0 %v611
      %618 = vmatprep.subr.bf16.mxu0 0
      %619 = vmatpush1.bf16.msra.mxu0 0
      %620 = vmatprep.subr.bf16.mxu0 0
      %621 = vmatpush1.bf16.msra.mxu0 0
      %622 = vmatprep.subr.bf16.mxu0 0
      %623 = vmatpush1.bf16.msra.mxu0 0
      %624 = vmatprep.subr.bf16.mxu0 0
      %625 = vmatpush1.bf16.msra.mxu0 0
      %626 = vmatprep.subr.bf16.mxu0 0
      %627 = vmatpush1.bf16.msra.mxu0 0
      %628 = vmatprep.subr.bf16.mxu0 0
      %629 = vmatpush1.bf16.msra.mxu0 0
      %630 = vmatprep.subr.bf16.mxu0 0
      %631 = vmatpush1.bf16.msra.mxu0 0
      %632 = vmatprep.subr.bf16.mxu0 0
      %633 = vmatpush1.bf16.msra.mxu0 0
      %634 = vmatprep.subr.bf16.mxu0 0
      %635 = vmatpush1.bf16.msra.mxu0 0
      %636 = vmatprep.subr.bf16.mxu0 0
      %637 = vmatpush1.bf16.msra.mxu0 0
      %638 = vmatprep.subr.bf16.mxu0 0
      %639 = vmatpush1.bf16.msra.mxu0 0
      %640 = vmatprep.subr.bf16.mxu0 0
      %641 = vmatpush1.bf16.msra.mxu0 0
      %642 = vmatprep.subr.bf16.mxu0 0
      %643 = vmatpush1.bf16.msra.mxu0 0
      %644 = vmatprep.subr.bf16.mxu0 0
      %645 = vmatpush1.bf16.msra.mxu0 0
      %646 = vmatprep.subr.bf16.mxu0 0
      %647 = vmatpush1.bf16.msra.mxu0 0
      %648 = vmatprep.mubr.bf16.mxu0 0
      %649 = vmatmul.mubr.bf16.gmra.mrb[0].mxu0 %v614
      %v650 = vpop.f32.mrb[0].mxu0
      %v651 = vadd.f32 0.0, %v650
      %v652 = vpop.f32.mrb[0].mxu0
      %v653 = vpop.f32.mrb[0].mxu0
      %v654 = vadd.f32 0.0, %v653
      %v655 = vpop.f32.mrb[0].mxu0
      %656 = vdwg.mxu0
      %v659 = vunpack.c.l.b16 %v158
      %v660 = vunpack.c.l.b16 %v160
      %v661 = vpack.c.b16 %v660, %v659
      %v664 = vsel %vm414, %v506, 0
      %666 = vmatprep.subr.bf16.mxu0 0
      %667 = vmatpush1.bf16.msra.mxu0 %v661
      %668 = vmatprep.subr.bf16.mxu0 0
      %669 = vmatpush1.bf16.msra.mxu0 0
      %670 = vmatprep.subr.bf16.mxu0 0
      %671 = vmatpush1.bf16.msra.mxu0 0
      %672 = vmatprep.subr.bf16.mxu0 0
      %673 = vmatpush1.bf16.msra.mxu0 0
      %674 = vmatprep.subr.bf16.mxu0 0
      %675 = vmatpush1.bf16.msra.mxu0 0
      %676 = vmatprep.subr.bf16.mxu0 0
      %677 = vmatpush1.bf16.msra.mxu0 0
      %678 = vmatprep.subr.bf16.mxu0 0
      %679 = vmatpush1.bf16.msra.mxu0 0
      %680 = vmatprep.subr.bf16.mxu0 0
      %681 = vmatpush1.bf16.msra.mxu0 0
      %682 = vmatprep.subr.bf16.mxu0 0
      %683 = vmatpush1.bf16.msra.mxu0 0
      %684 = vmatprep.subr.bf16.mxu0 0
      %685 = vmatpush1.bf16.msra.mxu0 0
      %686 = vmatprep.subr.bf16.mxu0 0
      %687 = vmatpush1.bf16.msra.mxu0 0
      %688 = vmatprep.subr.bf16.mxu0 0
      %689 = vmatpush1.bf16.msra.mxu0 0
      %690 = vmatprep.subr.bf16.mxu0 0
      %691 = vmatpush1.bf16.msra.mxu0 0
      %692 = vmatprep.subr.bf16.mxu0 0
      %693 = vmatpush1.bf16.msra.mxu0 0
      %694 = vmatprep.subr.bf16.mxu0 0
      %695 = vmatpush1.bf16.msra.mxu0 0
      %696 = vmatprep.subr.bf16.mxu0 0
      %697 = vmatpush1.bf16.msra.mxu0 0
      %698 = vmatprep.mubr.bf16.mxu0 0
      %699 = vmatmul.mubr.bf16.gmra.mrb[0].mxu0 %v664
      %v700 = vpop.f32.mrb[0].mxu0
      %v701 = vadd.f32 0.0, %v700
      %v702 = vpop.f32.mrb[0].mxu0
      %v703 = vpop.f32.mrb[0].mxu0
      %v704 = vadd.f32 0.0, %v703
      %v705 = vpop.f32.mrb[0].mxu0
      %706 = vdwg.mxu0
      %707 = vrot.lane.b32.xlu0 %v145, 96
      %v708 = vpop.permute.xlu0 %707
      %709 = vrot.lane.b32.xlu0 %v147, 96
      %v710 = vpop.permute.xlu0 %709
      %v711 = vrot.slane %v708, 4
      %v712 = vrot.slane %v710, 4
      %713 = vrot.lane.b32.xlu0 %v167, 96
      %v714 = vpop.permute.xlu0 %713
      %v715 = vunpack.c.l.b16 %v711
      %v716 = vunpack.c.l.b16 %v712
      %v717 = vpack.c.b16 %v716, %v715
      %v719 = vsel %vm171, %v714, 0
      %v722 = vsel %vm171, %v717, 0
      %724 = vmatprep.subr.bf16.mxu0 0
      %725 = vmatpush1.bf16.xpose.msra.mxu0 %v722
      %726 = vmatprep.subr.bf16.mxu0 0
      %727 = vmatpush1.bf16.xpose.msra.mxu0 0
      %728 = vmatprep.subr.bf16.mxu0 0
      %729 = vmatpush1.bf16.xpose.msra.mxu0 0
      %730 = vmatprep.subr.bf16.mxu0 0
      %731 = vmatpush1.bf16.xpose.msra.mxu0 0
      %732 = vmatprep.subr.bf16.mxu0 0
      %733 = vmatpush1.bf16.xpose.msra.mxu0 0
      %734 = vmatprep.subr.bf16.mxu0 0
      %735 = vmatpush1.bf16.xpose.msra.mxu0 0
      %736 = vmatprep.subr.bf16.mxu0 0
      %737 = vmatpush1.bf16.xpose.msra.mxu0 0
      %738 = vmatprep.subr.bf16.mxu0 0
      %739 = vmatpush1.bf16.xpose.msra.mxu0 0
      %740 = vmatprep.subr.bf16.mxu0 0
      %741 = vmatpush1.bf16.xpose.msra.mxu0 0
      %742 = vmatprep.subr.bf16.mxu0 0
      %743 = vmatpush1.bf16.xpose.msra.mxu0 0
      %744 = vmatprep.subr.bf16.mxu0 0
      %745 = vmatpush1.bf16.xpose.msra.mxu0 0
      %746 = vmatprep.subr.bf16.mxu0 0
      %747 = vmatpush1.bf16.xpose.msra.mxu0 0
      %748 = vmatprep.subr.bf16.mxu0 0
      %749 = vmatpush1.bf16.xpose.msra.mxu0 0
      %750 = vmatprep.subr.bf16.mxu0 0
      %751 = vmatpush1.bf16.xpose.msra.mxu0 0
      %752 = vmatprep.subr.bf16.mxu0 0
      %753 = vmatpush1.bf16.xpose.msra.mxu0 0
      %754 = vmatprep.subr.bf16.mxu0 0
      %755 = vmatpush1.bf16.xpose.msra.mxu0 0
      %756 = vmatprep.mubr.bf16.mxu0 0
      %757 = vmatmul.mubr.bf16.gmra.mrb[0].mxu0 %v719
      %v758 = vpop.f32.mrb[0].mxu0
      %v759 = vadd.f32 0.0, %v758
      %v760 = vpop.f32.mrb[0].mxu0
      %v761 = vpop.f32.mrb[0].mxu0
      %v762 = vadd.f32 0.0, %v761
      %v763 = vpop.f32.mrb[0].mxu0
      %764 = vdwg.mxu0
      %765 = vrot.lane.b32.xlu0 %v149, 96
      %v766 = vpop.permute.xlu0 %765
      %767 = vrot.lane.b32.xlu0 %v151, 96
      %v768 = vpop.permute.xlu0 %767
      %v769 = vrot.slane %v766, 4
      %v770 = vrot.slane %v768, 4
      %771 = vrot.lane.b32.xlu0 %v225, 96
      %v772 = vpop.permute.xlu0 %771
      %v773 = vunpack.c.l.b16 %v769
      %v774 = vunpack.c.l.b16 %v770
      %v775 = vpack.c.b16 %v774, %v773
      %v777 = vsel %vm171, %v772, 0
      %v780 = vsel %vm171, %v775, 0
      %782 = vmatprep.subr.bf16.mxu0 0
      %783 = vmatpush1.bf16.xpose.msra.mxu0 %v780
      %784 = vmatprep.subr.bf16.mxu0 0
      %785 = vmatpush1.bf16.xpose.msra.mxu0 0
      %786 = vmatprep.subr.bf16.mxu0 0
      %787 = vmatpush1.bf16.xpose.msra.mxu0 0
      %788 = vmatprep.subr.bf16.mxu0 0
      %789 = vmatpush1.bf16.xpose.msra.mxu0 0
      %790 = vmatprep.subr.bf16.mxu0 0
      %791 = vmatpush1.bf16.xpose.msra.mxu0 0
      %792 = vmatprep.subr.bf16.mxu0 0
      %793 = vmatpush1.bf16.xpose.msra.mxu0 0
      %794 = vmatprep.subr.bf16.mxu0 0
      %795 = vmatpush1.bf16.xpose.msra.mxu0 0
      %796 = vmatprep.subr.bf16.mxu0 0
      %797 = vmatpush1.bf16.xpose.msra.mxu0 0
      %798 = vmatprep.subr.bf16.mxu0 0
      %799 = vmatpush1.bf16.xpose.msra.mxu0 0
      %800 = vmatprep.subr.bf16.mxu0 0
      %801 = vmatpush1.bf16.xpose.msra.mxu0 0
      %802 = vmatprep.subr.bf16.mxu0 0
      %803 = vmatpush1.bf16.xpose.msra.mxu0 0
      %804 = vmatprep.subr.bf16.mxu0 0
      %805 = vmatpush1.bf16.xpose.msra.mxu0 0
      %806 = vmatprep.subr.bf16.mxu0 0
      %807 = vmatpush1.bf16.xpose.msra.mxu0 0
      %808 = vmatprep.subr.bf16.mxu0 0
      %809 = vmatpush1.bf16.xpose.msra.mxu0 0
      %810 = vmatprep.subr.bf16.mxu0 0
      %811 = vmatpush1.bf16.xpose.msra.mxu0 0
      %812 = vmatprep.subr.bf16.mxu0 0
      %813 = vmatpush1.bf16.xpose.msra.mxu0 0
      %814 = vmatprep.mubr.bf16.mxu0 0
      %815 = vmatmul.mubr.bf16.gmra.mrb[0].mxu0 %v777
      %v816 = vpop.f32.mrb[0].mxu0
      %v817 = vadd.f32 0.0, %v816
      %v818 = vpop.f32.mrb[0].mxu0
      %v819 = vpop.f32.mrb[0].mxu0
      %v820 = vadd.f32 0.0, %v819
      %v821 = vpop.f32.mrb[0].mxu0
      %822 = vdwg.mxu0
      %823 = vrot.lane.b32.xlu0 %v153, 96
      %v824 = vpop.permute.xlu0 %823
      %825 = vrot.lane.b32.xlu0 %v155, 96
      %v826 = vpop.permute.xlu0 %825
      %v827 = vrot.slane %v824, 4
      %v828 = vrot.slane %v826, 4
      %829 = vrot.lane.b32.xlu0 %v282, 96
      %v830 = vpop.permute.xlu0 %829
      %v831 = vunpack.c.l.b16 %v827
      %v832 = vunpack.c.l.b16 %v828
      %v833 = vpack.c.b16 %v832, %v831
      %v835 = vsel %vm171, %v830, 0
      %v838 = vsel %vm171, %v833, 0
      %840 = vmatprep.subr.bf16.mxu0 0
      %841 = vmatpush1.bf16.xpose.msra.mxu0 %v838
      %842 = vmatprep.subr.bf16.mxu0 0
      %843 = vmatpush1.bf16.xpose.msra.mxu0 0
      %844 = vmatprep.subr.bf16.mxu0 0
      %845 = vmatpush1.bf16.xpose.msra.mxu0 0
      %846 = vmatprep.subr.bf16.mxu0 0
      %847 = vmatpush1.bf16.xpose.msra.mxu0 0
      %848 = vmatprep.subr.bf16.mxu0 0
      %849 = vmatpush1.bf16.xpose.msra.mxu0 0
      %850 = vmatprep.subr.bf16.mxu0 0
      %851 = vmatpush1.bf16.xpose.msra.mxu0 0
      %852 = vmatprep.subr.bf16.mxu0 0
      %853 = vmatpush1.bf16.xpose.msra.mxu0 0
      %854 = vmatprep.subr.bf16.mxu0 0
      %855 = vmatpush1.bf16.xpose.msra.mxu0 0
      %856 = vmatprep.subr.bf16.mxu0 0
      %857 = vmatpush1.bf16.xpose.msra.mxu0 0
      %858 = vmatprep.subr.bf16.mxu0 0
      %859 = vmatpush1.bf16.xpose.msra.mxu0 0
      %860 = vmatprep.subr.bf16.mxu0 0
      %861 = vmatpush1.bf16.xpose.msra.mxu0 0
      %862 = vmatprep.subr.bf16.mxu0 0
      %863 = vmatpush1.bf16.xpose.msra.mxu0 0
      %864 = vmatprep.subr.bf16.mxu0 0
      %865 = vmatpush1.bf16.xpose.msra.mxu0 0
      %866 = vmatprep.subr.bf16.mxu0 0
      %867 = vmatpush1.bf16.xpose.msra.mxu0 0
      %868 = vmatprep.subr.bf16.mxu0 0
      %869 = vmatpush1.bf16.xpose.msra.mxu0 0
      %870 = vmatprep.subr.bf16.mxu0 0
      %871 = vmatpush1.bf16.xpose.msra.mxu0 0
      %872 = vmatprep.mubr.bf16.mxu0 0
      %873 = vmatmul.mubr.bf16.gmra.mrb[0].mxu0 %v835
      %v874 = vpop.f32.mrb[0].mxu0
      %v875 = vadd.f32 0.0, %v874
      %v876 = vpop.f32.mrb[0].mxu0
      %v877 = vpop.f32.mrb[0].mxu0
      %v878 = vadd.f32 0.0, %v877
      %v879 = vpop.f32.mrb[0].mxu0
      %880 = vdwg.mxu0
      %881 = vrot.lane.b32.xlu0 %v157, 96
      %v882 = vpop.permute.xlu0 %881
      %883 = vrot.lane.b32.xlu0 %v159, 96
      %v884 = vpop.permute.xlu0 %883
      %v885 = vrot.slane %v882, 4
      %v886 = vrot.slane %v884, 4
      %887 = vrot.lane.b32.xlu0 %v339, 96
      %v888 = vpop.permute.xlu0 %887
      %v889 = vunpack.c.l.b16 %v885
      %v890 = vunpack.c.l.b16 %v886
      %v891 = vpack.c.b16 %v890, %v889
      %v893 = vsel %vm171, %v888, 0
      %v896 = vsel %vm171, %v891, 0
      %898 = vmatprep.subr.bf16.mxu0 0
      %899 = vmatpush1.bf16.xpose.msra.mxu0 %v896
      %900 = vmatprep.subr.bf16.mxu0 0
      %901 = vmatpush1.bf16.xpose.msra.mxu0 0
      %902 = vmatprep.subr.bf16.mxu0 0
      %903 = vmatpush1.bf16.xpose.msra.mxu0 0
      %904 = vmatprep.subr.bf16.mxu0 0
      %905 = vmatpush1.bf16.xpose.msra.mxu0 0
      %906 = vmatprep.subr.bf16.mxu0 0
      %907 = vmatpush1.bf16.xpose.msra.mxu0 0
      %908 = vmatprep.subr.bf16.mxu0 0
      %909 = vmatpush1.bf16.xpose.msra.mxu0 0
      %910 = vmatprep.subr.bf16.mxu0 0
      %911 = vmatpush1.bf16.xpose.msra.mxu0 0
      %912 = vmatprep.subr.bf16.mxu0 0
      %913 = vmatpush1.bf16.xpose.msra.mxu0 0
      %914 = vmatprep.subr.bf16.mxu0 0
      %915 = vmatpush1.bf16.xpose.msra.mxu0 0
      %916 = vmatprep.subr.bf16.mxu0 0
      %917 = vmatpush1.bf16.xpose.msra.mxu0 0
      %918 = vmatprep.subr.bf16.mxu0 0
      %919 = vmatpush1.bf16.xpose.msra.mxu0 0
      %920 = vmatprep.subr.bf16.mxu0 0
      %921 = vmatpush1.bf16.xpose.msra.mxu0 0
      %922 = vmatprep.subr.bf16.mxu0 0
      %923 = vmatpush1.bf16.xpose.msra.mxu0 0
      %924 = vmatprep.subr.bf16.mxu0 0
      %925 = vmatpush1.bf16.xpose.msra.mxu0 0
      %926 = vmatprep.subr.bf16.mxu0 0
      %927 = vmatpush1.bf16.xpose.msra.mxu0 0
      %928 = vmatprep.subr.bf16.mxu0 0
      %929 = vmatpush1.bf16.xpose.msra.mxu0 0
      %930 = vmatprep.mubr.bf16.mxu0 0
      %931 = vmatmul.mubr.bf16.gmra.mrb[0].mxu0 %v893
      %v932 = vpop.f32.mrb[0].mxu0
      %v933 = vadd.f32 0.0, %v932
      %v934 = vpop.f32.mrb[0].mxu0
      %v935 = vpop.f32.mrb[0].mxu0
      %v936 = vadd.f32 0.0, %v935
      %v937 = vpop.f32.mrb[0].mxu0
      %938 = vdwg.mxu0
      %v939 = vmul.f32 %v759, 0.17677669
      %v940 = vmul.f32 %v762, 0.17677669
      %v941 = vmul.f32 %v817, 0.17677669
      %v942 = vmul.f32 %v820, 0.17677669
      %v943 = vmul.f32 %v875, 0.17677669
      %v944 = vmul.f32 %v878, 0.17677669
      %v945 = vmul.f32 %v933, 0.17677669
      %v946 = vmul.f32 %v936, 0.17677669
      %s947 = scalar_lea.vmem %s1, 64
      %v948 = vld [vmem:[%s947] sm:$0xff]
      %v949 = vld [vmem:[%s947 + $0x8] sm:$0xff]
      %v950 = vld [vmem:[%s947 + $0x10] sm:$0xff]
      %v951 = vld [vmem:[%s947 + $0x18] sm:$0xff]
      %v952 = vld [vmem:[%s947 + $0x20] sm:$0xff]
      %v953 = vld [vmem:[%s947 + $0x28] sm:$0xff]
      %v954 = vld [vmem:[%s947 + $0x30] sm:$0xff]
      %v955 = vld [vmem:[%s947 + $0x38] sm:$0xff]
      %v956 = vadd.f32 %v939, %v948
      %v957 = vadd.f32 %v940, %v949
      %v958 = vadd.f32 %v941, %v950
      %v959 = vadd.f32 %v942, %v951
      %v960 = vadd.f32 %v943, %v952
      %v961 = vadd.f32 %v944, %v953
      %v962 = vadd.f32 %v945, %v954
      %v963 = vadd.f32 %v946, %v955
      %v964 = vsel %vm414, %v956, -inf
      %965 = vmax.xlane.f32.xlu0 %v964
      %v966 = vpop.xlane.xlu0 %965
      %v967 = vsel %vm414, %v957, -inf
      %968 = vmax.xlane.f32.xlu0 %v967
      %v969 = vpop.xlane.xlu0 %968
      %v970 = vsel %vm414, %v958, -inf
      %971 = vmax.xlane.f32.xlu0 %v970
      %v972 = vpop.xlane.xlu0 %971
      %v973 = vsel %vm414, %v959, -inf
      %974 = vmax.xlane.f32.xlu0 %v973
      %v975 = vpop.xlane.xlu0 %974
      %v976 = vsel %vm414, %v960, -inf
      %977 = vmax.xlane.f32.xlu0 %v976
      %v978 = vpop.xlane.xlu0 %977
      %v979 = vsel %vm414, %v961, -inf
      %980 = vmax.xlane.f32.xlu0 %v979
      %v981 = vpop.xlane.xlu0 %980
      %v982 = vsel %vm414, %v962, -inf
      %983 = vmax.xlane.f32.xlu0 %v982
      %v984 = vpop.xlane.xlu0 %983
      %v985 = vsel %vm414, %v963, -inf
      %986 = vmax.xlane.f32.xlu0 %v985
      %v987 = vpop.xlane.xlu0 %986
      %v988 = vsub.f32 %v956, %v966
      %v989 = vsub.f32 %v957, %v969
      %v990 = vsub.f32 %v958, %v972
      %v991 = vsub.f32 %v959, %v975
      %v992 = vsub.f32 %v960, %v978
      %v993 = vsub.f32 %v961, %v981
      %v994 = vsub.f32 %v962, %v984
      %v995 = vsub.f32 %v963, %v987
      %v996 = vmul.f32 %v988, 1.442695
      %v997 = vpow.pop %v996
      %v998 = vmul.f32 %v989, 1.442695
      %v999 = vpow.pop %v998
      %v1000 = vmul.f32 %v990, 1.442695
      %v1001 = vpow.pop %v1000
      %v1002 = vmul.f32 %v991, 1.442695
      %v1003 = vpow.pop %v1002
      %v1004 = vmul.f32 %v992, 1.442695
      %v1005 = vpow.pop %v1004
      %v1006 = vmul.f32 %v993, 1.442695
      %v1007 = vpow.pop %v1006
      %v1008 = vmul.f32 %v994, 1.442695
      %v1009 = vpow.pop %v1008
      %v1010 = vmul.f32 %v995, 1.442695
      %v1011 = vpow.pop %v1010
      %v1012 = vsel %vm414, %v997, 0.0
      %1013 = vadd.xlane.f32.xlu0 %v1012
      %v1014 = vpop.xlane.xlu0 %1013
      %v1015 = vsel %vm414, %v999, 0.0
      %1016 = vadd.xlane.f32.xlu0 %v1015
      %v1017 = vpop.xlane.xlu0 %1016
      %v1018 = vsel %vm414, %v1001, 0.0
      %1019 = vadd.xlane.f32.xlu0 %v1018
      %v1020 = vpop.xlane.xlu0 %1019
      %v1021 = vsel %vm414, %v1003, 0.0
      %1022 = vadd.xlane.f32.xlu0 %v1021
      %v1023 = vpop.xlane.xlu0 %1022
      %v1024 = vsel %vm414, %v1005, 0.0
      %1025 = vadd.xlane.f32.xlu0 %v1024
      %v1026 = vpop.xlane.xlu0 %1025
      %v1027 = vsel %vm414, %v1007, 0.0
      %1028 = vadd.xlane.f32.xlu0 %v1027
      %v1029 = vpop.xlane.xlu0 %1028
      %v1030 = vsel %vm414, %v1009, 0.0
      %1031 = vadd.xlane.f32.xlu0 %v1030
      %v1032 = vpop.xlane.xlu0 %1031
      %v1033 = vsel %vm414, %v1011, 0.0
      %1034 = vadd.xlane.f32.xlu0 %v1033
      %v1035 = vpop.xlane.xlu0 %1034
      %v1036 = vrcp.pop %v1014
      %v1037 = vmul.f32 %v997, %v1036
      %v1038 = vrcp.pop %v1017
      %v1039 = vmul.f32 %v999, %v1038
      %v1040 = vrcp.pop %v1020
      %v1041 = vmul.f32 %v1001, %v1040
      %v1042 = vrcp.pop %v1023
      %v1043 = vmul.f32 %v1003, %v1042
      %v1044 = vrcp.pop %v1026
      %v1045 = vmul.f32 %v1005, %v1044
      %v1046 = vrcp.pop %v1029
      %v1047 = vmul.f32 %v1007, %v1046
      %v1048 = vrcp.pop %v1032
      %v1049 = vmul.f32 %v1009, %v1048
      %v1050 = vrcp.pop %v1035
      %v1051 = vmul.f32 %v1011, %v1050
      %v1052 = vpack.c.bf16 %v1039, %v1037
      %v1053 = vpack.c.bf16 %v1043, %v1041
      %v1054 = vpack.c.bf16 %v1047, %v1045
      %v1055 = vpack.c.bf16 %v1051, %v1049
      %1056 = vrot.lane.b32.xlu0 %v511, 96
      %v1057 = vpop.permute.xlu0 %1056
      %v1060 = vsel %vm414, %v1052, 0
      %1062 = vmatprep.subr.bf16.mxu0 0
      %1063 = vmatpush1.bf16.msra.mxu0 %v1057
      %1064 = vmatprep.subr.bf16.mxu0 0
      %1065 = vmatpush1.bf16.msra.mxu0 0
      %1066 = vmatprep.subr.bf16.mxu0 0
      %1067 = vmatpush1.bf16.msra.mxu0 0
      %1068 = vmatprep.subr.bf16.mxu0 0
      %1069 = vmatpush1.bf16.msra.mxu0 0
      %1070 = vmatprep.subr.bf16.mxu0 0
      %1071 = vmatpush1.bf16.msra.mxu0 0
      %1072 = vmatprep.subr.bf16.mxu0 0
      %1073 = vmatpush1.bf16.msra.mxu0 0
      %1074 = vmatprep.subr.bf16.mxu0 0
      %1075 = vmatpush1.bf16.msra.mxu0 0
      %1076 = vmatprep.subr.bf16.mxu0 0
      %1077 = vmatpush1.bf16.msra.mxu0 0
      %1078 = vmatprep.subr.bf16.mxu0 0
      %1079 = vmatpush1.bf16.msra.mxu0 0
      %1080 = vmatprep.subr.bf16.mxu0 0
      %1081 = vmatpush1.bf16.msra.mxu0 0
      %1082 = vmatprep.subr.bf16.mxu0 0
      %1083 = vmatpush1.bf16.msra.mxu0 0
      %1084 = vmatprep.subr.bf16.mxu0 0
      %1085 = vmatpush1.bf16.msra.mxu0 0
      %1086 = vmatprep.subr.bf16.mxu0 0
      %1087 = vmatpush1.bf16.msra.mxu0 0
      %1088 = vmatprep.subr.bf16.mxu0 0
      %1089 = vmatpush1.bf16.msra.mxu0 0
      %1090 = vmatprep.subr.bf16.mxu0 0
      %1091 = vmatpush1.bf16.msra.mxu0 0
      %1092 = vmatprep.subr.bf16.mxu0 0
      %1093 = vmatpush1.bf16.msra.mxu0 0
      %1094 = vmatprep.mubr.bf16.mxu0 0
      %1095 = vmatmul.mubr.bf16.gmra.mrb[0].mxu0 %v1060
      %v1096 = vpop.f32.mrb[0].mxu0
      %v1097 = vadd.f32 0.0, %v1096
      %v1098 = vpop.f32.mrb[0].mxu0
      %v1099 = vpop.f32.mrb[0].mxu0
      %v1100 = vadd.f32 0.0, %v1099
      %v1101 = vpop.f32.mrb[0].mxu0
      %1102 = vdwg.mxu0
      %1103 = vrot.lane.b32.xlu0 %v561, 96
      %v1104 = vpop.permute.xlu0 %1103
      %v1107 = vsel %vm414, %v1053, 0
      %1109 = vmatprep.subr.bf16.mxu0 0
      %1110 = vmatpush1.bf16.msra.mxu0 %v1104
      %1111 = vmatprep.subr.bf16.mxu0 0
      %1112 = vmatpush1.bf16.msra.mxu0 0
      %1113 = vmatprep.subr.bf16.mxu0 0
      %1114 = vmatpush1.bf16.msra.mxu0 0
      %1115 = vmatprep.subr.bf16.mxu0 0
      %1116 = vmatpush1.bf16.msra.mxu0 0
      %1117 = vmatprep.subr.bf16.mxu0 0
      %1118 = vmatpush1.bf16.msra.mxu0 0
      %1119 = vmatprep.subr.bf16.mxu0 0
      %1120 = vmatpush1.bf16.msra.mxu0 0
      %1121 = vmatprep.subr.bf16.mxu0 0
      %1122 = vmatpush1.bf16.msra.mxu0 0
      %1123 = vmatprep.subr.bf16.mxu0 0
      %1124 = vmatpush1.bf16.msra.mxu0 0
      %1125 = vmatprep.subr.bf16.mxu0 0
      %1126 = vmatpush1.bf16.msra.mxu0 0
      %1127 = vmatprep.subr.bf16.mxu0 0
      %1128 = vmatpush1.bf16.msra.mxu0 0
      %1129 = vmatprep.subr.bf16.mxu0 0
      %1130 = vmatpush1.bf16.msra.mxu0 0
      %1131 = vmatprep.subr.bf16.mxu0 0
      %1132 = vmatpush1.bf16.msra.mxu0 0
      %1133 = vmatprep.subr.bf16.mxu0 0
      %1134 = vmatpush1.bf16.msra.mxu0 0
      %1135 = vmatprep.subr.bf16.mxu0 0
      %1136 = vmatpush1.bf16.msra.mxu0 0
      %1137 = vmatprep.subr.bf16.mxu0 0
      %1138 = vmatpush1.bf16.msra.mxu0 0
      %1139 = vmatprep.subr.bf16.mxu0 0
      %1140 = vmatpush1.bf16.msra.mxu0 0
      %1141 = vmatprep.mubr.bf16.mxu0 0
      %1142 = vmatmul.mubr.bf16.gmra.mrb[0].mxu0 %v1107
      %v1143 = vpop.f32.mrb[0].mxu0
      %v1144 = vadd.f32 0.0, %v1143
      %v1145 = vpop.f32.mrb[0].mxu0
      %v1146 = vpop.f32.mrb[0].mxu0
      %v1147 = vadd.f32 0.0, %v1146
      %v1148 = vpop.f32.mrb[0].mxu0
      %1149 = vdwg.mxu0
      %1150 = vrot.lane.b32.xlu0 %v611, 96
      %v1151 = vpop.permute.xlu0 %1150
      %v1154 = vsel %vm414, %v1054, 0
      %1156 = vmatprep.subr.bf16.mxu0 0
      %1157 = vmatpush1.bf16.msra.mxu0 %v1151
      %1158 = vmatprep.subr.bf16.mxu0 0
      %1159 = vmatpush1.bf16.msra.mxu0 0
      %1160 = vmatprep.subr.bf16.mxu0 0
      %1161 = vmatpush1.bf16.msra.mxu0 0
      %1162 = vmatprep.subr.bf16.mxu0 0
      %1163 = vmatpush1.bf16.msra.mxu0 0
      %1164 = vmatprep.subr.bf16.mxu0 0
      %1165 = vmatpush1.bf16.msra.mxu0 0
      %1166 = vmatprep.subr.bf16.mxu0 0
      %1167 = vmatpush1.bf16.msra.mxu0 0
      %1168 = vmatprep.subr.bf16.mxu0 0
      %1169 = vmatpush1.bf16.msra.mxu0 0
      %1170 = vmatprep.subr.bf16.mxu0 0
      %1171 = vmatpush1.bf16.msra.mxu0 0
      %1172 = vmatprep.subr.bf16.mxu0 0
      %1173 = vmatpush1.bf16.msra.mxu0 0
      %1174 = vmatprep.subr.bf16.mxu0 0
      %1175 = vmatpush1.bf16.msra.mxu0 0
      %1176 = vmatprep.subr.bf16.mxu0 0
      %1177 = vmatpush1.bf16.msra.mxu0 0
      %1178 = vmatprep.subr.bf16.mxu0 0
      %1179 = vmatpush1.bf16.msra.mxu0 0
      %1180 = vmatprep.subr.bf16.mxu0 0
      %1181 = vmatpush1.bf16.msra.mxu0 0
      %1182 = vmatprep.subr.bf16.mxu0 0
      %1183 = vmatpush1.bf16.msra.mxu0 0
      %1184 = vmatprep.subr.bf16.mxu0 0
      %1185 = vmatpush1.bf16.msra.mxu0 0
      %1186 = vmatprep.subr.bf16.mxu0 0
      %1187 = vmatpush1.bf16.msra.mxu0 0
      %1188 = vmatprep.mubr.bf16.mxu0 0
      %1189 = vmatmul.mubr.bf16.gmra.mrb[0].mxu0 %v1154
      %v1190 = vpop.f32.mrb[0].mxu0
      %v1191 = vadd.f32 0.0, %v1190
      %v1192 = vpop.f32.mrb[0].mxu0
      %v1193 = vpop.f32.mrb[0].mxu0
      %v1194 = vadd.f32 0.0, %v1193
      %v1195 = vpop.f32.mrb[0].mxu0
      %1196 = vdwg.mxu0
      %1197 = vrot.lane.b32.xlu0 %v661, 96
      %v1198 = vpop.permute.xlu0 %1197
      %v1201 = vsel %vm414, %v1055, 0
      %1203 = vmatprep.subr.bf16.mxu0 0
      %1204 = vmatpush1.bf16.msra.mxu0 %v1198
      %1205 = vmatprep.subr.bf16.mxu0 0
      %1206 = vmatpush1.bf16.msra.mxu0 0
      %1207 = vmatprep.subr.bf16.mxu0 0
      %1208 = vmatpush1.bf16.msra.mxu0 0
      %1209 = vmatprep.subr.bf16.mxu0 0
      %1210 = vmatpush1.bf16.msra.mxu0 0
      %1211 = vmatprep.subr.bf16.mxu0 0
      %1212 = vmatpush1.bf16.msra.mxu0 0
      %1213 = vmatprep.subr.bf16.mxu0 0
      %1214 = vmatpush1.bf16.msra.mxu0 0
      %1215 = vmatprep.subr.bf16.mxu0 0
      %1216 = vmatpush1.bf16.msra.mxu0 0
      %1217 = vmatprep.subr.bf16.mxu0 0
      %1218 = vmatpush1.bf16.msra.mxu0 0
      %1219 = vmatprep.subr.bf16.mxu0 0
      %1220 = vmatpush1.bf16.msra.mxu0 0
      %1221 = vmatprep.subr.bf16.mxu0 0
      %1222 = vmatpush1.bf16.msra.mxu0 0
      %1223 = vmatprep.subr.bf16.mxu0 0
      %1224 = vmatpush1.bf16.msra.mxu0 0
      %1225 = vmatprep.subr.bf16.mxu0 0
      %1226 = vmatpush1.bf16.msra.mxu0 0
      %1227 = vmatprep.subr.bf16.mxu0 0
      %1228 = vmatpush1.bf16.msra.mxu0 0
      %1229 = vmatprep.subr.bf16.mxu0 0
      %1230 = vmatpush1.bf16.msra.mxu0 0
      %1231 = vmatprep.subr.bf16.mxu0 0
      %1232 = vmatpush1.bf16.msra.mxu0 0
      %1233 = vmatprep.subr.bf16.mxu0 0
      %1234 = vmatpush1.bf16.msra.mxu0 0
      %1235 = vmatprep.mubr.bf16.mxu0 0
      %1236 = vmatmul.mubr.bf16.gmra.mrb[0].mxu0 %v1201
      %v1237 = vpop.f32.mrb[0].mxu0
      %v1238 = vadd.f32 0.0, %v1237
      %v1239 = vpop.f32.mrb[0].mxu0
      %v1240 = vpop.f32.mrb[0].mxu0
      %v1241 = vadd.f32 0.0, %v1240
      %v1242 = vpop.f32.mrb[0].mxu0
      %1243 = vdwg.mxu0
      %1244 = vrot.lane.b32.xlu0 %v145, 64
      %v1245 = vpop.permute.xlu0 %1244
      %1246 = vrot.lane.b32.xlu0 %v147, 64
      %v1247 = vpop.permute.xlu0 %1246
      %v1248 = vrot.slane %v1245, 4
      %v1249 = vrot.slane %v1247, 4
      %1250 = vrot.lane.b32.xlu0 %v167, 64
      %v1251 = vpop.permute.xlu0 %1250
      %v1252 = vunpack.c.l.b16 %v1248
      %v1253 = vunpack.c.l.b16 %v1249
      %v1254 = vpack.c.b16 %v1253, %v1252
      %v1256 = vsel %vm171, %v1251, 0
      %v1259 = vsel %vm171, %v1254, 0
      %1261 = vmatprep.subr.bf16.mxu0 0
      %1262 = vmatpush1.bf16.xpose.msra.mxu0 %v1259
      %1263 = vmatprep.subr.bf16.mxu0 0
      %1264 = vmatpush1.bf16.xpose.msra.mxu0 0
      %1265 = vmatprep.subr.bf16.mxu0 0
      %1266 = vmatpush1.bf16.xpose.msra.mxu0 0
      %1267 = vmatprep.subr.bf16.mxu0 0
      %1268 = vmatpush1.bf16.xpose.msra.mxu0 0
      %1269 = vmatprep.subr.bf16.mxu0 0
      %1270 = vmatpush1.bf16.xpose.msra.mxu0 0
      %1271 = vmatprep.subr.bf16.mxu0 0
      %1272 = vmatpush1.bf16.xpose.msra.mxu0 0
      %1273 = vmatprep.subr.bf16.mxu0 0
      %1274 = vmatpush1.bf16.xpose.msra.mxu0 0
      %1275 = vmatprep.subr.bf16.mxu0 0
      %1276 = vmatpush1.bf16.xpose.msra.mxu0 0
      %1277 = vmatprep.subr.bf16.mxu0 0
      %1278 = vmatpush1.bf16.xpose.msra.mxu0 0
      %1279 = vmatprep.subr.bf16.mxu0 0
      %1280 = vmatpush1.bf16.xpose.msra.mxu0 0
      %1281 = vmatprep.subr.bf16.mxu0 0
      %1282 = vmatpush1.bf16.xpose.msra.mxu0 0
      %1283 = vmatprep.subr.bf16.mxu0 0
      %1284 = vmatpush1.bf16.xpose.msra.mxu0 0
      %1285 = vmatprep.subr.bf16.mxu0 0
      %1286 = vmatpush1.bf16.xpose.msra.mxu0 0
      %1287 = vmatprep.subr.bf16.mxu0 0
      %1288 = vmatpush1.bf16.xpose.msra.mxu0 0
      %1289 = vmatprep.subr.bf16.mxu0 0
      %1290 = vmatpush1.bf16.xpose.msra.mxu0 0
      %1291 = vmatprep.subr.bf16.mxu0 0
      %1292 = vmatpush1.bf16.xpose.msra.mxu0 0
      %1293 = vmatprep.mubr.bf16.mxu0 0
      %1294 = vmatmul.mubr.bf16.gmra.mrb[0].mxu0 %v1256
      %v1295 = vpop.f32.mrb[0].mxu0
      %v1296 = vadd.f32 0.0, %v1295
      %v1297 = vpop.f32.mrb[0].mxu0
      %v1298 = vpop.f32.mrb[0].mxu0
      %v1299 = vadd.f32 0.0, %v1298
      %v1300 = vpop.f32.mrb[0].mxu0
      %1301 = vdwg.mxu0
      %1302 = vrot.lane.b32.xlu0 %v149, 64
      %v1303 = vpop.permute.xlu0 %1302
      %1304 = vrot.lane.b32.xlu0 %v151, 64
      %v1305 = vpop.permute.xlu0 %1304
      %v1306 = vrot.slane %v1303, 4
      %v1307 = vrot.slane %v1305, 4
      %1308 = vrot.lane.b32.xlu0 %v225, 64
      %v1309 = vpop.permute.xlu0 %1308
      %v1310 = vunpack.c.l.b16 %v1306
      %v1311 = vunpack.c.l.b16 %v1307
      %v1312 = vpack.c.b16 %v1311, %v1310
      %v1314 = vsel %vm171, %v1309, 0
      %v1317 = vsel %vm171, %v1312, 0
      %1319 = vmatprep.subr.bf16.mxu0 0
      %1320 = vmatpush1.bf16.xpose.msra.mxu0 %v1317
      %1321 = vmatprep.subr.bf16.mxu0 0
      %1322 = vmatpush1.bf16.xpose.msra.mxu0 0
      %1323 = vmatprep.subr.bf16.mxu0 0
      %1324 = vmatpush1.bf16.xpose.msra.mxu0 0
      %1325 = vmatprep.subr.bf16.mxu0 0
      %1326 = vmatpush1.bf16.xpose.msra.mxu0 0
      %1327 = vmatprep.subr.bf16.mxu0 0
      %1328 = vmatpush1.bf16.xpose.msra.mxu0 0
      %1329 = vmatprep.subr.bf16.mxu0 0
      %1330 = vmatpush1.bf16.xpose.msra.mxu0 0
      %1331 = vmatprep.subr.bf16.mxu0 0
      %1332 = vmatpush1.bf16.xpose.msra.mxu0 0
      %1333 = vmatprep.subr.bf16.mxu0 0
      %1334 = vmatpush1.bf16.xpose.msra.mxu0 0
      %1335 = vmatprep.subr.bf16.mxu0 0
      %1336 = vmatpush1.bf16.xpose.msra.mxu0 0
      %1337 = vmatprep.subr.bf16.mxu0 0
      %1338 = vmatpush1.bf16.xpose.msra.mxu0 0
      %1339 = vmatprep.subr.bf16.mxu0 0
      %1340 = vmatpush1.bf16.xpose.msra.mxu0 0
      %1341 = vmatprep.subr.bf16.mxu0 0
      %1342 = vmatpush1.bf16.xpose.msra.mxu0 0
      %1343 = vmatprep.subr.bf16.mxu0 0
      %1344 = vmatpush1.bf16.xpose.msra.mxu0 0
      %1345 = vmatprep.subr.bf16.mxu0 0
      %1346 = vmatpush1.bf16.xpose.msra.mxu0 0
      %1347 = vmatprep.subr.bf16.mxu0 0
      %1348 = vmatpush1.bf16.xpose.msra.mxu0 0
      %1349 = vmatprep.subr.bf16.mxu0 0
      %1350 = vmatpush1.bf16.xpose.msra.mxu0 0
      %1351 = vmatprep.mubr.bf16.mxu0 0
      %1352 = vmatmul.mubr.bf16.gmra.mrb[0].mxu0 %v1314
      %v1353 = vpop.f32.mrb[0].mxu0
      %v1354 = vadd.f32 0.0, %v1353
      %v1355 = vpop.f32.mrb[0].mxu0
      %v1356 = vpop.f32.mrb[0].mxu0
      %v1357 = vadd.f32 0.0, %v1356
      %v1358 = vpop.f32.mrb[0].mxu0
      %1359 = vdwg.mxu0
      %1360 = vrot.lane.b32.xlu0 %v153, 64
      %v1361 = vpop.permute.xlu0 %1360
      %1362 = vrot.lane.b32.xlu0 %v155, 64
      %v1363 = vpop.permute.xlu0 %1362
      %v1364 = vrot.slane %v1361, 4
      %v1365 = vrot.slane %v1363, 4
      %1366 = vrot.lane.b32.xlu0 %v282, 64
      %v1367 = vpop.permute.xlu0 %1366
      %v1368 = vunpack.c.l.b16 %v1364
      %v1369 = vunpack.c.l.b16 %v1365
      %v1370 = vpack.c.b16 %v1369, %v1368
      %v1372 = vsel %vm171, %v1367, 0
      %v1375 = vsel %vm171, %v1370, 0
      %1377 = vmatprep.subr.bf16.mxu0 0
      %1378 = vmatpush1.bf16.xpose.msra.mxu0 %v1375
      %1379 = vmatprep.subr.bf16.mxu0 0
      %1380 = vmatpush1.bf16.xpose.msra.mxu0 0
      %1381 = vmatprep.subr.bf16.mxu0 0
      %1382 = vmatpush1.bf16.xpose.msra.mxu0 0
      %1383 = vmatprep.subr.bf16.mxu0 0
      %1384 = vmatpush1.bf16.xpose.msra.mxu0 0
      %1385 = vmatprep.subr.bf16.mxu0 0
      %1386 = vmatpush1.bf16.xpose.msra.mxu0 0
      %1387 = vmatprep.subr.bf16.mxu0 0
      %1388 = vmatpush1.bf16.xpose.msra.mxu0 0
      %1389 = vmatprep.subr.bf16.mxu0 0
      %1390 = vmatpush1.bf16.xpose.msra.mxu0 0
      %1391 = vmatprep.subr.bf16.mxu0 0
      %1392 = vmatpush1.bf16.xpose.msra.mxu0 0
      %1393 = vmatprep.subr.bf16.mxu0 0
      %1394 = vmatpush1.bf16.xpose.msra.mxu0 0
      %1395 = vmatprep.subr.bf16.mxu0 0
      %1396 = vmatpush1.bf16.xpose.msra.mxu0 0
      %1397 = vmatprep.subr.bf16.mxu0 0
      %1398 = vmatpush1.bf16.xpose.msra.mxu0 0
      %1399 = vmatprep.subr.bf16.mxu0 0
      %1400 = vmatpush1.bf16.xpose.msra.mxu0 0
      %1401 = vmatprep.subr.bf16.mxu0 0
      %1402 = vmatpush1.bf16.xpose.msra.mxu0 0
      %1403 = vmatprep.subr.bf16.mxu0 0
      %1404 = vmatpush1.bf16.xpose.msra.mxu0 0
      %1405 = vmatprep.subr.bf16.mxu0 0
      %1406 = vmatpush1.bf16.xpose.msra.mxu0 0
      %1407 = vmatprep.subr.bf16.mxu0 0
      %1408 = vmatpush1.bf16.xpose.msra.mxu0 0
      %1409 = vmatprep.mubr.bf16.mxu0 0
      %1410 = vmatmul.mubr.bf16.gmra.mrb[0].mxu0 %v1372
      %v1411 = vpop.f32.mrb[0].mxu0
      %v1412 = vadd.f32 0.0, %v1411
      %v1413 = vpop.f32.mrb[0].mxu0
      %v1414 = vpop.f32.mrb[0].mxu0
      %v1415 = vadd.f32 0.0, %v1414
      %v1416 = vpop.f32.mrb[0].mxu0
      %1417 = vdwg.mxu0
      %1418 = vrot.lane.b32.xlu0 %v157, 64
      %v1419 = vpop.permute.xlu0 %1418
      %1420 = vrot.lane.b32.xlu0 %v159, 64
      %v1421 = vpop.permute.xlu0 %1420
      %v1422 = vrot.slane %v1419, 4
      %v1423 = vrot.slane %v1421, 4
      %1424 = vrot.lane.b32.xlu0 %v339, 64
      %v1425 = vpop.permute.xlu0 %1424
      %v1426 = vunpack.c.l.b16 %v1422
      %v1427 = vunpack.c.l.b16 %v1423
      %v1428 = vpack.c.b16 %v1427, %v1426
      %v1430 = vsel %vm171, %v1425, 0
      %v1433 = vsel %vm171, %v1428, 0
      %1435 = vmatprep.subr.bf16.mxu0 0
      %1436 = vmatpush1.bf16.xpose.msra.mxu0 %v1433
      %1437 = vmatprep.subr.bf16.mxu0 0
      %1438 = vmatpush1.bf16.xpose.msra.mxu0 0
      %1439 = vmatprep.subr.bf16.mxu0 0
      %1440 = vmatpush1.bf16.xpose.msra.mxu0 0
      %1441 = vmatprep.subr.bf16.mxu0 0
      %1442 = vmatpush1.bf16.xpose.msra.mxu0 0
      %1443 = vmatprep.subr.bf16.mxu0 0
      %1444 = vmatpush1.bf16.xpose.msra.mxu0 0
      %1445 = vmatprep.subr.bf16.mxu0 0
      %1446 = vmatpush1.bf16.xpose.msra.mxu0 0
      %1447 = vmatprep.subr.bf16.mxu0 0
      %1448 = vmatpush1.bf16.xpose.msra.mxu0 0
      %1449 = vmatprep.subr.bf16.mxu0 0
      %1450 = vmatpush1.bf16.xpose.msra.mxu0 0
      %1451 = vmatprep.subr.bf16.mxu0 0
      %1452 = vmatpush1.bf16.xpose.msra.mxu0 0
      %1453 = vmatprep.subr.bf16.mxu0 0
      %1454 = vmatpush1.bf16.xpose.msra.mxu0 0
      %1455 = vmatprep.subr.bf16.mxu0 0
      %1456 = vmatpush1.bf16.xpose.msra.mxu0 0
      %1457 = vmatprep.subr.bf16.mxu0 0
      %1458 = vmatpush1.bf16.xpose.msra.mxu0 0
      %1459 = vmatprep.subr.bf16.mxu0 0
      %1460 = vmatpush1.bf16.xpose.msra.mxu0 0
      %1461 = vmatprep.subr.bf16.mxu0 0
      %1462 = vmatpush1.bf16.xpose.msra.mxu0 0
      %1463 = vmatprep.subr.bf16.mxu0 0
      %1464 = vmatpush1.bf16.xpose.msra.mxu0 0
      %1465 = vmatprep.subr.bf16.mxu0 0
      %1466 = vmatpush1.bf16.xpose.msra.mxu0 0
      %1467 = vmatprep.mubr.bf16.mxu0 0
      %1468 = vmatmul.mubr.bf16.gmra.mrb[0].mxu0 %v1430
      %v1469 = vpop.f32.mrb[0].mxu0
      %v1470 = vadd.f32 0.0, %v1469
      %v1471 = vpop.f32.mrb[0].mxu0
      %v1472 = vpop.f32.mrb[0].mxu0
      %v1473 = vadd.f32 0.0, %v1472
      %v1474 = vpop.f32.mrb[0].mxu0
      %1475 = vdwg.mxu0
      %v1476 = vmul.f32 %v1296, 0.17677669
      %v1477 = vmul.f32 %v1299, 0.17677669
      %v1478 = vmul.f32 %v1354, 0.17677669
      %v1479 = vmul.f32 %v1357, 0.17677669
      %v1480 = vmul.f32 %v1412, 0.17677669
      %v1481 = vmul.f32 %v1415, 0.17677669
      %v1482 = vmul.f32 %v1470, 0.17677669
      %v1483 = vmul.f32 %v1473, 0.17677669
      %s1484 = scalar_lea.vmem %s1, 128
      %v1485 = vld [vmem:[%s1484] sm:$0xff]
      %v1486 = vld [vmem:[%s1484 + $0x8] sm:$0xff]
      %v1487 = vld [vmem:[%s1484 + $0x10] sm:$0xff]
      %v1488 = vld [vmem:[%s1484 + $0x18] sm:$0xff]
      %v1489 = vld [vmem:[%s1484 + $0x20] sm:$0xff]
      %v1490 = vld [vmem:[%s1484 + $0x28] sm:$0xff]
      %v1491 = vld [vmem:[%s1484 + $0x30] sm:$0xff]
      %v1492 = vld [vmem:[%s1484 + $0x38] sm:$0xff]
      %v1493 = vadd.f32 %v1476, %v1485
      %v1494 = vadd.f32 %v1477, %v1486
      %v1495 = vadd.f32 %v1478, %v1487
      %v1496 = vadd.f32 %v1479, %v1488
      %v1497 = vadd.f32 %v1480, %v1489
      %v1498 = vadd.f32 %v1481, %v1490
      %v1499 = vadd.f32 %v1482, %v1491
      %v1500 = vadd.f32 %v1483, %v1492
      %v1501 = vsel %vm414, %v1493, -inf
      %1502 = vmax.xlane.f32.xlu0 %v1501
      %v1503 = vpop.xlane.xlu0 %1502
      %v1504 = vsel %vm414, %v1494, -inf
      %1505 = vmax.xlane.f32.xlu0 %v1504
      %v1506 = vpop.xlane.xlu0 %1505
      %v1507 = vsel %vm414, %v1495, -inf
      %1508 = vmax.xlane.f32.xlu0 %v1507
      %v1509 = vpop.xlane.xlu0 %1508
      %v1510 = vsel %vm414, %v1496, -inf
      %1511 = vmax.xlane.f32.xlu0 %v1510
      %v1512 = vpop.xlane.xlu0 %1511
      %v1513 = vsel %vm414, %v1497, -inf
      %1514 = vmax.xlane.f32.xlu0 %v1513
      %v1515 = vpop.xlane.xlu0 %1514
      %v1516 = vsel %vm414, %v1498, -inf
      %1517 = vmax.xlane.f32.xlu0 %v1516
      %v1518 = vpop.xlane.xlu0 %1517
      %v1519 = vsel %vm414, %v1499, -inf
      %1520 = vmax.xlane.f32.xlu0 %v1519
      %v1521 = vpop.xlane.xlu0 %1520
      %v1522 = vsel %vm414, %v1500, -inf
      %1523 = vmax.xlane.f32.xlu0 %v1522
      %v1524 = vpop.xlane.xlu0 %1523
      %v1525 = vsub.f32 %v1493, %v1503
      %v1526 = vsub.f32 %v1494, %v1506
      %v1527 = vsub.f32 %v1495, %v1509
      %v1528 = vsub.f32 %v1496, %v1512
      %v1529 = vsub.f32 %v1497, %v1515
      %v1530 = vsub.f32 %v1498, %v1518
      %v1531 = vsub.f32 %v1499, %v1521
      %v1532 = vsub.f32 %v1500, %v1524
      %v1533 = vmul.f32 %v1525, 1.442695
      %v1534 = vpow.pop %v1533
      %v1535 = vmul.f32 %v1526, 1.442695
      %v1536 = vpow.pop %v1535
      %v1537 = vmul.f32 %v1527, 1.442695
      %v1538 = vpow.pop %v1537
      %v1539 = vmul.f32 %v1528, 1.442695
      %v1540 = vpow.pop %v1539
      %v1541 = vmul.f32 %v1529, 1.442695
      %v1542 = vpow.pop %v1541
      %v1543 = vmul.f32 %v1530, 1.442695
      %v1544 = vpow.pop %v1543
      %v1545 = vmul.f32 %v1531, 1.442695
      %v1546 = vpow.pop %v1545
      %v1547 = vmul.f32 %v1532, 1.442695
      %v1548 = vpow.pop %v1547
      %v1549 = vsel %vm414, %v1534, 0.0
      %1550 = vadd.xlane.f32.xlu0 %v1549
      %v1551 = vpop.xlane.xlu0 %1550
      %v1552 = vsel %vm414, %v1536, 0.0
      %1553 = vadd.xlane.f32.xlu0 %v1552
      %v1554 = vpop.xlane.xlu0 %1553
      %v1555 = vsel %vm414, %v1538, 0.0
      %1556 = vadd.xlane.f32.xlu0 %v1555
      %v1557 = vpop.xlane.xlu0 %1556
      %v1558 = vsel %vm414, %v1540, 0.0
      %1559 = vadd.xlane.f32.xlu0 %v1558
      %v1560 = vpop.xlane.xlu0 %1559
      %v1561 = vsel %vm414, %v1542, 0.0
      %1562 = vadd.xlane.f32.xlu0 %v1561
      %v1563 = vpop.xlane.xlu0 %1562
      %v1564 = vsel %vm414, %v1544, 0.0
      %1565 = vadd.xlane.f32.xlu0 %v1564
      %v1566 = vpop.xlane.xlu0 %1565
      %v1567 = vsel %vm414, %v1546, 0.0
      %1568 = vadd.xlane.f32.xlu0 %v1567
      %v1569 = vpop.xlane.xlu0 %1568
      %v1570 = vsel %vm414, %v1548, 0.0
      %1571 = vadd.xlane.f32.xlu0 %v1570
      %v1572 = vpop.xlane.xlu0 %1571
      %v1573 = vrcp.pop %v1551
      %v1574 = vmul.f32 %v1534, %v1573
      %v1575 = vrcp.pop %v1554
      %v1576 = vmul.f32 %v1536, %v1575
      %v1577 = vrcp.pop %v1557
      %v1578 = vmul.f32 %v1538, %v1577
      %v1579 = vrcp.pop %v1560
      %v1580 = vmul.f32 %v1540, %v1579
      %v1581 = vrcp.pop %v1563
      %v1582 = vmul.f32 %v1542, %v1581
      %v1583 = vrcp.pop %v1566
      %v1584 = vmul.f32 %v1544, %v1583
      %v1585 = vrcp.pop %v1569
      %v1586 = vmul.f32 %v1546, %v1585
      %v1587 = vrcp.pop %v1572
      %v1588 = vmul.f32 %v1548, %v1587
      %v1589 = vpack.c.bf16 %v1576, %v1574
      %v1590 = vpack.c.bf16 %v1580, %v1578
      %v1591 = vpack.c.bf16 %v1584, %v1582
      %v1592 = vpack.c.bf16 %v1588, %v1586
      %1593 = vrot.lane.b32.xlu0 %v511, 64
      %v1594 = vpop.permute.xlu0 %1593
      %v1597 = vsel %vm414, %v1589, 0
      %1599 = vmatprep.subr.bf16.mxu0 0
      %1600 = vmatpush1.bf16.msra.mxu0 %v1594
      %1601 = vmatprep.subr.bf16.mxu0 0
      %1602 = vmatpush1.bf16.msra.mxu0 0
      %1603 = vmatprep.subr.bf16.mxu0 0
      %1604 = vmatpush1.bf16.msra.mxu0 0
      %1605 = vmatprep.subr.bf16.mxu0 0
      %1606 = vmatpush1.bf16.msra.mxu0 0
      %1607 = vmatprep.subr.bf16.mxu0 0
      %1608 = vmatpush1.bf16.msra.mxu0 0
      %1609 = vmatprep.subr.bf16.mxu0 0
      %1610 = vmatpush1.bf16.msra.mxu0 0
      %1611 = vmatprep.subr.bf16.mxu0 0
      %1612 = vmatpush1.bf16.msra.mxu0 0
      %1613 = vmatprep.subr.bf16.mxu0 0
      %1614 = vmatpush1.bf16.msra.mxu0 0
      %1615 = vmatprep.subr.bf16.mxu0 0
      %1616 = vmatpush1.bf16.msra.mxu0 0
      %1617 = vmatprep.subr.bf16.mxu0 0
      %1618 = vmatpush1.bf16.msra.mxu0 0
      %1619 = vmatprep.subr.bf16.mxu0 0
      %1620 = vmatpush1.bf16.msra.mxu0 0
      %1621 = vmatprep.subr.bf16.mxu0 0
      %1622 = vmatpush1.bf16.msra.mxu0 0
      %1623 = vmatprep.subr.bf16.mxu0 0
      %1624 = vmatpush1.bf16.msra.mxu0 0
      %1625 = vmatprep.subr.bf16.mxu0 0
      %1626 = vmatpush1.bf16.msra.mxu0 0
      %1627 = vmatprep.subr.bf16.mxu0 0
      %1628 = vmatpush1.bf16.msra.mxu0 0
      %1629 = vmatprep.subr.bf16.mxu0 0
      %1630 = vmatpush1.bf16.msra.mxu0 0
      %1631 = vmatprep.mubr.bf16.mxu0 0
      %1632 = vmatmul.mubr.bf16.gmra.mrb[0].mxu0 %v1597
      %v1633 = vpop.f32.mrb[0].mxu0
      %v1634 = vadd.f32 0.0, %v1633
      %v1635 = vpop.f32.mrb[0].mxu0
      %v1636 = vpop.f32.mrb[0].mxu0
      %v1637 = vadd.f32 0.0, %v1636
      %v1638 = vpop.f32.mrb[0].mxu0
      %1639 = vdwg.mxu0
      %1640 = vrot.lane.b32.xlu0 %v561, 64
      %v1641 = vpop.permute.xlu0 %1640
      %v1644 = vsel %vm414, %v1590, 0
      %1646 = vmatprep.subr.bf16.mxu0 0
      %1647 = vmatpush1.bf16.msra.mxu0 %v1641
      %1648 = vmatprep.subr.bf16.mxu0 0
      %1649 = vmatpush1.bf16.msra.mxu0 0
      %1650 = vmatprep.subr.bf16.mxu0 0
      %1651 = vmatpush1.bf16.msra.mxu0 0
      %1652 = vmatprep.subr.bf16.mxu0 0
      %1653 = vmatpush1.bf16.msra.mxu0 0
      %1654 = vmatprep.subr.bf16.mxu0 0
      %1655 = vmatpush1.bf16.msra.mxu0 0
      %1656 = vmatprep.subr.bf16.mxu0 0
      %1657 = vmatpush1.bf16.msra.mxu0 0
      %1658 = vmatprep.subr.bf16.mxu0 0
      %1659 = vmatpush1.bf16.msra.mxu0 0
      %1660 = vmatprep.subr.bf16.mxu0 0
      %1661 = vmatpush1.bf16.msra.mxu0 0
      %1662 = vmatprep.subr.bf16.mxu0 0
      %1663 = vmatpush1.bf16.msra.mxu0 0
      %1664 = vmatprep.subr.bf16.mxu0 0
      %1665 = vmatpush1.bf16.msra.mxu0 0
      %1666 = vmatprep.subr.bf16.mxu0 0
      %1667 = vmatpush1.bf16.msra.mxu0 0
      %1668 = vmatprep.subr.bf16.mxu0 0
      %1669 = vmatpush1.bf16.msra.mxu0 0
      %1670 = vmatprep.subr.bf16.mxu0 0
      %1671 = vmatpush1.bf16.msra.mxu0 0
      %1672 = vmatprep.subr.bf16.mxu0 0
      %1673 = vmatpush1.bf16.msra.mxu0 0
      %1674 = vmatprep.subr.bf16.mxu0 0
      %1675 = vmatpush1.bf16.msra.mxu0 0
      %1676 = vmatprep.subr.bf16.mxu0 0
      %1677 = vmatpush1.bf16.msra.mxu0 0
      %1678 = vmatprep.mubr.bf16.mxu0 0
      %1679 = vmatmul.mubr.bf16.gmra.mrb[0].mxu0 %v1644
      %v1680 = vpop.f32.mrb[0].mxu0
      %v1681 = vadd.f32 0.0, %v1680
      %v1682 = vpop.f32.mrb[0].mxu0
      %v1683 = vpop.f32.mrb[0].mxu0
      %v1684 = vadd.f32 0.0, %v1683
      %v1685 = vpop.f32.mrb[0].mxu0
      %1686 = vdwg.mxu0
      %1687 = vrot.lane.b32.xlu0 %v611, 64
      %v1688 = vpop.permute.xlu0 %1687
      %v1691 = vsel %vm414, %v1591, 0
      %1693 = vmatprep.subr.bf16.mxu0 0
      %1694 = vmatpush1.bf16.msra.mxu0 %v1688
      %1695 = vmatprep.subr.bf16.mxu0 0
      %1696 = vmatpush1.bf16.msra.mxu0 0
      %1697 = vmatprep.subr.bf16.mxu0 0
      %1698 = vmatpush1.bf16.msra.mxu0 0
      %1699 = vmatprep.subr.bf16.mxu0 0
      %1700 = vmatpush1.bf16.msra.mxu0 0
      %1701 = vmatprep.subr.bf16.mxu0 0
      %1702 = vmatpush1.bf16.msra.mxu0 0
      %1703 = vmatprep.subr.bf16.mxu0 0
      %1704 = vmatpush1.bf16.msra.mxu0 0
      %1705 = vmatprep.subr.bf16.mxu0 0
      %1706 = vmatpush1.bf16.msra.mxu0 0
      %1707 = vmatprep.subr.bf16.mxu0 0
      %1708 = vmatpush1.bf16.msra.mxu0 0
      %1709 = vmatprep.subr.bf16.mxu0 0
      %1710 = vmatpush1.bf16.msra.mxu0 0
      %1711 = vmatprep.subr.bf16.mxu0 0
      %1712 = vmatpush1.bf16.msra.mxu0 0
      %1713 = vmatprep.subr.bf16.mxu0 0
      %1714 = vmatpush1.bf16.msra.mxu0 0
      %1715 = vmatprep.subr.bf16.mxu0 0
      %1716 = vmatpush1.bf16.msra.mxu0 0
      %1717 = vmatprep.subr.bf16.mxu0 0
      %1718 = vmatpush1.bf16.msra.mxu0 0
      %1719 = vmatprep.subr.bf16.mxu0 0
      %1720 = vmatpush1.bf16.msra.mxu0 0
      %1721 = vmatprep.subr.bf16.mxu0 0
      %1722 = vmatpush1.bf16.msra.mxu0 0
      %1723 = vmatprep.subr.bf16.mxu0 0
      %1724 = vmatpush1.bf16.msra.mxu0 0
      %1725 = vmatprep.mubr.bf16.mxu0 0
      %1726 = vmatmul.mubr.bf16.gmra.mrb[0].mxu0 %v1691
      %v1727 = vpop.f32.mrb[0].mxu0
      %v1728 = vadd.f32 0.0, %v1727
      %v1729 = vpop.f32.mrb[0].mxu0
      %v1730 = vpop.f32.mrb[0].mxu0
      %v1731 = vadd.f32 0.0, %v1730
      %v1732 = vpop.f32.mrb[0].mxu0
      %1733 = vdwg.mxu0
      %1734 = vrot.lane.b32.xlu0 %v661, 64
      %v1735 = vpop.permute.xlu0 %1734
      %v1738 = vsel %vm414, %v1592, 0
      %1740 = vmatprep.subr.bf16.mxu0 0
      %1741 = vmatpush1.bf16.msra.mxu0 %v1735
      %1742 = vmatprep.subr.bf16.mxu0 0
      %1743 = vmatpush1.bf16.msra.mxu0 0
      %1744 = vmatprep.subr.bf16.mxu0 0
      %1745 = vmatpush1.bf16.msra.mxu0 0
      %1746 = vmatprep.subr.bf16.mxu0 0
      %1747 = vmatpush1.bf16.msra.mxu0 0
      %1748 = vmatprep.subr.bf16.mxu0 0
      %1749 = vmatpush1.bf16.msra.mxu0 0
      %1750 = vmatprep.subr.bf16.mxu0 0
      %1751 = vmatpush1.bf16.msra.mxu0 0
      %1752 = vmatprep.subr.bf16.mxu0 0
      %1753 = vmatpush1.bf16.msra.mxu0 0
      %1754 = vmatprep.subr.bf16.mxu0 0
      %1755 = vmatpush1.bf16.msra.mxu0 0
      %1756 = vmatprep.subr.bf16.mxu0 0
      %1757 = vmatpush1.bf16.msra.mxu0 0
      %1758 = vmatprep.subr.bf16.mxu0 0
      %1759 = vmatpush1.bf16.msra.mxu0 0
      %1760 = vmatprep.subr.bf16.mxu0 0
      %1761 = vmatpush1.bf16.msra.mxu0 0
      %1762 = vmatprep.subr.bf16.mxu0 0
      %1763 = vmatpush1.bf16.msra.mxu0 0
      %1764 = vmatprep.subr.bf16.mxu0 0
      %1765 = vmatpush1.bf16.msra.mxu0 0
      %1766 = vmatprep.subr.bf16.mxu0 0
      %1767 = vmatpush1.bf16.msra.mxu0 0
      %1768 = vmatprep.subr.bf16.mxu0 0
      %1769 = vmatpush1.bf16.msra.mxu0 0
      %1770 = vmatprep.subr.bf16.mxu0 0
      %1771 = vmatpush1.bf16.msra.mxu0 0
      %1772 = vmatprep.mubr.bf16.mxu0 0
      %1773 = vmatmul.mubr.bf16.gmra.mrb[0].mxu0 %v1738
      %v1774 = vpop.f32.mrb[0].mxu0
      %v1775 = vadd.f32 0.0, %v1774
      %v1776 = vpop.f32.mrb[0].mxu0
      %v1777 = vpop.f32.mrb[0].mxu0
      %v1778 = vadd.f32 0.0, %v1777
      %v1779 = vpop.f32.mrb[0].mxu0
      %1780 = vdwg.mxu0
      %1781 = vrot.lane.b32.xlu0 %v145, 32
      %v1782 = vpop.permute.xlu0 %1781
      %1783 = vrot.lane.b32.xlu0 %v147, 32
      %v1784 = vpop.permute.xlu0 %1783
      %v1785 = vrot.slane %v1782, 4
      %v1786 = vrot.slane %v1784, 4
      %1787 = vrot.lane.b32.xlu0 %v167, 32
      %v1788 = vpop.permute.xlu0 %1787
      %v1789 = vunpack.c.l.b16 %v1785
      %v1790 = vunpack.c.l.b16 %v1786
      %v1791 = vpack.c.b16 %v1790, %v1789
      %v1793 = vsel %vm171, %v1788, 0
      %v1796 = vsel %vm171, %v1791, 0
      %1798 = vmatprep.subr.bf16.mxu0 0
      %1799 = vmatpush1.bf16.xpose.msra.mxu0 %v1796
      %1800 = vmatprep.subr.bf16.mxu0 0
      %1801 = vmatpush1.bf16.xpose.msra.mxu0 0
      %1802 = vmatprep.subr.bf16.mxu0 0
      %1803 = vmatpush1.bf16.xpose.msra.mxu0 0
      %1804 = vmatprep.subr.bf16.mxu0 0
      %1805 = vmatpush1.bf16.xpose.msra.mxu0 0
      %1806 = vmatprep.subr.bf16.mxu0 0
      %1807 = vmatpush1.bf16.xpose.msra.mxu0 0
      %1808 = vmatprep.subr.bf16.mxu0 0
      %1809 = vmatpush1.bf16.xpose.msra.mxu0 0
      %1810 = vmatprep.subr.bf16.mxu0 0
      %1811 = vmatpush1.bf16.xpose.msra.mxu0 0
      %1812 = vmatprep.subr.bf16.mxu0 0
      %1813 = vmatpush1.bf16.xpose.msra.mxu0 0
      %1814 = vmatprep.subr.bf16.mxu0 0
      %1815 = vmatpush1.bf16.xpose.msra.mxu0 0
      %1816 = vmatprep.subr.bf16.mxu0 0
      %1817 = vmatpush1.bf16.xpose.msra.mxu0 0
      %1818 = vmatprep.subr.bf16.mxu0 0
      %1819 = vmatpush1.bf16.xpose.msra.mxu0 0
      %1820 = vmatprep.subr.bf16.mxu0 0
      %1821 = vmatpush1.bf16.xpose.msra.mxu0 0
      %1822 = vmatprep.subr.bf16.mxu0 0
      %1823 = vmatpush1.bf16.xpose.msra.mxu0 0
      %1824 = vmatprep.subr.bf16.mxu0 0
      %1825 = vmatpush1.bf16.xpose.msra.mxu0 0
      %1826 = vmatprep.subr.bf16.mxu0 0
      %1827 = vmatpush1.bf16.xpose.msra.mxu0 0
      %1828 = vmatprep.subr.bf16.mxu0 0
      %1829 = vmatpush1.bf16.xpose.msra.mxu0 0
      %1830 = vmatprep.mubr.bf16.mxu0 0
      %1831 = vmatmul.mubr.bf16.gmra.mrb[0].mxu0 %v1793
      %v1832 = vpop.f32.mrb[0].mxu0
      %v1833 = vadd.f32 0.0, %v1832
      %v1834 = vpop.f32.mrb[0].mxu0
      %v1835 = vpop.f32.mrb[0].mxu0
      %v1836 = vadd.f32 0.0, %v1835
      %v1837 = vpop.f32.mrb[0].mxu0
      %1838 = vdwg.mxu0
      %1839 = vrot.lane.b32.xlu0 %v149, 32
      %v1840 = vpop.permute.xlu0 %1839
      %1841 = vrot.lane.b32.xlu0 %v151, 32
      %v1842 = vpop.permute.xlu0 %1841
      %v1843 = vrot.slane %v1840, 4
      %v1844 = vrot.slane %v1842, 4
      %1845 = vrot.lane.b32.xlu0 %v225, 32
      %v1846 = vpop.permute.xlu0 %1845
      %v1847 = vunpack.c.l.b16 %v1843
      %v1848 = vunpack.c.l.b16 %v1844
      %v1849 = vpack.c.b16 %v1848, %v1847
      %v1851 = vsel %vm171, %v1846, 0
      %v1854 = vsel %vm171, %v1849, 0
      %1856 = vmatprep.subr.bf16.mxu0 0
      %1857 = vmatpush1.bf16.xpose.msra.mxu0 %v1854
      %1858 = vmatprep.subr.bf16.mxu0 0
      %1859 = vmatpush1.bf16.xpose.msra.mxu0 0
      %1860 = vmatprep.subr.bf16.mxu0 0
      %1861 = vmatpush1.bf16.xpose.msra.mxu0 0
      %1862 = vmatprep.subr.bf16.mxu0 0
      %1863 = vmatpush1.bf16.xpose.msra.mxu0 0
      %1864 = vmatprep.subr.bf16.mxu0 0
      %1865 = vmatpush1.bf16.xpose.msra.mxu0 0
      %1866 = vmatprep.subr.bf16.mxu0 0
      %1867 = vmatpush1.bf16.xpose.msra.mxu0 0
      %1868 = vmatprep.subr.bf16.mxu0 0
      %1869 = vmatpush1.bf16.xpose.msra.mxu0 0
      %1870 = vmatprep.subr.bf16.mxu0 0
      %1871 = vmatpush1.bf16.xpose.msra.mxu0 0
      %1872 = vmatprep.subr.bf16.mxu0 0
      %1873 = vmatpush1.bf16.xpose.msra.mxu0 0
      %1874 = vmatprep.subr.bf16.mxu0 0
      %1875 = vmatpush1.bf16.xpose.msra.mxu0 0
      %1876 = vmatprep.subr.bf16.mxu0 0
      %1877 = vmatpush1.bf16.xpose.msra.mxu0 0
      %1878 = vmatprep.subr.bf16.mxu0 0
      %1879 = vmatpush1.bf16.xpose.msra.mxu0 0
      %1880 = vmatprep.subr.bf16.mxu0 0
      %1881 = vmatpush1.bf16.xpose.msra.mxu0 0
      %1882 = vmatprep.subr.bf16.mxu0 0
      %1883 = vmatpush1.bf16.xpose.msra.mxu0 0
      %1884 = vmatprep.subr.bf16.mxu0 0
      %1885 = vmatpush1.bf16.xpose.msra.mxu0 0
      %1886 = vmatprep.subr.bf16.mxu0 0
      %1887 = vmatpush1.bf16.xpose.msra.mxu0 0
      %1888 = vmatprep.mubr.bf16.mxu0 0
      %1889 = vmatmul.mubr.bf16.gmra.mrb[0].mxu0 %v1851
      %v1890 = vpop.f32.mrb[0].mxu0
      %v1891 = vadd.f32 0.0, %v1890
      %v1892 = vpop.f32.mrb[0].mxu0
      %v1893 = vpop.f32.mrb[0].mxu0
      %v1894 = vadd.f32 0.0, %v1893
      %v1895 = vpop.f32.mrb[0].mxu0
      %1896 = vdwg.mxu0
      %1897 = vrot.lane.b32.xlu0 %v153, 32
      %v1898 = vpop.permute.xlu0 %1897
      %1899 = vrot.lane.b32.xlu0 %v155, 32
      %v1900 = vpop.permute.xlu0 %1899
      %v1901 = vrot.slane %v1898, 4
      %v1902 = vrot.slane %v1900, 4
      %1903 = vrot.lane.b32.xlu0 %v282, 32
      %v1904 = vpop.permute.xlu0 %1903
      %v1905 = vunpack.c.l.b16 %v1901
      %v1906 = vunpack.c.l.b16 %v1902
      %v1907 = vpack.c.b16 %v1906, %v1905
      %v1909 = vsel %vm171, %v1904, 0
      %v1912 = vsel %vm171, %v1907, 0
      %1914 = vmatprep.subr.bf16.mxu0 0
      %1915 = vmatpush1.bf16.xpose.msra.mxu0 %v1912
      %1916 = vmatprep.subr.bf16.mxu0 0
      %1917 = vmatpush1.bf16.xpose.msra.mxu0 0
      %1918 = vmatprep.subr.bf16.mxu0 0
      %1919 = vmatpush1.bf16.xpose.msra.mxu0 0
      %1920 = vmatprep.subr.bf16.mxu0 0
      %1921 = vmatpush1.bf16.xpose.msra.mxu0 0
      %1922 = vmatprep.subr.bf16.mxu0 0
      %1923 = vmatpush1.bf16.xpose.msra.mxu0 0
      %1924 = vmatprep.subr.bf16.mxu0 0
      %1925 = vmatpush1.bf16.xpose.msra.mxu0 0
      %1926 = vmatprep.subr.bf16.mxu0 0
      %1927 = vmatpush1.bf16.xpose.msra.mxu0 0
      %1928 = vmatprep.subr.bf16.mxu0 0
      %1929 = vmatpush1.bf16.xpose.msra.mxu0 0
      %1930 = vmatprep.subr.bf16.mxu0 0
      %1931 = vmatpush1.bf16.xpose.msra.mxu0 0
      %1932 = vmatprep.subr.bf16.mxu0 0
      %1933 = vmatpush1.bf16.xpose.msra.mxu0 0
      %1934 = vmatprep.subr.bf16.mxu0 0
      %1935 = vmatpush1.bf16.xpose.msra.mxu0 0
      %1936 = vmatprep.subr.bf16.mxu0 0
      %1937 = vmatpush1.bf16.xpose.msra.mxu0 0
      %1938 = vmatprep.subr.bf16.mxu0 0
      %1939 = vmatpush1.bf16.xpose.msra.mxu0 0
      %1940 = vmatprep.subr.bf16.mxu0 0
      %1941 = vmatpush1.bf16.xpose.msra.mxu0 0
      %1942 = vmatprep.subr.bf16.mxu0 0
      %1943 = vmatpush1.bf16.xpose.msra.mxu0 0
      %1944 = vmatprep.subr.bf16.mxu0 0
      %1945 = vmatpush1.bf16.xpose.msra.mxu0 0
      %1946 = vmatprep.mubr.bf16.mxu0 0
      %1947 = vmatmul.mubr.bf16.gmra.mrb[0].mxu0 %v1909
      %v1948 = vpop.f32.mrb[0].mxu0
      %v1949 = vadd.f32 0.0, %v1948
      %v1950 = vpop.f32.mrb[0].mxu0
      %v1951 = vpop.f32.mrb[0].mxu0
      %v1952 = vadd.f32 0.0, %v1951
      %v1953 = vpop.f32.mrb[0].mxu0
      %1954 = vdwg.mxu0
      %1955 = vrot.lane.b32.xlu0 %v157, 32
      %v1956 = vpop.permute.xlu0 %1955
      %1957 = vrot.lane.b32.xlu0 %v159, 32
      %v1958 = vpop.permute.xlu0 %1957
      %v1959 = vrot.slane %v1956, 4
      %v1960 = vrot.slane %v1958, 4
      %1961 = vrot.lane.b32.xlu0 %v339, 32
      %v1962 = vpop.permute.xlu0 %1961
      %v1963 = vunpack.c.l.b16 %v1959
      %v1964 = vunpack.c.l.b16 %v1960
      %v1965 = vpack.c.b16 %v1964, %v1963
      %v1967 = vsel %vm171, %v1962, 0
      %v1970 = vsel %vm171, %v1965, 0
      %1972 = vmatprep.subr.bf16.mxu0 0
      %1973 = vmatpush1.bf16.xpose.msra.mxu0 %v1970
      %1974 = vmatprep.subr.bf16.mxu0 0
      %1975 = vmatpush1.bf16.xpose.msra.mxu0 0
      %1976 = vmatprep.subr.bf16.mxu0 0
      %1977 = vmatpush1.bf16.xpose.msra.mxu0 0
      %1978 = vmatprep.subr.bf16.mxu0 0
      %1979 = vmatpush1.bf16.xpose.msra.mxu0 0
      %1980 = vmatprep.subr.bf16.mxu0 0
      %1981 = vmatpush1.bf16.xpose.msra.mxu0 0
      %1982 = vmatprep.subr.bf16.mxu0 0
      %1983 = vmatpush1.bf16.xpose.msra.mxu0 0
      %1984 = vmatprep.subr.bf16.mxu0 0
      %1985 = vmatpush1.bf16.xpose.msra.mxu0 0
      %1986 = vmatprep.subr.bf16.mxu0 0
      %1987 = vmatpush1.bf16.xpose.msra.mxu0 0
      %1988 = vmatprep.subr.bf16.mxu0 0
      %1989 = vmatpush1.bf16.xpose.msra.mxu0 0
      %1990 = vmatprep.subr.bf16.mxu0 0
      %1991 = vmatpush1.bf16.xpose.msra.mxu0 0
      %1992 = vmatprep.subr.bf16.mxu0 0
      %1993 = vmatpush1.bf16.xpose.msra.mxu0 0
      %1994 = vmatprep.subr.bf16.mxu0 0
      %1995 = vmatpush1.bf16.xpose.msra.mxu0 0
      %1996 = vmatprep.subr.bf16.mxu0 0
      %1997 = vmatpush1.bf16.xpose.msra.mxu0 0
      %1998 = vmatprep.subr.bf16.mxu0 0
      %1999 = vmatpush1.bf16.xpose.msra.mxu0 0
      %2000 = vmatprep.subr.bf16.mxu0 0
      %2001 = vmatpush1.bf16.xpose.msra.mxu0 0
      %2002 = vmatprep.subr.bf16.mxu0 0
      %2003 = vmatpush1.bf16.xpose.msra.mxu0 0
      %2004 = vmatprep.mubr.bf16.mxu0 0
      %2005 = vmatmul.mubr.bf16.gmra.mrb[0].mxu0 %v1967
      %v2006 = vpop.f32.mrb[0].mxu0
      %v2007 = vadd.f32 0.0, %v2006
      %v2008 = vpop.f32.mrb[0].mxu0
      %v2009 = vpop.f32.mrb[0].mxu0
      %v2010 = vadd.f32 0.0, %v2009
      %v2011 = vpop.f32.mrb[0].mxu0
      %2012 = vdwg.mxu0
      %v2013 = vmul.f32 %v1833, 0.17677669
      %v2014 = vmul.f32 %v1836, 0.17677669
      %v2015 = vmul.f32 %v1891, 0.17677669
      %v2016 = vmul.f32 %v1894, 0.17677669
      %v2017 = vmul.f32 %v1949, 0.17677669
      %v2018 = vmul.f32 %v1952, 0.17677669
      %v2019 = vmul.f32 %v2007, 0.17677669
      %v2020 = vmul.f32 %v2010, 0.17677669
      %s2021 = scalar_lea.vmem %s1, 192
      %v2022 = vld [vmem:[%s2021] sm:$0xff]
      %v2023 = vld [vmem:[%s2021 + $0x8] sm:$0xff]
      %v2024 = vld [vmem:[%s2021 + $0x10] sm:$0xff]
      %v2025 = vld [vmem:[%s2021 + $0x18] sm:$0xff]
      %v2026 = vld [vmem:[%s2021 + $0x20] sm:$0xff]
      %v2027 = vld [vmem:[%s2021 + $0x28] sm:$0xff]
      %v2028 = vld [vmem:[%s2021 + $0x30] sm:$0xff]
      %v2029 = vld [vmem:[%s2021 + $0x38] sm:$0xff]
      %v2030 = vadd.f32 %v2013, %v2022
      %v2031 = vadd.f32 %v2014, %v2023
      %v2032 = vadd.f32 %v2015, %v2024
      %v2033 = vadd.f32 %v2016, %v2025
      %v2034 = vadd.f32 %v2017, %v2026
      %v2035 = vadd.f32 %v2018, %v2027
      %v2036 = vadd.f32 %v2019, %v2028
      %v2037 = vadd.f32 %v2020, %v2029
      %v2038 = vsel %vm414, %v2030, -inf
      %2039 = vmax.xlane.f32.xlu0 %v2038
      %v2040 = vpop.xlane.xlu0 %2039
      %v2041 = vsel %vm414, %v2031, -inf
      %2042 = vmax.xlane.f32.xlu0 %v2041
      %v2043 = vpop.xlane.xlu0 %2042
      %v2044 = vsel %vm414, %v2032, -inf
      %2045 = vmax.xlane.f32.xlu0 %v2044
      %v2046 = vpop.xlane.xlu0 %2045
      %v2047 = vsel %vm414, %v2033, -inf
      %2048 = vmax.xlane.f32.xlu0 %v2047
      %v2049 = vpop.xlane.xlu0 %2048
      %v2050 = vsel %vm414, %v2034, -inf
      %2051 = vmax.xlane.f32.xlu0 %v2050
      %v2052 = vpop.xlane.xlu0 %2051
      %v2053 = vsel %vm414, %v2035, -inf
      %2054 = vmax.xlane.f32.xlu0 %v2053
      %v2055 = vpop.xlane.xlu0 %2054
      %v2056 = vsel %vm414, %v2036, -inf
      %2057 = vmax.xlane.f32.xlu0 %v2056
      %v2058 = vpop.xlane.xlu0 %2057
      %v2059 = vsel %vm414, %v2037, -inf
      %2060 = vmax.xlane.f32.xlu0 %v2059
      %v2061 = vpop.xlane.xlu0 %2060
      %v2062 = vsub.f32 %v2030, %v2040
      %v2063 = vsub.f32 %v2031, %v2043
      %v2064 = vsub.f32 %v2032, %v2046
      %v2065 = vsub.f32 %v2033, %v2049
      %v2066 = vsub.f32 %v2034, %v2052
      %v2067 = vsub.f32 %v2035, %v2055
      %v2068 = vsub.f32 %v2036, %v2058
      %v2069 = vsub.f32 %v2037, %v2061
      %v2070 = vmul.f32 %v2062, 1.442695
      %v2071 = vpow.pop %v2070
      %v2072 = vmul.f32 %v2063, 1.442695
      %v2073 = vpow.pop %v2072
      %v2074 = vmul.f32 %v2064, 1.442695
      %v2075 = vpow.pop %v2074
      %v2076 = vmul.f32 %v2065, 1.442695
      %v2077 = vpow.pop %v2076
      %v2078 = vmul.f32 %v2066, 1.442695
      %v2079 = vpow.pop %v2078
      %v2080 = vmul.f32 %v2067, 1.442695
      %v2081 = vpow.pop %v2080
      %v2082 = vmul.f32 %v2068, 1.442695
      %v2083 = vpow.pop %v2082
      %v2084 = vmul.f32 %v2069, 1.442695
      %v2085 = vpow.pop %v2084
      %v2086 = vsel %vm414, %v2071, 0.0
      %2087 = vadd.xlane.f32.xlu0 %v2086
      %v2088 = vpop.xlane.xlu0 %2087
      %v2089 = vsel %vm414, %v2073, 0.0
      %2090 = vadd.xlane.f32.xlu0 %v2089
      %v2091 = vpop.xlane.xlu0 %2090
      %v2092 = vsel %vm414, %v2075, 0.0
      %2093 = vadd.xlane.f32.xlu0 %v2092
      %v2094 = vpop.xlane.xlu0 %2093
      %v2095 = vsel %vm414, %v2077, 0.0
      %2096 = vadd.xlane.f32.xlu0 %v2095
      %v2097 = vpop.xlane.xlu0 %2096
      %v2098 = vsel %vm414, %v2079, 0.0
      %2099 = vadd.xlane.f32.xlu0 %v2098
      %v2100 = vpop.xlane.xlu0 %2099
      %v2101 = vsel %vm414, %v2081, 0.0
      %2102 = vadd.xlane.f32.xlu0 %v2101
      %v2103 = vpop.xlane.xlu0 %2102
      %v2104 = vsel %vm414, %v2083, 0.0
      %2105 = vadd.xlane.f32.xlu0 %v2104
      %v2106 = vpop.xlane.xlu0 %2105
      %v2107 = vsel %vm414, %v2085, 0.0
      %2108 = vadd.xlane.f32.xlu0 %v2107
      %v2109 = vpop.xlane.xlu0 %2108
      %v2110 = vrcp.pop %v2088
      %v2111 = vmul.f32 %v2071, %v2110
      %v2112 = vrcp.pop %v2091
      %v2113 = vmul.f32 %v2073, %v2112
      %v2114 = vrcp.pop %v2094
      %v2115 = vmul.f32 %v2075, %v2114
      %v2116 = vrcp.pop %v2097
      %v2117 = vmul.f32 %v2077, %v2116
      %v2118 = vrcp.pop %v2100
      %v2119 = vmul.f32 %v2079, %v2118
      %v2120 = vrcp.pop %v2103
      %v2121 = vmul.f32 %v2081, %v2120
      %v2122 = vrcp.pop %v2106
      %v2123 = vmul.f32 %v2083, %v2122
      %v2124 = vrcp.pop %v2109
      %v2125 = vmul.f32 %v2085, %v2124
      %v2126 = vpack.c.bf16 %v2113, %v2111
      %v2127 = vpack.c.bf16 %v2117, %v2115
      %v2128 = vpack.c.bf16 %v2121, %v2119
      %v2129 = vpack.c.bf16 %v2125, %v2123
      %2130 = vrot.lane.b32.xlu0 %v511, 32
      %v2131 = vpop.permute.xlu0 %2130
      %v2134 = vsel %vm414, %v2126, 0
      %2136 = vmatprep.subr.bf16.mxu0 0
      %2137 = vmatpush1.bf16.msra.mxu0 %v2131
      %2138 = vmatprep.subr.bf16.mxu0 0
      %2139 = vmatpush1.bf16.msra.mxu0 0
      %2140 = vmatprep.subr.bf16.mxu0 0
      %2141 = vmatpush1.bf16.msra.mxu0 0
      %2142 = vmatprep.subr.bf16.mxu0 0
      %2143 = vmatpush1.bf16.msra.mxu0 0
      %2144 = vmatprep.subr.bf16.mxu0 0
      %2145 = vmatpush1.bf16.msra.mxu0 0
      %2146 = vmatprep.subr.bf16.mxu0 0
      %2147 = vmatpush1.bf16.msra.mxu0 0
      %2148 = vmatprep.subr.bf16.mxu0 0
      %2149 = vmatpush1.bf16.msra.mxu0 0
      %2150 = vmatprep.subr.bf16.mxu0 0
      %2151 = vmatpush1.bf16.msra.mxu0 0
      %2152 = vmatprep.subr.bf16.mxu0 0
      %2153 = vmatpush1.bf16.msra.mxu0 0
      %2154 = vmatprep.subr.bf16.mxu0 0
      %2155 = vmatpush1.bf16.msra.mxu0 0
      %2156 = vmatprep.subr.bf16.mxu0 0
      %2157 = vmatpush1.bf16.msra.mxu0 0
      %2158 = vmatprep.subr.bf16.mxu0 0
      %2159 = vmatpush1.bf16.msra.mxu0 0
      %2160 = vmatprep.subr.bf16.mxu0 0
      %2161 = vmatpush1.bf16.msra.mxu0 0
      %2162 = vmatprep.subr.bf16.mxu0 0
      %2163 = vmatpush1.bf16.msra.mxu0 0
      %2164 = vmatprep.subr.bf16.mxu0 0
      %2165 = vmatpush1.bf16.msra.mxu0 0
      %2166 = vmatprep.subr.bf16.mxu0 0
      %2167 = vmatpush1.bf16.msra.mxu0 0
      %2168 = vmatprep.mubr.bf16.mxu0 0
      %2169 = vmatmul.mubr.bf16.gmra.mrb[0].mxu0 %v2134
      %v2170 = vpop.f32.mrb[0].mxu0
      %v2171 = vadd.f32 0.0, %v2170
      %v2172 = vpop.f32.mrb[0].mxu0
      %v2173 = vpop.f32.mrb[0].mxu0
      %v2174 = vadd.f32 0.0, %v2173
      %v2175 = vpop.f32.mrb[0].mxu0
      %2176 = vdwg.mxu0
      %2177 = vrot.lane.b32.xlu0 %v561, 32
      %v2178 = vpop.permute.xlu0 %2177
      %v2181 = vsel %vm414, %v2127, 0
      %2183 = vmatprep.subr.bf16.mxu0 0
      %2184 = vmatpush1.bf16.msra.mxu0 %v2178
      %2185 = vmatprep.subr.bf16.mxu0 0
      %2186 = vmatpush1.bf16.msra.mxu0 0
      %2187 = vmatprep.subr.bf16.mxu0 0
      %2188 = vmatpush1.bf16.msra.mxu0 0
      %2189 = vmatprep.subr.bf16.mxu0 0
      %2190 = vmatpush1.bf16.msra.mxu0 0
      %2191 = vmatprep.subr.bf16.mxu0 0
      %2192 = vmatpush1.bf16.msra.mxu0 0
      %2193 = vmatprep.subr.bf16.mxu0 0
      %2194 = vmatpush1.bf16.msra.mxu0 0
      %2195 = vmatprep.subr.bf16.mxu0 0
      %2196 = vmatpush1.bf16.msra.mxu0 0
      %2197 = vmatprep.subr.bf16.mxu0 0
      %2198 = vmatpush1.bf16.msra.mxu0 0
      %2199 = vmatprep.subr.bf16.mxu0 0
      %2200 = vmatpush1.bf16.msra.mxu0 0
      %2201 = vmatprep.subr.bf16.mxu0 0
      %2202 = vmatpush1.bf16.msra.mxu0 0
      %2203 = vmatprep.subr.bf16.mxu0 0
      %2204 = vmatpush1.bf16.msra.mxu0 0
      %2205 = vmatprep.subr.bf16.mxu0 0
      %2206 = vmatpush1.bf16.msra.mxu0 0
      %2207 = vmatprep.subr.bf16.mxu0 0
      %2208 = vmatpush1.bf16.msra.mxu0 0
      %2209 = vmatprep.subr.bf16.mxu0 0
      %2210 = vmatpush1.bf16.msra.mxu0 0
      %2211 = vmatprep.subr.bf16.mxu0 0
      %2212 = vmatpush1.bf16.msra.mxu0 0
      %2213 = vmatprep.subr.bf16.mxu0 0
      %2214 = vmatpush1.bf16.msra.mxu0 0
      %2215 = vmatprep.mubr.bf16.mxu0 0
      %2216 = vmatmul.mubr.bf16.gmra.mrb[0].mxu0 %v2181
      %v2217 = vpop.f32.mrb[0].mxu0
      %v2218 = vadd.f32 0.0, %v2217
      %v2219 = vpop.f32.mrb[0].mxu0
      %v2220 = vpop.f32.mrb[0].mxu0
      %v2221 = vadd.f32 0.0, %v2220
      %v2222 = vpop.f32.mrb[0].mxu0
      %2223 = vdwg.mxu0
      %2224 = vrot.lane.b32.xlu0 %v611, 32
      %v2225 = vpop.permute.xlu0 %2224
      %v2228 = vsel %vm414, %v2128, 0
      %2230 = vmatprep.subr.bf16.mxu0 0
      %2231 = vmatpush1.bf16.msra.mxu0 %v2225
      %2232 = vmatprep.subr.bf16.mxu0 0
      %2233 = vmatpush1.bf16.msra.mxu0 0
      %2234 = vmatprep.subr.bf16.mxu0 0
      %2235 = vmatpush1.bf16.msra.mxu0 0
      %2236 = vmatprep.subr.bf16.mxu0 0
      %2237 = vmatpush1.bf16.msra.mxu0 0
      %2238 = vmatprep.subr.bf16.mxu0 0
      %2239 = vmatpush1.bf16.msra.mxu0 0
      %2240 = vmatprep.subr.bf16.mxu0 0
      %2241 = vmatpush1.bf16.msra.mxu0 0
      %2242 = vmatprep.subr.bf16.mxu0 0
      %2243 = vmatpush1.bf16.msra.mxu0 0
      %2244 = vmatprep.subr.bf16.mxu0 0
      %2245 = vmatpush1.bf16.msra.mxu0 0
      %2246 = vmatprep.subr.bf16.mxu0 0
      %2247 = vmatpush1.bf16.msra.mxu0 0
      %2248 = vmatprep.subr.bf16.mxu0 0
      %2249 = vmatpush1.bf16.msra.mxu0 0
      %2250 = vmatprep.subr.bf16.mxu0 0
      %2251 = vmatpush1.bf16.msra.mxu0 0
      %2252 = vmatprep.subr.bf16.mxu0 0
      %2253 = vmatpush1.bf16.msra.mxu0 0
      %2254 = vmatprep.subr.bf16.mxu0 0
      %2255 = vmatpush1.bf16.msra.mxu0 0
      %2256 = vmatprep.subr.bf16.mxu0 0
      %2257 = vmatpush1.bf16.msra.mxu0 0
      %2258 = vmatprep.subr.bf16.mxu0 0
      %2259 = vmatpush1.bf16.msra.mxu0 0
      %2260 = vmatprep.subr.bf16.mxu0 0
      %2261 = vmatpush1.bf16.msra.mxu0 0
      %2262 = vmatprep.mubr.bf16.mxu0 0
      %2263 = vmatmul.mubr.bf16.gmra.mrb[0].mxu0 %v2228
      %v2264 = vpop.f32.mrb[0].mxu0
      %v2265 = vadd.f32 0.0, %v2264
      %v2266 = vpop.f32.mrb[0].mxu0
      %v2267 = vpop.f32.mrb[0].mxu0
      %v2268 = vadd.f32 0.0, %v2267
      %v2269 = vpop.f32.mrb[0].mxu0
      %2270 = vdwg.mxu0
      %2271 = vrot.lane.b32.xlu0 %v661, 32
      %v2272 = vpop.permute.xlu0 %2271
      %v2275 = vsel %vm414, %v2129, 0
      %2277 = vmatprep.subr.bf16.mxu0 0
      %2278 = vmatpush1.bf16.msra.mxu0 %v2272
      %2279 = vmatprep.subr.bf16.mxu0 0
      %2280 = vmatpush1.bf16.msra.mxu0 0
      %2281 = vmatprep.subr.bf16.mxu0 0
      %2282 = vmatpush1.bf16.msra.mxu0 0
      %2283 = vmatprep.subr.bf16.mxu0 0
      %2284 = vmatpush1.bf16.msra.mxu0 0
      %2285 = vmatprep.subr.bf16.mxu0 0
      %2286 = vmatpush1.bf16.msra.mxu0 0
      %2287 = vmatprep.subr.bf16.mxu0 0
      %2288 = vmatpush1.bf16.msra.mxu0 0
      %2289 = vmatprep.subr.bf16.mxu0 0
      %2290 = vmatpush1.bf16.msra.mxu0 0
      %2291 = vmatprep.subr.bf16.mxu0 0
      %2292 = vmatpush1.bf16.msra.mxu0 0
      %2293 = vmatprep.subr.bf16.mxu0 0
      %2294 = vmatpush1.bf16.msra.mxu0 0
      %2295 = vmatprep.subr.bf16.mxu0 0
      %2296 = vmatpush1.bf16.msra.mxu0 0
      %2297 = vmatprep.subr.bf16.mxu0 0
      %2298 = vmatpush1.bf16.msra.mxu0 0
      %2299 = vmatprep.subr.bf16.mxu0 0
      %2300 = vmatpush1.bf16.msra.mxu0 0
      %2301 = vmatprep.subr.bf16.mxu0 0
      %2302 = vmatpush1.bf16.msra.mxu0 0
      %2303 = vmatprep.subr.bf16.mxu0 0
      %2304 = vmatpush1.bf16.msra.mxu0 0
      %2305 = vmatprep.subr.bf16.mxu0 0
      %2306 = vmatpush1.bf16.msra.mxu0 0
      %2307 = vmatprep.subr.bf16.mxu0 0
      %2308 = vmatpush1.bf16.msra.mxu0 0
      %2309 = vmatprep.mubr.bf16.mxu0 0
      %2310 = vmatmul.mubr.bf16.gmra.mrb[0].mxu0 %v2275
      %v2311 = vpop.f32.mrb[0].mxu0
      %v2312 = vadd.f32 0.0, %v2311
      %v2313 = vpop.f32.mrb[0].mxu0
      %v2314 = vpop.f32.mrb[0].mxu0
      %v2315 = vadd.f32 0.0, %v2314
      %v2316 = vpop.f32.mrb[0].mxu0
      %2317 = vdwg.mxu0
      %2326 = vrot.lane.b32.xlu0 %v1097, 32
      %v2327 = vpop.permute.xlu0 %2326
      %2328 = vrot.lane.b32.xlu0 %v1100, 32
      %v2329 = vpop.permute.xlu0 %2328
      %2330 = vrot.lane.b32.xlu0 %v1144, 32
      %v2331 = vpop.permute.xlu0 %2330
      %2332 = vrot.lane.b32.xlu0 %v1147, 32
      %v2333 = vpop.permute.xlu0 %2332
      %2334 = vrot.lane.b32.xlu0 %v1191, 32
      %v2335 = vpop.permute.xlu0 %2334
      %2336 = vrot.lane.b32.xlu0 %v1194, 32
      %v2337 = vpop.permute.xlu0 %2336
      %2338 = vrot.lane.b32.xlu0 %v1238, 32
      %v2339 = vpop.permute.xlu0 %2338
      %2340 = vrot.lane.b32.xlu0 %v1241, 32
      %v2341 = vpop.permute.xlu0 %2340
      %2358 = vrot.lane.b32.xlu0 %v1634, 64
      %v2359 = vpop.permute.xlu0 %2358
      %2360 = vrot.lane.b32.xlu0 %v1637, 64
      %v2361 = vpop.permute.xlu0 %2360
      %2362 = vrot.lane.b32.xlu0 %v1681, 64
      %v2363 = vpop.permute.xlu0 %2362
      %2364 = vrot.lane.b32.xlu0 %v1684, 64
      %v2365 = vpop.permute.xlu0 %2364
      %2366 = vrot.lane.b32.xlu0 %v1728, 64
      %v2367 = vpop.permute.xlu0 %2366
      %2368 = vrot.lane.b32.xlu0 %v1731, 64
      %v2369 = vpop.permute.xlu0 %2368
      %2370 = vrot.lane.b32.xlu0 %v1775, 64
      %v2371 = vpop.permute.xlu0 %2370
      %2372 = vrot.lane.b32.xlu0 %v1778, 64
      %v2373 = vpop.permute.xlu0 %2372
      %2390 = vrot.lane.b32.xlu0 %v2171, 96
      %v2391 = vpop.permute.xlu0 %2390
      %2392 = vrot.lane.b32.xlu0 %v2174, 96
      %v2393 = vpop.permute.xlu0 %2392
      %2394 = vrot.lane.b32.xlu0 %v2218, 96
      %v2395 = vpop.permute.xlu0 %2394
      %2396 = vrot.lane.b32.xlu0 %v2221, 96
      %v2397 = vpop.permute.xlu0 %2396
      %2398 = vrot.lane.b32.xlu0 %v2265, 96
      %v2399 = vpop.permute.xlu0 %2398
      %2400 = vrot.lane.b32.xlu0 %v2268, 96
      %v2401 = vpop.permute.xlu0 %2400
      %2402 = vrot.lane.b32.xlu0 %v2312, 96
      %v2403 = vpop.permute.xlu0 %2402
      %2404 = vrot.lane.b32.xlu0 %v2315, 96
      %v2405 = vpop.permute.xlu0 %2404
      %v2414 = vsel %vm171, %v551, %v2327
      %v2415 = vsel %vm171, %v554, %v2329
      %v2416 = vsel %vm171, %v601, %v2331
      %v2417 = vsel %vm171, %v604, %v2333
      %v2418 = vsel %vm171, %v651, %v2335
      %v2419 = vsel %vm171, %v654, %v2337
      %v2420 = vsel %vm171, %v701, %v2339
      %v2421 = vsel %vm171, %v704, %v2341
      %vm2422 = vcmask 523264
      %v2423 = vsel %vm2422, %v2414, %v2359
      %v2424 = vsel %vm2422, %v2415, %v2361
      %v2425 = vsel %vm2422, %v2416, %v2363
      %v2426 = vsel %vm2422, %v2417, %v2365
      %v2427 = vsel %vm2422, %v2418, %v2367
      %v2428 = vsel %vm2422, %v2419, %v2369
      %v2429 = vsel %vm2422, %v2420, %v2371
      %v2430 = vsel %vm2422, %v2421, %v2373
      %vm2431 = vcmask 785408
      %v2432 = vsel %vm2431, %v2423, %v2391
      %v2433 = vsel %vm2431, %v2424, %v2393
      %v2434 = vsel %vm2431, %v2425, %v2395
      %v2435 = vsel %vm2431, %v2426, %v2397
      %v2436 = vsel %vm2431, %v2427, %v2399
      %v2437 = vsel %vm2431, %v2428, %v2401
      %v2438 = vsel %vm2431, %v2429, %v2403
      %v2439 = vsel %vm2431, %v2430, %v2405
      %v2440 = vpack.c.bf16 %v2433, %v2432
      %v2441 = vpack.c.bf16 %v2435, %v2434
      %v2442 = vpack.c.bf16 %v2437, %v2436
      %v2443 = vpack.c.bf16 %v2439, %v2438
      %v2448 = vunpack.c.l.b16 %v2440
      %v2449 = vunpack.c.h.b16 %v2440
      %v2450 = vunpack.c.l.b16 %v2441
      %v2451 = vunpack.c.h.b16 %v2441
      %v2452 = vunpack.c.l.b16 %v2442
      %v2453 = vunpack.c.h.b16 %v2442
      %v2454 = vunpack.c.l.b16 %v2443
      %v2455 = vunpack.c.h.b16 %v2443
      %v2456 = vpack.c.b16 %v2448, %v2448
      %v2457 = vpack.c.b16 %v2449, %v2449
      %v2458 = vpack.c.b16 %v2450, %v2450
      %v2459 = vpack.c.b16 %v2451, %v2451
      %v2460 = vpack.c.b16 %v2452, %v2452
      %v2461 = vpack.c.b16 %v2453, %v2453
      %v2462 = vpack.c.b16 %v2454, %v2454
      %v2463 = vpack.c.b16 %v2455, %v2455
      %2472 = vst [vmem:[%s143] sm:$0xf] %v2456
      %2473 = vst [vmem:[%s143 + $0x4] sm:$0xf] %v2457
      %2474 = vst [vmem:[%s143 + $0x8] sm:$0xf] %v2458
      %2475 = vst [vmem:[%s143 + $0xc] sm:$0xf] %v2459
      %2476 = vst [vmem:[%s143 + $0x10] sm:$0xf] %v2460
      %2477 = vst [vmem:[%s143 + $0x14] sm:$0xf] %v2461
      %2478 = vst [vmem:[%s143 + $0x18] sm:$0xf] %v2462
      %2479 = vst [vmem:[%s143 + $0x1c] sm:$0xf] %v2463
      %p2480 = scmp.lt.s32.totalorder %s13, 1
      %s2481 = scalar_select %p2480, %s13, 1
      %s2482 = smul.addr %s2481, 8
      %s2483 = smul.addr %s2482, 4
      %s2484 = scalar_lea.vmem %s2, %s2483
      // Predicated region
      $region29: #{_lambda_.7} parent=27 // pred_check
        %p2485 = pneg %p78
      $region30: #{_lambda_.7} parent=27 // pred_check_branch
        %2487 = sbr.rel (%p2485) target = $region32
      $region31: #{_lambda_.7} parent=27 // pred_region
        _
      $region32: #{_lambda_.7} parent=27 // pred_fallthru
        _
    $region28: #{_lambda_.7} parent=5 // pred_fallthru
      _
    %p2488 = scmp.le.s32.totalorder 2, %s8
    // Predicated region
    $region33: #{_lambda_.7} parent=5 // pred_check
      %p2489 = pneg %p2488
    $region34: #{_lambda_.7} parent=5 // pred_check_branch
      %2491 = sbr.rel (%p2489) target = $region36
    $region35: #{_lambda_.7} parent=5 // pred_region
      %s2492 = ssub.s32 %s8, 2
      // Predicated region
      $region37: #{_lambda_.7} parent=35 // pred_check
        %p2493 = pneg %p84
      $region38: #{_lambda_.7} parent=35 // pred_check_branch
        %2495 = sbr.rel (%p2493) target = $region40
      $region39: #{_lambda_.7} parent=35 // pred_region
        %p2496 = scmp.lt.s32.totalorder %s14, 1
        %s2497 = scalar_select %p2496, %s14, 1
        %s2498 = smul.addr %s2497, 8
        %s2499 = smul.addr %s2498, 4
        %s2500 = scalar_lea.vmem %s2, %s2499
      $region40: #{_lambda_.7} parent=35 // pred_fallthru
        _
    $region36: #{_lambda_.7} parent=5 // pred_fallthru
      _
  $region6: #{_lambda_.7} parent=0 // loop_footer
    %s12 = sadd.s32 1, %s8
  $region7: #{_lambda_.7} parent=0 // loop_footer_branch
    %7 = sbr.rel target = $region3
  $region8: #{_lambda_.7} parent=0 // loop_exit
    _

</llo_original>
